<compile_context>
chip_gen: v6e
topology: v6e:2x2x1
jax: 0.10.0
libtpu: 0.0.40
codegen_flags: <defaults>
</compile_context>

<pallas_src>
import jax
import jax.numpy as jnp
from jax.experimental import pallas as pl
from jax.experimental.pallas import tpu as pltpu


_VMEM_LIMIT = 32 * 1024 * 1024   # safe on v5e/v6e/v7x scoped budgets; >> per-tile need
_TILE_M = 512                    # rows per grid step (multiple of 16 for bf16 tiling)
_ALIGN = 16                      # sublane alignment for bf16 inputs


def _round_up(x, m):
    return ((x + m - 1) // m) * m


# --------------------------------------------------------------------------
# Pallas kernels
# --------------------------------------------------------------------------
def _conv_bn_relu_pool_kernel(p_ref, w_ref, shift_ref, o_ref):
    """Fused conv (im2col matmul, BN folded into w) + shift + ReLU + 2x2 max-pool.

    p_ref:     (4, TILE_M, K) bf16  -- one patch matrix per pooling-window corner
    w_ref:     (K, Cout)      bf16  -- BN scale already folded in
    shift_ref: (1, Cout)      f32   -- folded BN/bias shift
    o_ref:     (TILE_M, Cout) f32   -- pooled output rows (n, ph, pw) order
    """
    w = w_ref[...]
    shift = shift_ref[...]
    out = None
    for c in range(p_ref.shape[0]):                      # 4 static corners
        y = jnp.dot(p_ref[c], w, preferred_element_type=jnp.float32)
        y = jnp.maximum(y + shift, 0.0)                  # f32 epilogue
        out = y if out is None else jnp.maximum(out, y)  # fused MaxPool2d(2,2)
    o_ref[...] = out.astype(o_ref.dtype)


def _head_kernel(x_ref, w3_ref, s3_ref, wf_ref, bf_ref, o_ref):
    """conv3 (1x1 output -> plain matmul) + BN + ReLU, then the composed
    fc1∘fc2∘fc3 affine — one kernel, no intermediate HBM round-trips."""
    h = jnp.dot(x_ref[...], w3_ref[...], preferred_element_type=jnp.float32)
    h = jnp.maximum(h + s3_ref[...], 0.0)
    y = jnp.dot(h.astype(wf_ref.dtype), wf_ref[...],
                preferred_element_type=jnp.float32)
    o_ref[...] = (y + bf_ref[...]).astype(o_ref.dtype)


# --------------------------------------------------------------------------
# JAX glue: im2col (corner-grouped), BN folding, wrappers
# --------------------------------------------------------------------------
def _im2col_pool_corners(x, k):
    """NHWC x -> (4, N*PH*PW, k*k*C): im2col patches grouped by 2x2 pool corner.

    Column order is (kh, kw, cin); rows of each corner slab are (n, ph, pw).
    """
    # TODO(synk): im2col stays in XLA glue; a fully in-kernel window gather
    # would cut the remaining ~k*k x patch-matrix HBM traffic further.
    n, h, w, c = x.shape
    oh, ow = h - k + 1, w - k + 1
    ph, pw = oh // 2, ow // 2
    cols = []
    for di in range(k):
        for dj in range(k):
            cols.append(x[:, di:di + oh, dj:dj + ow, :])
    p = jnp.stack(cols, axis=3).reshape(n, oh, ow, k * k * c)
    p = p[:, :2 * ph, :2 * pw, :]                         # floor, like MaxPool2d
    p = p.reshape(n, ph, 2, pw, 2, k * k * c)
    p = jnp.transpose(p, (2, 4, 0, 1, 3, 5))              # (2, 2, n, ph, pw, K)
    return p.reshape(4, n * ph * pw, k * k * c), (n, ph, pw)


def _fold_bn(w, b, gamma, beta, mean, var, eps=1e-5):
    """Fold eval-mode BN into the im2col weight matrix + per-channel shift."""
    cout, cin, k, _ = w.shape
    scale = gamma / jnp.sqrt(var + eps)
    w2 = jnp.transpose(w, (2, 3, 1, 0)).reshape(k * k * cin, cout) * scale[None, :]
    shift = (beta + scale * (b - mean)).reshape(1, cout)
    return w2, shift


def conv_bn_relu_pool(x, w, b, gamma, beta, mean, var):
    """Conv2d(valid, stride 1) + BN(eval) + ReLU + MaxPool2d(2,2), NHWC."""
    cout, cin, k, _ = w.shape
    patches, (n, ph, pw) = _im2col_pool_corners(x, k)
    m = n * ph * pw
    kk = k * k * cin
    w2, shift = _fold_bn(w, b, gamma, beta, mean, var)

    tm = min(_TILE_M, _round_up(m, _ALIGN))
    m_pad = _round_up(m, tm)
    if m_pad != m:
        patches = jnp.pad(patches, ((0, 0), (0, m_pad - m), (0, 0)))
    patches = patches.astype(jnp.bfloat16)
    w2 = w2.astype(jnp.bfloat16)

    out = pl.pallas_call(
        _conv_bn_relu_pool_kernel,
        out_shape=jax.ShapeDtypeStruct((m_pad, cout), jnp.float32),
        grid=(m_pad // tm,),
        in_specs=[
            pl.BlockSpec((4, tm, kk), lambda i: (0, i, 0)),   # row tile, pipelined
            pl.BlockSpec((kk, cout), lambda i: (0, 0)),       # weights resident
            pl.BlockSpec((1, cout), lambda i: (0, 0)),
        ],
        out_specs=pl.BlockSpec((tm, cout), lambda i: (i, 0)),
        compiler_params=pltpu.CompilerParams(
            dimension_semantics=("parallel",),                # megacore on v7x
            vmem_limit_bytes=_VMEM_LIMIT),
    )(patches, w2, shift)
    return out[:m].reshape(n, ph, pw, cout)


def conv3_fc_head(x, p):
    """conv3+BN+ReLU (1x1 output) fused with the activation-free fc chain."""
    n, hh, ww, cin = x.shape
    cout3, cin3, k3, _ = p["w3"].shape
    assert (hh, ww, cin) == (k3, k3, cin3), "conv3 must reduce the map to 1x1"
    kk = k3 * k3 * cin3
    w3, s3 = _fold_bn(p["w3"], p["b3"], p["bn3_gamma"], p["bn3_beta"],
                      p["bn3_mean"], p["bn3_var"])
    # No activations between fc1/fc2/fc3 -> exact composition into one affine.
    wf = (p["fw3"] @ p["fw2"] @ p["fw1"]).T                               # (32, 2)
    bf = (p["fw3"] @ (p["fw2"] @ p["fb1"] + p["fb2"]) + p["fb3"]).reshape(1, -1)
    nout = wf.shape[1]

    xf = x.reshape(n, kk)                                  # (kh,kw,cin) == NHWC flatten
    tb = min(_TILE_M, _round_up(n, _ALIGN))
    n_pad = _round_up(n, tb)
    if n_pad != n:
        xf = jnp.pad(xf, ((0, n_pad - n), (0, 0)))
    xf = xf.astype(jnp.bfloat16)
    w3 = w3.astype(jnp.bfloat16)
    wf = wf.astype(jnp.bfloat16)

    out = pl.pallas_call(
        _head_kernel,
        out_shape=jax.ShapeDtypeStruct((n_pad, nout), jnp.float32),
        grid=(n_pad // tb,),
        in_specs=[
            pl.BlockSpec((tb, kk), lambda i: (i, 0)),
            pl.BlockSpec((kk, cout3), lambda i: (0, 0)),
            pl.BlockSpec((1, cout3), lambda i: (0, 0)),
            pl.BlockSpec((cout3, nout), lambda i: (0, 0)),
            pl.BlockSpec((1, nout), lambda i: (0, 0)),
        ],
        out_specs=pl.BlockSpec((tb, nout), lambda i: (i, 0)),
        compiler_params=pltpu.CompilerParams(
            dimension_semantics=("parallel",),
            vmem_limit_bytes=_VMEM_LIMIT),
    )(xf, w3, s3, wf, bf)
    return out[:n]


# --------------------------------------------------------------------------
# Parameter initialization (deterministic, synthetic)
# --------------------------------------------------------------------------
def init_params(key):
    def u(k, shape, bound):
        return jax.random.uniform(k, shape, jnp.float32, -bound, bound)

    ks = jax.random.split(key, 16)
    p = {}
    # conv1: Conv2d(1, 8, 5)
    p["w1"] = u(ks[0], (8, 1, 5, 5), (1.0 / (1 * 25)) ** 0.5)
    p["b1"] = u(ks[1], (8,), (1.0 / (1 * 25)) ** 0.5)
    # conv2: Conv2d(8, 16, 5)
    p["w2"] = u(ks[2], (16, 8, 5, 5), (1.0 / (8 * 25)) ** 0.5)
    p["b2"] = u(ks[3], (16,), (1.0 / (8 * 25)) ** 0.5)
    # conv3: Conv2d(16, 32, 5)
    p["w3"] = u(ks[4], (32, 16, 5, 5), (1.0 / (16 * 25)) ** 0.5)
    p["b3"] = u(ks[5], (32,), (1.0 / (16 * 25)) ** 0.5)
    # per-stage eval-mode BatchNorm params
    for i, c, kk in ((1, 8, ks[6]), (2, 16, ks[7]), (3, 32, ks[8])):
        g, bta, mu = jax.random.split(kk, 3)
        p[f"bn{i}_gamma"] = 1.0 + 0.1 * jax.random.normal(g, (c,), jnp.float32)
        p[f"bn{i}_beta"] = 0.1 * jax.random.normal(bta, (c,), jnp.float32)
        p[f"bn{i}_mean"] = 0.05 * jax.random.normal(mu, (c,), jnp.float32)
        p[f"bn{i}_var"] = jnp.ones((c,), jnp.float32)
    # fc layers: 32 -> 16 -> 16 -> 2
    p["fw1"] = u(ks[9], (16, 32), (1.0 / 32) ** 0.5)
    p["fb1"] = u(ks[10], (16,), (1.0 / 32) ** 0.5)
    p["fw2"] = u(ks[11], (16, 16), (1.0 / 16) ** 0.5)
    p["fb2"] = u(ks[12], (16,), (1.0 / 16) ** 0.5)
    p["fw3"] = u(ks[13], (2, 16), (1.0 / 16) ** 0.5)
    p["fb3"] = u(ks[14], (2,), (1.0 / 16) ** 0.5)
    return p


# --------------------------------------------------------------------------
# Forward pass
# --------------------------------------------------------------------------
def cnn_regressor_forward(x_nchw, p):
    """x_nchw: (N, 1, 32, 32) float32 -> (N, 2) float32."""
    x = jnp.transpose(x_nchw, (0, 2, 3, 1))                       # NCHW -> NHWC
    # conv1+bn+relu+pool : (N,32,32,1) -> (N,14,14,8)   [one fused kernel]
    x = conv_bn_relu_pool(x, p["w1"], p["b1"], p["bn1_gamma"], p["bn1_beta"],
                          p["bn1_mean"], p["bn1_var"])
    # conv2+bn+relu+pool : -> (N,5,5,16)                [one fused kernel]
    x = conv_bn_relu_pool(x, p["w2"], p["b2"], p["bn2_gamma"], p["bn2_beta"],
                          p["bn2_mean"], p["bn2_var"])
    # conv3+bn+relu + flatten + fc1/fc2/fc3             [one fused kernel]
    return conv3_fc_head(x, p)


# --------------------------------------------------------------------------
if __name__ == "__main__":
    key = jax.random.PRNGKey(0)
    k_x, k_p = jax.random.split(key)

    x = jax.random.normal(k_x, (2, 1, 32, 32), jnp.float32)       # NCHW input
    params = init_params(k_p)

    forward = jax.jit(cnn_regressor_forward)
    out = forward(x, params)
    out = jax.block_until_ready(out)

    assert out.shape == (2, 2), out.shape
    assert out.dtype == jnp.float32
    print("KERNEL_OK")
</pallas_src>

<mosaic_0001>
module attributes {stable_mosaic.version = 11 : i64} {
  func.func @_conv_bn_relu_pool_kernel(%arg0: i32, %arg1: memref<4x400x25xbf16, #tpu.memory_space<vmem>>, %arg2: memref<25x8xbf16, #tpu.memory_space<vmem>>, %arg3: memref<1x8xf32, #tpu.memory_space<vmem>>, %arg4: memref<400x8xf32, #tpu.memory_space<vmem>>) attributes {dimension_semantics = [#tpu.dimension_semantics<parallel>], iteration_bounds = array<i64: 1>, scalar_prefetch = 0 : i64, scratch_operands = 0 : i64, tpu.core_type = #tpu.core_type<tc>, window_params = [{transform_indices = @transform_0, window_bounds = array<i64: 4, 400, 25>}, {pipeline_mode = #tpu.pipeline_mode<synchronous>, transform_indices = @transform_1, window_bounds = array<i64: 25, 8>}, {pipeline_mode = #tpu.pipeline_mode<synchronous>, transform_indices = @transform_2, window_bounds = array<i64: 1, 8>}, {transform_indices = @transform_3, window_bounds = array<i64: 400, 8>}]} {
    %c0 = arith.constant 0 : index
    %c0_0 = arith.constant 0 : index
    %0 = vector.load %arg2[%c0, %c0_0] : memref<25x8xbf16, #tpu.memory_space<vmem>>, vector<25x8xbf16>
    %c0_1 = arith.constant 0 : index
    %c0_2 = arith.constant 0 : index
    %1 = vector.load %arg3[%c0_1, %c0_2] : memref<1x8xf32, #tpu.memory_space<vmem>>, vector<1x8xf32>
    %c0_3 = arith.constant 0 : index
    %c0_4 = arith.constant 0 : index
    %c0_5 = arith.constant 0 : index
    %2 = vector.load %arg1[%c0_3, %c0_4, %c0_5] : memref<4x400x25xbf16, #tpu.memory_space<vmem>>, vector<1x400x25xbf16>
    %3 = vector.shape_cast %2 : vector<1x400x25xbf16> to vector<400x25xbf16>
    %cst = arith.constant dense<0.000000e+00> : vector<400x8xf32>
    %4 = tpu.matmul %3, %0, %cst {dimension_numbers = #tpu.dot_dimension_numbers<[1], [0], [0], [1], [0, 0, 1, 1], [], []>} : vector<400x25xbf16>, vector<25x8xbf16>, vector<400x8xf32> -> vector<400x8xf32>
    %5 = vector.broadcast %1 : vector<1x8xf32> to vector<400x8xf32>
    %6 = arith.addf %4, %5 : vector<400x8xf32>
    %cst_6 = arith.constant 0.000000e+00 : f32
    %7 = vector.broadcast %cst_6 : f32 to vector<400x8xf32>
    %8 = arith.maximumf %6, %7 : vector<400x8xf32>
    %c1 = arith.constant 1 : index
    %c0_7 = arith.constant 0 : index
    %c0_8 = arith.constant 0 : index
    %9 = vector.load %arg1[%c1, %c0_7, %c0_8] : memref<4x400x25xbf16, #tpu.memory_space<vmem>>, vector<1x400x25xbf16>
    %10 = vector.shape_cast %9 : vector<1x400x25xbf16> to vector<400x25xbf16>
    %cst_9 = arith.constant dense<0.000000e+00> : vector<400x8xf32>
    %11 = tpu.matmul %10, %0, %cst_9 {dimension_numbers = #tpu.dot_dimension_numbers<[1], [0], [0], [1], [0, 0, 1, 1], [], []>} : vector<400x25xbf16>, vector<25x8xbf16>, vector<400x8xf32> -> vector<400x8xf32>
    %12 = vector.broadcast %1 : vector<1x8xf32> to vector<400x8xf32>
    %13 = arith.addf %11, %12 : vector<400x8xf32>
    %cst_10 = arith.constant 0.000000e+00 : f32
    %14 = vector.broadcast %cst_10 : f32 to vector<400x8xf32>
    %15 = arith.maximumf %13, %14 : vector<400x8xf32>
    %16 = arith.maximumf %8, %15 : vector<400x8xf32>
    %c2 = arith.constant 2 : index
    %c0_11 = arith.constant 0 : index
    %c0_12 = arith.constant 0 : index
    %17 = vector.load %arg1[%c2, %c0_11, %c0_12] : memref<4x400x25xbf16, #tpu.memory_space<vmem>>, vector<1x400x25xbf16>
    %18 = vector.shape_cast %17 : vector<1x400x25xbf16> to vector<400x25xbf16>
    %cst_13 = arith.constant dense<0.000000e+00> : vector<400x8xf32>
    %19 = tpu.matmul %18, %0, %cst_13 {dimension_numbers = #tpu.dot_dimension_numbers<[1], [0], [0], [1], [0, 0, 1, 1], [], []>} : vector<400x25xbf16>, vector<25x8xbf16>, vector<400x8xf32> -> vector<400x8xf32>
    %20 = vector.broadcast %1 : vector<1x8xf32> to vector<400x8xf32>
    %21 = arith.addf %19, %20 : vector<400x8xf32>
    %cst_14 = arith.constant 0.000000e+00 : f32
    %22 = vector.broadcast %cst_14 : f32 to vector<400x8xf32>
    %23 = arith.maximumf %21, %22 : vector<400x8xf32>
    %24 = arith.maximumf %16, %23 : vector<400x8xf32>
    %c3 = arith.constant 3 : index
    %c0_15 = arith.constant 0 : index
    %c0_16 = arith.constant 0 : index
    %25 = vector.load %arg1[%c3, %c0_15, %c0_16] : memref<4x400x25xbf16, #tpu.memory_space<vmem>>, vector<1x400x25xbf16>
    %26 = vector.shape_cast %25 : vector<1x400x25xbf16> to vector<400x25xbf16>
    %cst_17 = arith.constant dense<0.000000e+00> : vector<400x8xf32>
    %27 = tpu.matmul %26, %0, %cst_17 {dimension_numbers = #tpu.dot_dimension_numbers<[1], [0], [0], [1], [0, 0, 1, 1], [], []>} : vector<400x25xbf16>, vector<25x8xbf16>, vector<400x8xf32> -> vector<400x8xf32>
    %28 = vector.broadcast %1 : vector<1x8xf32> to vector<400x8xf32>
    %29 = arith.addf %27, %28 : vector<400x8xf32>
    %cst_18 = arith.constant 0.000000e+00 : f32
    %30 = vector.broadcast %cst_18 : f32 to vector<400x8xf32>
    %31 = arith.maximumf %29, %30 : vector<400x8xf32>
    %32 = arith.maximumf %24, %31 : vector<400x8xf32>
    %c0_19 = arith.constant 0 : index
    %c0_20 = arith.constant 0 : index
    %33 = vector.load %arg4[%c0_19, %c0_20] : memref<400x8xf32, #tpu.memory_space<vmem>>, vector<400x8xf32>
    tpu.vector_store %arg4[%c0_19, %c0_20], %32 {strides = array<i32>} : memref<400x8xf32, #tpu.memory_space<vmem>>, vector<400x8xf32>,
    return
  }
  func.func @transform_0(%arg0: i32) -> (i32, i32, i32) {
    %c0_i32 = arith.constant 0 : i32
    %c0_i32_0 = arith.constant 0 : i32
    %c0_i32_1 = arith.constant 0 : i32
    return %c0_i32, %arg0, %c0_i32_0 : i32, i32, i32
  }
  func.func @transform_1(%arg0: i32) -> (i32, i32) {
    %c0_i32 = arith.constant 0 : i32
    %c0_i32_0 = arith.constant 0 : i32
    %c0_i32_1 = arith.constant 0 : i32
    return %c0_i32, %c0_i32_0 : i32, i32
  }
  func.func @transform_2(%arg0: i32) -> (i32, i32) {
    %c0_i32 = arith.constant 0 : i32
    %c0_i32_0 = arith.constant 0 : i32
    %c0_i32_1 = arith.constant 0 : i32
    return %c0_i32, %c0_i32_0 : i32, i32
  }
  func.func @transform_3(%arg0: i32) -> (i32, i32) {
    %c0_i32 = arith.constant 0 : i32
    %c0_i32_0 = arith.constant 0 : i32
    return %arg0, %c0_i32 : i32, i32
  }
}

module attributes {stable_mosaic.version = 11 : i64} {
  func.func @_conv_bn_relu_pool_kernel(%arg0: i32, %arg1: memref<4x64x200xbf16, #tpu.memory_space<vmem>>, %arg2: memref<200x16xbf16, #tpu.memory_space<vmem>>, %arg3: memref<1x16xf32, #tpu.memory_space<vmem>>, %arg4: memref<64x16xf32, #tpu.memory_space<vmem>>) attributes {dimension_semantics = [#tpu.dimension_semantics<parallel>], iteration_bounds = array<i64: 1>, scalar_prefetch = 0 : i64, scratch_operands = 0 : i64, tpu.core_type = #tpu.core_type<tc>, window_params = [{transform_indices = @transform_0, window_bounds = array<i64: 4, 64, 200>}, {pipeline_mode = #tpu.pipeline_mode<synchronous>, transform_indices = @transform_1, window_bounds = array<i64: 200, 16>}, {pipeline_mode = #tpu.pipeline_mode<synchronous>, transform_indices = @transform_2, window_bounds = array<i64: 1, 16>}, {transform_indices = @transform_3, window_bounds = array<i64: 64, 16>}]} {
    %c0 = arith.constant 0 : index
    %c0_0 = arith.constant 0 : index
    %0 = vector.load %arg2[%c0, %c0_0] : memref<200x16xbf16, #tpu.memory_space<vmem>>, vector<200x16xbf16>
    %c0_1 = arith.constant 0 : index
    %c0_2 = arith.constant 0 : index
    %1 = vector.load %arg3[%c0_1, %c0_2] : memref<1x16xf32, #tpu.memory_space<vmem>>, vector<1x16xf32>
    %c0_3 = arith.constant 0 : index
    %c0_4 = arith.constant 0 : index
    %c0_5 = arith.constant 0 : index
    %2 = vector.load %arg1[%c0_3, %c0_4, %c0_5] : memref<4x64x200xbf16, #tpu.memory_space<vmem>>, vector<1x64x200xbf16>
    %3 = vector.shape_cast %2 : vector<1x64x200xbf16> to vector<64x200xbf16>
    %cst = arith.constant dense<0.000000e+00> : vector<64x16xf32>
    %4 = tpu.matmul %3, %0, %cst {dimension_numbers = #tpu.dot_dimension_numbers<[1], [0], [0], [1], [0, 0, 1, 1], [], []>} : vector<64x200xbf16>, vector<200x16xbf16>, vector<64x16xf32> -> vector<64x16xf32>
    %5 = vector.broadcast %1 : vector<1x16xf32> to vector<64x16xf32>
    %6 = arith.addf %4, %5 : vector<64x16xf32>
    %cst_6 = arith.constant 0.000000e+00 : f32
    %7 = vector.broadcast %cst_6 : f32 to vector<64x16xf32>
    %8 = arith.maximumf %6, %7 : vector<64x16xf32>
    %c1 = arith.constant 1 : index
    %c0_7 = arith.constant 0 : index
    %c0_8 = arith.constant 0 : index
    %9 = vector.load %arg1[%c1, %c0_7, %c0_8] : memref<4x64x200xbf16, #tpu.memory_space<vmem>>, vector<1x64x200xbf16>
    %10 = vector.shape_cast %9 : vector<1x64x200xbf16> to vector<64x200xbf16>
    %cst_9 = arith.constant dense<0.000000e+00> : vector<64x16xf32>
    %11 = tpu.matmul %10, %0, %cst_9 {dimension_numbers = #tpu.dot_dimension_numbers<[1], [0], [0], [1], [0, 0, 1, 1], [], []>} : vector<64x200xbf16>, vector<200x16xbf16>, vector<64x16xf32> -> vector<64x16xf32>
    %12 = vector.broadcast %1 : vector<1x16xf32> to vector<64x16xf32>
    %13 = arith.addf %11, %12 : vector<64x16xf32>
    %cst_10 = arith.constant 0.000000e+00 : f32
    %14 = vector.broadcast %cst_10 : f32 to vector<64x16xf32>
    %15 = arith.maximumf %13, %14 : vector<64x16xf32>
    %16 = arith.maximumf %8, %15 : vector<64x16xf32>
    %c2 = arith.constant 2 : index
    %c0_11 = arith.constant 0 : index
    %c0_12 = arith.constant 0 : index
    %17 = vector.load %arg1[%c2, %c0_11, %c0_12] : memref<4x64x200xbf16, #tpu.memory_space<vmem>>, vector<1x64x200xbf16>
    %18 = vector.shape_cast %17 : vector<1x64x200xbf16> to vector<64x200xbf16>
    %cst_13 = arith.constant dense<0.000000e+00> : vector<64x16xf32>
    %19 = tpu.matmul %18, %0, %cst_13 {dimension_numbers = #tpu.dot_dimension_numbers<[1], [0], [0], [1], [0, 0, 1, 1], [], []>} : vector<64x200xbf16>, vector<200x16xbf16>, vector<64x16xf32> -> vector<64x16xf32>
    %20 = vector.broadcast %1 : vector<1x16xf32> to vector<64x16xf32>
    %21 = arith.addf %19, %20 : vector<64x16xf32>
    %cst_14 = arith.constant 0.000000e+00 : f32
    %22 = vector.broadcast %cst_14 : f32 to vector<64x16xf32>
    %23 = arith.maximumf %21, %22 : vector<64x16xf32>
    %24 = arith.maximumf %16, %23 : vector<64x16xf32>
    %c3 = arith.constant 3 : index
    %c0_15 = arith.constant 0 : index
    %c0_16 = arith.constant 0 : index
    %25 = vector.load %arg1[%c3, %c0_15, %c0_16] : memref<4x64x200xbf16, #tpu.memory_space<vmem>>, vector<1x64x200xbf16>
    %26 = vector.shape_cast %25 : vector<1x64x200xbf16> to vector<64x200xbf16>
    %cst_17 = arith.constant dense<0.000000e+00> : vector<64x16xf32>
    %27 = tpu.matmul %26, %0, %cst_17 {dimension_numbers = #tpu.dot_dimension_numbers<[1], [0], [0], [1], [0, 0, 1, 1], [], []>} : vector<64x200xbf16>, vector<200x16xbf16>, vector<64x16xf32> -> vector<64x16xf32>
    %28 = vector.broadcast %1 : vector<1x16xf32> to vector<64x16xf32>
    %29 = arith.addf %27, %28 : vector<64x16xf32>
    %cst_18 = arith.constant 0.000000e+00 : f32
    %30 = vector.broadcast %cst_18 : f32 to vector<64x16xf32>
    %31 = arith.maximumf %29, %30 : vector<64x16xf32>
    %32 = arith.maximumf %24, %31 : vector<64x16xf32>
    %c0_19 = arith.constant 0 : index
    %c0_20 = arith.constant 0 : index
    %33 = vector.load %arg4[%c0_19, %c0_20] : memref<64x16xf32, #tpu.memory_space<vmem>>, vector<64x16xf32>
    tpu.vector_store %arg4[%c0_19, %c0_20], %32 {strides = array<i32>} : memref<64x16xf32, #tpu.memory_space<vmem>>, vector<64x16xf32>,
    return
  }
  func.func @transform_0(%arg0: i32) -> (i32, i32, i32) {
    %c0_i32 = arith.constant 0 : i32
    %c0_i32_0 = arith.constant 0 : i32
    %c0_i32_1 = arith.constant 0 : i32
    return %c0_i32, %arg0, %c0_i32_0 : i32, i32, i32
  }
  func.func @transform_1(%arg0: i32) -> (i32, i32) {
    %c0_i32 = arith.constant 0 : i32
    %c0_i32_0 = arith.constant 0 : i32
    %c0_i32_1 = arith.constant 0 : i32
    return %c0_i32, %c0_i32_0 : i32, i32
  }
  func.func @transform_2(%arg0: i32) -> (i32, i32) {
    %c0_i32 = arith.constant 0 : i32
    %c0_i32_0 = arith.constant 0 : i32
    %c0_i32_1 = arith.constant 0 : i32
    return %c0_i32, %c0_i32_0 : i32, i32
  }
  func.func @transform_3(%arg0: i32) -> (i32, i32) {
    %c0_i32 = arith.constant 0 : i32
    %c0_i32_0 = arith.constant 0 : i32
    return %arg0, %c0_i32 : i32, i32
  }
}

module attributes {stable_mosaic.version = 11 : i64} {
  func.func @_head_kernel(%arg0: i32, %arg1: memref<16x400xbf16, #tpu.memory_space<vmem>>, %arg2: memref<400x32xbf16, #tpu.memory_space<vmem>>, %arg3: memref<1x32xf32, #tpu.memory_space<vmem>>, %arg4: memref<32x2xbf16, #tpu.memory_space<vmem>>, %arg5: memref<1x2xf32, #tpu.memory_space<vmem>>, %arg6: memref<16x2xf32, #tpu.memory_space<vmem>>) attributes {dimension_semantics = [#tpu.dimension_semantics<parallel>], iteration_bounds = array<i64: 1>, scalar_prefetch = 0 : i64, scratch_operands = 0 : i64, tpu.core_type = #tpu.core_type<tc>, window_params = [{transform_indices = @transform_0, window_bounds = array<i64: 16, 400>}, {pipeline_mode = #tpu.pipeline_mode<synchronous>, transform_indices = @transform_1, window_bounds = array<i64: 400, 32>}, {pipeline_mode = #tpu.pipeline_mode<synchronous>, transform_indices = @transform_2, window_bounds = array<i64: 1, 32>}, {pipeline_mode = #tpu.pipeline_mode<synchronous>, transform_indices = @transform_3, window_bounds = array<i64: 32, 2>}, {pipeline_mode = #tpu.pipeline_mode<synchronous>, transform_indices = @transform_4, window_bounds = array<i64: 1, 2>}, {transform_indices = @transform_5, window_bounds = array<i64: 16, 2>}]} {
    %c0 = arith.constant 0 : index
    %c0_0 = arith.constant 0 : index
    %0 = vector.load %arg1[%c0, %c0_0] : memref<16x400xbf16, #tpu.memory_space<vmem>>, vector<16x400xbf16>
    %c0_1 = arith.constant 0 : index
    %c0_2 = arith.constant 0 : index
    %1 = vector.load %arg2[%c0_1, %c0_2] : memref<400x32xbf16, #tpu.memory_space<vmem>>, vector<400x32xbf16>
    %cst = arith.constant dense<0.000000e+00> : vector<16x32xf32>
    %2 = tpu.matmul %0, %1, %cst {dimension_numbers = #tpu.dot_dimension_numbers<[1], [0], [0], [1], [0, 0, 1, 1], [], []>} : vector<16x400xbf16>, vector<400x32xbf16>, vector<16x32xf32> -> vector<16x32xf32>
    %c0_3 = arith.constant 0 : index
    %c0_4 = arith.constant 0 : index
    %3 = vector.load %arg3[%c0_3, %c0_4] : memref<1x32xf32, #tpu.memory_space<vmem>>, vector<1x32xf32>
    %4 = vector.broadcast %3 : vector<1x32xf32> to vector<16x32xf32>
    %5 = arith.addf %2, %4 : vector<16x32xf32>
    %cst_5 = arith.constant 0.000000e+00 : f32
    %6 = vector.broadcast %cst_5 : f32 to vector<16x32xf32>
    %7 = arith.maximumf %5, %6 : vector<16x32xf32>
    %8 = arith.truncf %7 : vector<16x32xf32> to vector<16x32xbf16>
    %c0_6 = arith.constant 0 : index
    %c0_7 = arith.constant 0 : index
    %9 = vector.load %arg4[%c0_6, %c0_7] : memref<32x2xbf16, #tpu.memory_space<vmem>>, vector<32x2xbf16>
    %cst_8 = arith.constant dense<0.000000e+00> : vector<16x2xf32>
    %10 = tpu.matmul %8, %9, %cst_8 {dimension_numbers = #tpu.dot_dimension_numbers<[1], [0], [0], [1], [0, 0, 1, 1], [], []>} : vector<16x32xbf16>, vector<32x2xbf16>, vector<16x2xf32> -> vector<16x2xf32>
    %c0_9 = arith.constant 0 : index
    %c0_10 = arith.constant 0 : index
    %11 = vector.load %arg5[%c0_9, %c0_10] : memref<1x2xf32, #tpu.memory_space<vmem>>, vector<1x2xf32>
    %12 = vector.broadcast %11 : vector<1x2xf32> to vector<16x2xf32>
    %13 = arith.addf %10, %12 : vector<16x2xf32>
    %c0_11 = arith.constant 0 : index
    %c0_12 = arith.constant 0 : index
    %14 = vector.load %arg6[%c0_11, %c0_12] : memref<16x2xf32, #tpu.memory_space<vmem>>, vector<16x2xf32>
    tpu.vector_store %arg6[%c0_11, %c0_12], %13 {strides = array<i32>} : memref<16x2xf32, #tpu.memory_space<vmem>>, vector<16x2xf32>,
    return
  }
  func.func @transform_0(%arg0: i32) -> (i32, i32) {
    %c0_i32 = arith.constant 0 : i32
    %c0_i32_0 = arith.constant 0 : i32
    return %arg0, %c0_i32 : i32, i32
  }
  func.func @transform_1(%arg0: i32) -> (i32, i32) {
    %c0_i32 = arith.constant 0 : i32
    %c0_i32_0 = arith.constant 0 : i32
    %c0_i32_1 = arith.constant 0 : i32
    return %c0_i32, %c0_i32_0 : i32, i32
  }
  func.func @transform_2(%arg0: i32) -> (i32, i32) {
    %c0_i32 = arith.constant 0 : i32
    %c0_i32_0 = arith.constant 0 : i32
    %c0_i32_1 = arith.constant 0 : i32
    return %c0_i32, %c0_i32_0 : i32, i32
  }
  func.func @transform_3(%arg0: i32) -> (i32, i32) {
    %c0_i32 = arith.constant 0 : i32
    %c0_i32_0 = arith.constant 0 : i32
    %c0_i32_1 = arith.constant 0 : i32
    return %c0_i32, %c0_i32_0 : i32, i32
  }
  func.func @transform_4(%arg0: i32) -> (i32, i32) {
    %c0_i32 = arith.constant 0 : i32
    %c0_i32_0 = arith.constant 0 : i32
    %c0_i32_1 = arith.constant 0 : i32
    return %c0_i32, %c0_i32_0 : i32, i32
  }
  func.func @transform_5(%arg0: i32) -> (i32, i32) {
    %c0_i32 = arith.constant 0 : i32
    %c0_i32_0 = arith.constant 0 : i32
    return %arg0, %c0_i32 : i32, i32
  }
}

</mosaic_0001>

<llo_original>
// kernel: cnn_regressor_forward.3
$region0: #{cnn_regressor_forward.3}
  #allocation0 [shape = 'u32[]', space=smem, size = 0x4, offset = 0x4, fixed_abs, tag = 'smem constant byte address 0x4 - core index']
  #allocation1 [shape = 'u32[144,128]{1,0:T(1,128)}', space=vmem, size = 0x12000, scoped, tag = 'internal scratch']
  %s0 = inlined_call_operand.vmem [shape: bf16[4,400,25], index: 0, kind: input, shape index: {}]
  %s1 = inlined_call_operand.vmem [shape: bf16[25,8], index: 1, kind: input, shape index: {}]
  %s2 = inlined_call_operand.vmem [shape: f32[1,8], index: 2, kind: input, shape index: {}]
  %s3 = inlined_call_operand.vmem [shape: f32[400,8], index: 3, kind: output, shape index: {}]
  %s4 = sld [smem:[#allocation0]]
  $region22: #{cnn_regressor_forward.3} parent=0
    _
  %s6 = ssub.s32 1, %s4
  %s7 = scalar_select 0, %s6, %s4
  // Predicated region
  $region2: #{cnn_regressor_forward.3} parent=0 // pred_check
    _
  $region3: #{cnn_regressor_forward.3} parent=0 // pred_check_branch
    %9 = sbr.rel (0) target = $region5
  $region4: #{cnn_regressor_forward.3} parent=0 // pred_region
    _
  $region5: #{cnn_regressor_forward.3} parent=0 // pred_fallthru
    _
  // Predicated region
  $region6: #{cnn_regressor_forward.3} parent=0 // pred_check
    _
  $region7: #{cnn_regressor_forward.3} parent=0 // pred_check_branch
    %11 = sbr.rel (0) target = $region9
  $region8: #{cnn_regressor_forward.3} parent=0 // pred_region
    _
  $region9: #{cnn_regressor_forward.3} parent=0 // pred_fallthru
    _
  // Predicated region
  $region10: #{cnn_regressor_forward.3} parent=0 // pred_check
    _
  $region11: #{cnn_regressor_forward.3} parent=0 // pred_check_branch
    %13 = sbr.rel (0) target = $region13
  $region12: #{cnn_regressor_forward.3} parent=0 // pred_region
    _
  $region13: #{cnn_regressor_forward.3} parent=0 // pred_fallthru
    _
  %v15 = vld [vmem:[%s1] sm:$0xf]
  %v16 = vld [vmem:[%s1 + $0x4] sm:$0xf]
  %v17 = vld [vmem:[%s1 + $0x8] sm:$0xf]
  %v18 = vld [vmem:[%s1 + $0xc] sm:$0x1]
  %v19 = vld [vmem:[%s2] sm:$0x1]
  %v20 = vld [vmem:[%s0] sm:$0xf]
  %v21 = vld [vmem:[%s0 + $0x4] sm:$0xf]
  %v22 = vld [vmem:[%s0 + $0x8] sm:$0xf]
  %v23 = vld [vmem:[%s0 + $0xc] sm:$0xf]
  %v24 = vld [vmem:[%s0 + $0x10] sm:$0xf]
  %v25 = vld [vmem:[%s0 + $0x14] sm:$0xf]
  %v26 = vld [vmem:[%s0 + $0x18] sm:$0xf]
  %v27 = vld [vmem:[%s0 + $0x1c] sm:$0xf]
  %v28 = vld [vmem:[%s0 + $0x20] sm:$0xf]
  %v29 = vld [vmem:[%s0 + $0x24] sm:$0xf]
  %v30 = vld [vmem:[%s0 + $0x28] sm:$0xf]
  %v31 = vld [vmem:[%s0 + $0x2c] sm:$0xf]
  %v32 = vld [vmem:[%s0 + $0x30] sm:$0xf]
  %v33 = vld [vmem:[%s0 + $0x34] sm:$0xf]
  %v34 = vld [vmem:[%s0 + $0x38] sm:$0xf]
  %v35 = vld [vmem:[%s0 + $0x3c] sm:$0xf]
  %v36 = vld [vmem:[%s0 + $0x40] sm:$0xf]
  %v37 = vld [vmem:[%s0 + $0x44] sm:$0xf]
  %v38 = vld [vmem:[%s0 + $0x48] sm:$0xf]
  %v39 = vld [vmem:[%s0 + $0x4c] sm:$0xf]
  %v40 = vld [vmem:[%s0 + $0x50] sm:$0xf]
  %v41 = vld [vmem:[%s0 + $0x54] sm:$0xf]
  %v42 = vld [vmem:[%s0 + $0x58] sm:$0xf]
  %v43 = vld [vmem:[%s0 + $0x5c] sm:$0xf]
  %v44 = vld [vmem:[%s0 + $0x60] sm:$0xf]
  %v45 = vld [vmem:[%s0 + $0x64] sm:$0xf]
  %v46 = vld [vmem:[%s0 + $0x68] sm:$0xf]
  %v47 = vld [vmem:[%s0 + $0x6c] sm:$0xf]
  %v48 = vld [vmem:[%s0 + $0x70] sm:$0xf]
  %v49 = vld [vmem:[%s0 + $0x74] sm:$0xf]
  %v50 = vld [vmem:[%s0 + $0x78] sm:$0xf]
  %v51 = vld [vmem:[%s0 + $0x7c] sm:$0xf]
  %v52 = vld [vmem:[%s0 + $0x80] sm:$0xf]
  %v53 = vld [vmem:[%s0 + $0x84] sm:$0xf]
  %v54 = vld [vmem:[%s0 + $0x88] sm:$0xf]
  %v55 = vld [vmem:[%s0 + $0x8c] sm:$0xf]
  %v56 = vld [vmem:[%s0 + $0x90] sm:$0xf]
  %v57 = vld [vmem:[%s0 + $0x94] sm:$0xf]
  %v58 = vld [vmem:[%s0 + $0x98] sm:$0xf]
  %v59 = vld [vmem:[%s0 + $0x9c] sm:$0xf]
  %v60 = vld [vmem:[%s0 + $0xa0] sm:$0xf]
  %v61 = vld [vmem:[%s0 + $0xa4] sm:$0xf]
  %v62 = vld [vmem:[%s0 + $0xa8] sm:$0xf]
  %v63 = vld [vmem:[%s0 + $0xac] sm:$0xf]
  %v64 = vld [vmem:[%s0 + $0xb0] sm:$0xf]
  %v65 = vld [vmem:[%s0 + $0xb4] sm:$0xf]
  %v66 = vld [vmem:[%s0 + $0xb8] sm:$0xf]
  %v67 = vld [vmem:[%s0 + $0xbc] sm:$0xf]
  %v68 = vld [vmem:[%s0 + $0xc0] sm:$0xf]
  %v69 = vld [vmem:[%s0 + $0xc4] sm:$0xf]
  %v71 = vlaneseq
  %v72 = vshrl.u32 %v71, 7
  %v73 = vsub.s32 0, %v72
  %v74 = vrot.slane %v19, %v73
  %v126 = vunpack.c.l.b16 %v20
  %v127 = vunpack.c.l.b16 %v21
  %v128 = vunpack.c.l.b16 %v22
  %v129 = vunpack.c.l.b16 %v23
  %v130 = vunpack.c.l.b16 %v24
  %v131 = vunpack.c.l.b16 %v25
  %v132 = vunpack.c.l.b16 %v26
  %v133 = vunpack.c.l.b16 %v27
  %v134 = vunpack.c.l.b16 %v28
  %v135 = vunpack.c.l.b16 %v29
  %v136 = vunpack.c.l.b16 %v30
  %v137 = vunpack.c.l.b16 %v31
  %v138 = vunpack.c.l.b16 %v32
  %v139 = vunpack.c.l.b16 %v33
  %v140 = vunpack.c.l.b16 %v34
  %v141 = vunpack.c.l.b16 %v35
  %v142 = vunpack.c.l.b16 %v36
  %v143 = vunpack.c.l.b16 %v37
  %v144 = vunpack.c.l.b16 %v38
  %v145 = vunpack.c.l.b16 %v39
  %v146 = vunpack.c.l.b16 %v40
  %v147 = vunpack.c.l.b16 %v41
  %v148 = vunpack.c.l.b16 %v42
  %v149 = vunpack.c.l.b16 %v43
  %v150 = vunpack.c.l.b16 %v44
  %v151 = vunpack.c.l.b16 %v45
  %v152 = vunpack.c.l.b16 %v46
  %v153 = vunpack.c.l.b16 %v47
  %v154 = vunpack.c.l.b16 %v48
  %v155 = vunpack.c.l.b16 %v49
  %v156 = vunpack.c.l.b16 %v50
  %v157 = vunpack.c.l.b16 %v51
  %v158 = vunpack.c.l.b16 %v52
  %v159 = vunpack.c.l.b16 %v53
  %v160 = vunpack.c.l.b16 %v54
  %v161 = vunpack.c.l.b16 %v55
  %v162 = vunpack.c.l.b16 %v56
  %v163 = vunpack.c.l.b16 %v57
  %v164 = vunpack.c.l.b16 %v58
  %v165 = vunpack.c.l.b16 %v59
  %v166 = vunpack.c.l.b16 %v60
  %v167 = vunpack.c.l.b16 %v61
  %v168 = vunpack.c.l.b16 %v62
  %v169 = vunpack.c.l.b16 %v63
  %v170 = vunpack.c.l.b16 %v64
  %v171 = vunpack.c.l.b16 %v65
  %v172 = vunpack.c.l.b16 %v66
  %v173 = vunpack.c.l.b16 %v67
  %v174 = vunpack.c.l.b16 %v68
  %v175 = vunpack.c.l.b16 %v69
  %v176 = vpack.c.b16 %v127, %v126
  %v177 = vpack.c.b16 %v129, %v128
  %v178 = vpack.c.b16 %v131, %v130
  %v179 = vpack.c.b16 %v133, %v132
  %v180 = vpack.c.b16 %v135, %v134
  %v181 = vpack.c.b16 %v137, %v136
  %v182 = vpack.c.b16 %v139, %v138
  %v183 = vpack.c.b16 %v141, %v140
  %v184 = vpack.c.b16 %v143, %v142
  %v185 = vpack.c.b16 %v145, %v144
  %v186 = vpack.c.b16 %v147, %v146
  %v187 = vpack.c.b16 %v149, %v148
  %v188 = vpack.c.b16 %v151, %v150
  %v189 = vpack.c.b16 %v153, %v152
  %v190 = vpack.c.b16 %v155, %v154
  %v191 = vpack.c.b16 %v157, %v156
  %v192 = vpack.c.b16 %v159, %v158
  %v193 = vpack.c.b16 %v161, %v160
  %v194 = vpack.c.b16 %v163, %v162
  %v195 = vpack.c.b16 %v165, %v164
  %v196 = vpack.c.b16 %v167, %v166
  %v197 = vpack.c.b16 %v169, %v168
  %v198 = vpack.c.b16 %v171, %v170
  %v199 = vpack.c.b16 %v173, %v172
  %v200 = vpack.c.b16 %v175, %v174
  %v205 = vunpack.c.l.b16 %v15
  %v206 = vunpack.c.l.b16 %v16
  %v207 = vunpack.c.l.b16 %v17
  %v208 = vunpack.c.l.b16 %v18
  %v209 = vpack.c.b16 %v206, %v205
  %v210 = vpack.c.b16 %v208, %v207
  %vm212 = vcmask 203776
  %v214 = vsel %vm212, %v176, 0
  %v217 = vsel %vm212, %v177, 0
  %v220 = vsel %vm212, %v178, 0
  %v223 = vsel %vm212, %v179, 0
  %v226 = vsel %vm212, %v180, 0
  %v229 = vsel %vm212, %v181, 0
  %v232 = vsel %vm212, %v182, 0
  %v235 = vsel %vm212, %v183, 0
  %v238 = vsel %vm212, %v184, 0
  %v241 = vsel %vm212, %v185, 0
  %v244 = vsel %vm212, %v186, 0
  %v247 = vsel %vm212, %v187, 0
  %v250 = vsel %vm212, %v188, 0
  %v253 = vsel %vm212, %v189, 0
  %v256 = vsel %vm212, %v190, 0
  %v259 = vsel %vm212, %v191, 0
  %v262 = vsel %vm212, %v192, 0
  %v265 = vsel %vm212, %v193, 0
  %v268 = vsel %vm212, %v194, 0
  %v271 = vsel %vm212, %v195, 0
  %v274 = vsel %vm212, %v196, 0
  %v277 = vsel %vm212, %v197, 0
  %v280 = vsel %vm212, %v198, 0
  %v283 = vsel %vm212, %v199, 0
  %v286 = vsel %vm212, %v200, 0
  %vm288 = vcmask 1043456
  %vm289 = vcmask 1044480
  %v290 = vsel %vm288, 4294967295, 65535
  %v291 = vsel %vm289, %v290, 0
  %v293 = vand.u32 %v210, %v291
  %295 = vmatprep.subr.bf16.mxu0 0
  %296 = vmatpush1.bf16.msra.mxu0 0
  %297 = vmatprep.subr.bf16.mxu0 0
  %298 = vmatpush1.bf16.msra.mxu0 0
  %299 = vmatprep.subr.bf16.mxu0 0
  %300 = vmatpush1.bf16.msra.mxu0 0
  %301 = vmatprep.subr.bf16.mxu0 0
  %302 = vmatpush1.bf16.msra.mxu0 0
  %303 = vmatprep.subr.bf16.mxu0 0
  %304 = vmatpush1.bf16.msra.mxu0 0
  %305 = vmatprep.subr.bf16.mxu0 0
  %306 = vmatpush1.bf16.msra.mxu0 0
  %307 = vmatprep.subr.bf16.mxu0 0
  %308 = vmatpush1.bf16.msra.mxu0 %v293
  %309 = vmatprep.subr.bf16.mxu0 0
  %310 = vmatpush1.bf16.msra.mxu0 %v209
  %311 = vmatprep.subr.bf16.mxu0 0
  %312 = vmatpush2.bf16.msra.mxu0 0
  %313 = vmatprep.subr.bf16.mxu0 0
  %314 = vmatpush2.bf16.msra.mxu0 0
  %315 = vmatprep.subr.bf16.mxu0 0
  %316 = vmatpush2.bf16.msra.mxu0 0
  %317 = vmatprep.subr.bf16.mxu0 0
  %318 = vmatpush2.bf16.msra.mxu0 0
  %319 = vmatprep.subr.bf16.mxu0 0
  %320 = vmatpush2.bf16.msra.mxu0 0
  %321 = vmatprep.subr.bf16.mxu0 0
  %322 = vmatpush2.bf16.msra.mxu0 0
  %323 = vmatprep.subr.bf16.mxu0 0
  %324 = vmatpush2.bf16.msra.mxu0 0
  %325 = vmatprep.subr.bf16.mxu0 0
  %326 = vmatpush2.bf16.msra.mxu0 0
  %327 = vmatprep.mubr.bf16.mxu0 0
  %328 = vmatmul.mubr.bf16.gmra.mxu0 %v214
  %v329 = vpop.f32.mrf.mxu0
  %v330 = vadd.f32 %v74, %v329
  %v331 = vpop.f32.mrf.mxu0
  %v332 = vpop.f32.mrf.mxu0
  %v333 = vadd.f32 %v74, %v332
  %v334 = vpop.f32.mrf.mxu0
  %335 = vmatprep.mubr.bf16.mxu0 0
  %336 = vmatmul.mubr.bf16.gmra.mxu0 %v217
  %v337 = vpop.f32.mrf.mxu0
  %v338 = vadd.f32 %v74, %v337
  %v339 = vpop.f32.mrf.mxu0
  %v340 = vpop.f32.mrf.mxu0
  %v341 = vadd.f32 %v74, %v340
  %v342 = vpop.f32.mrf.mxu0
  %343 = vmatprep.mubr.bf16.mxu0 0
  %344 = vmatmul.mubr.bf16.gmra.mxu0 %v220
  %v345 = vpop.f32.mrf.mxu0
  %v346 = vadd.f32 %v74, %v345
  %v347 = vpop.f32.mrf.mxu0
  %v348 = vpop.f32.mrf.mxu0
  %v349 = vadd.f32 %v74, %v348
  %v350 = vpop.f32.mrf.mxu0
  %351 = vmatprep.mubr.bf16.mxu0 0
  %352 = vmatmul.mubr.bf16.gmra.mxu0 %v223
  %v353 = vpop.f32.mrf.mxu0
  %v354 = vadd.f32 %v74, %v353
  %v355 = vpop.f32.mrf.mxu0
  %v356 = vpop.f32.mrf.mxu0
  %v357 = vadd.f32 %v74, %v356
  %v358 = vpop.f32.mrf.mxu0
  %359 = vmatprep.mubr.bf16.mxu0 0
  %360 = vmatmul.mubr.bf16.gmra.mxu0 %v226
  %v361 = vpop.f32.mrf.mxu0
  %v362 = vadd.f32 %v74, %v361
  %v363 = vpop.f32.mrf.mxu0
  %v364 = vpop.f32.mrf.mxu0
  %v365 = vadd.f32 %v74, %v364
  %v366 = vpop.f32.mrf.mxu0
  %367 = vmatprep.mubr.bf16.mxu0 0
  %368 = vmatmul.mubr.bf16.gmra.mxu0 %v229
  %v369 = vpop.f32.mrf.mxu0
  %v370 = vadd.f32 %v74, %v369
  %v371 = vpop.f32.mrf.mxu0
  %v372 = vpop.f32.mrf.mxu0
  %v373 = vadd.f32 %v74, %v372
  %v374 = vpop.f32.mrf.mxu0
  %375 = vmatprep.mubr.bf16.mxu0 0
  %376 = vmatmul.mubr.bf16.gmra.mxu0 %v232
  %v377 = vpop.f32.mrf.mxu0
  %v378 = vadd.f32 %v74, %v377
  %v379 = vpop.f32.mrf.mxu0
  %v380 = vpop.f32.mrf.mxu0
  %v381 = vadd.f32 %v74, %v380
  %v382 = vpop.f32.mrf.mxu0
  %383 = vmatprep.mubr.bf16.mxu0 0
  %384 = vmatmul.mubr.bf16.gmra.mxu0 %v235
  %v385 = vpop.f32.mrf.mxu0
  %v386 = vadd.f32 %v74, %v385
  %v387 = vpop.f32.mrf.mxu0
  %v388 = vpop.f32.mrf.mxu0
  %v389 = vadd.f32 %v74, %v388
  %v390 = vpop.f32.mrf.mxu0
  %391 = vmatprep.mubr.bf16.mxu0 0
  %392 = vmatmul.mubr.bf16.gmra.mxu0 %v238
  %v393 = vpop.f32.mrf.mxu0
  %v394 = vadd.f32 %v74, %v393
  %v395 = vpop.f32.mrf.mxu0
  %v396 = vpop.f32.mrf.mxu0
  %v397 = vadd.f32 %v74, %v396
  %v398 = vpop.f32.mrf.mxu0
  %399 = vmatprep.mubr.bf16.mxu0 0
  %400 = vmatmul.mubr.bf16.gmra.mxu0 %v241
  %v401 = vpop.f32.mrf.mxu0
  %v402 = vadd.f32 %v74, %v401
  %v403 = vpop.f32.mrf.mxu0
  %v404 = vpop.f32.mrf.mxu0
  %v405 = vadd.f32 %v74, %v404
  %v406 = vpop.f32.mrf.mxu0
  %407 = vmatprep.mubr.bf16.mxu0 0
  %408 = vmatmul.mubr.bf16.gmra.mxu0 %v244
  %v409 = vpop.f32.mrf.mxu0
  %v410 = vadd.f32 %v74, %v409
  %v411 = vpop.f32.mrf.mxu0
  %v412 = vpop.f32.mrf.mxu0
  %v413 = vadd.f32 %v74, %v412
  %v414 = vpop.f32.mrf.mxu0
  %415 = vmatprep.mubr.bf16.mxu0 0
  %416 = vmatmul.mubr.bf16.gmra.mxu0 %v247
  %v417 = vpop.f32.mrf.mxu0
  %v418 = vadd.f32 %v74, %v417
  %v419 = vpop.f32.mrf.mxu0
  %v420 = vpop.f32.mrf.mxu0
  %v421 = vadd.f32 %v74, %v420
  %v422 = vpop.f32.mrf.mxu0
  %423 = vmatprep.mubr.bf16.mxu0 0
  %424 = vmatmul.mubr.bf16.gmra.mxu0 %v250
  %v425 = vpop.f32.mrf.mxu0
  %v426 = vadd.f32 %v74, %v425
  %v427 = vpop.f32.mrf.mxu0
  %v428 = vpop.f32.mrf.mxu0
  %v429 = vadd.f32 %v74, %v428
  %v430 = vpop.f32.mrf.mxu0
  %431 = vmatprep.mubr.bf16.mxu0 0
  %432 = vmatmul.mubr.bf16.gmra.mxu0 %v253
  %v433 = vpop.f32.mrf.mxu0
  %v434 = vadd.f32 %v74, %v433
  %v435 = vpop.f32.mrf.mxu0
  %v436 = vpop.f32.mrf.mxu0
  %v437 = vadd.f32 %v74, %v436
  %v438 = vpop.f32.mrf.mxu0
  %439 = vmatprep.mubr.bf16.mxu0 0
  %440 = vmatmul.mubr.bf16.gmra.mxu0 %v256
  %v441 = vpop.f32.mrf.mxu0
  %v442 = vadd.f32 %v74, %v441
  %v443 = vpop.f32.mrf.mxu0
  %v444 = vpop.f32.mrf.mxu0
  %v445 = vadd.f32 %v74, %v444
  %v446 = vpop.f32.mrf.mxu0
  %447 = vmatprep.mubr.bf16.mxu0 0
  %448 = vmatmul.mubr.bf16.gmra.mxu0 %v259
  %v449 = vpop.f32.mrf.mxu0
  %v450 = vadd.f32 %v74, %v449
  %v451 = vpop.f32.mrf.mxu0
  %v452 = vpop.f32.mrf.mxu0
  %v453 = vadd.f32 %v74, %v452
  %v454 = vpop.f32.mrf.mxu0
  %455 = vmatprep.mubr.bf16.mxu0 0
  %456 = vmatmul.mubr.bf16.gmra.mxu0 %v262
  %v457 = vpop.f32.mrf.mxu0
  %v458 = vadd.f32 %v74, %v457
  %v459 = vpop.f32.mrf.mxu0
  %v460 = vpop.f32.mrf.mxu0
  %v461 = vadd.f32 %v74, %v460
  %v462 = vpop.f32.mrf.mxu0
  %463 = vmatprep.mubr.bf16.mxu0 0
  %464 = vmatmul.mubr.bf16.gmra.mxu0 %v265
  %v465 = vpop.f32.mrf.mxu0
  %v466 = vadd.f32 %v74, %v465
  %v467 = vpop.f32.mrf.mxu0
  %v468 = vpop.f32.mrf.mxu0
  %v469 = vadd.f32 %v74, %v468
  %v470 = vpop.f32.mrf.mxu0
  %471 = vmatprep.mubr.bf16.mxu0 0
  %472 = vmatmul.mubr.bf16.gmra.mxu0 %v268
  %v473 = vpop.f32.mrf.mxu0
  %v474 = vadd.f32 %v74, %v473
  %v475 = vpop.f32.mrf.mxu0
  %v476 = vpop.f32.mrf.mxu0
  %v477 = vadd.f32 %v74, %v476
  %v478 = vpop.f32.mrf.mxu0
  %479 = vmatprep.mubr.bf16.mxu0 0
  %480 = vmatmul.mubr.bf16.gmra.mxu0 %v271
  %v481 = vpop.f32.mrf.mxu0
  %v482 = vadd.f32 %v74, %v481
  %v483 = vpop.f32.mrf.mxu0
  %v484 = vpop.f32.mrf.mxu0
  %v485 = vadd.f32 %v74, %v484
  %v486 = vpop.f32.mrf.mxu0
  %487 = vmatprep.mubr.bf16.mxu0 0
  %488 = vmatmul.mubr.bf16.gmra.mxu0 %v274
  %v489 = vpop.f32.mrf.mxu0
  %v490 = vadd.f32 %v74, %v489
  %v491 = vpop.f32.mrf.mxu0
  %v492 = vpop.f32.mrf.mxu0
  %v493 = vadd.f32 %v74, %v492
  %v494 = vpop.f32.mrf.mxu0
  %495 = vmatprep.mubr.bf16.mxu0 0
  %496 = vmatmul.mubr.bf16.gmra.mxu0 %v277
  %v497 = vpop.f32.mrf.mxu0
  %v498 = vadd.f32 %v74, %v497
  %v499 = vpop.f32.mrf.mxu0
  %v500 = vpop.f32.mrf.mxu0
  %v501 = vadd.f32 %v74, %v500
  %v502 = vpop.f32.mrf.mxu0
  %503 = vmatprep.mubr.bf16.mxu0 0
  %504 = vmatmul.mubr.bf16.gmra.mxu0 %v280
  %v505 = vpop.f32.mrf.mxu0
  %v506 = vadd.f32 %v74, %v505
  %v507 = vpop.f32.mrf.mxu0
  %v508 = vpop.f32.mrf.mxu0
  %v509 = vadd.f32 %v74, %v508
  %v510 = vpop.f32.mrf.mxu0
  %511 = vmatprep.mubr.bf16.mxu0 0
  %512 = vmatmul.mubr.bf16.gmra.mxu0 %v283
  %v513 = vpop.f32.mrf.mxu0
  %v514 = vadd.f32 %v74, %v513
  %v515 = vpop.f32.mrf.mxu0
  %v516 = vpop.f32.mrf.mxu0
  %v517 = vadd.f32 %v74, %v516
  %v518 = vpop.f32.mrf.mxu0
  %519 = vmatprep.mubr.bf16.mxu0 0
  %520 = vmatmul.mubr.bf16.gmra.mxu0 %v286
  %v521 = vpop.f32.mrf.mxu0
  %v522 = vadd.f32 %v74, %v521
  %v523 = vpop.f32.mrf.mxu0
  %v524 = vpop.f32.mrf.mxu0
  %v525 = vadd.f32 %v74, %v524
  %v526 = vpop.f32.mrf.mxu0
  %527 = vdwg.mxu0
  %v528 = vmax.f32 %v330, 0.0
  %v529 = vmax.f32 %v333, 0.0
  %v530 = vmax.f32 %v338, 0.0
  %v531 = vmax.f32 %v341, 0.0
  %v532 = vmax.f32 %v346, 0.0
  %v533 = vmax.f32 %v349, 0.0
  %v534 = vmax.f32 %v354, 0.0
  %v535 = vmax.f32 %v357, 0.0
  %v536 = vmax.f32 %v362, 0.0
  %v537 = vmax.f32 %v365, 0.0
  %v538 = vmax.f32 %v370, 0.0
  %v539 = vmax.f32 %v373, 0.0
  %v540 = vmax.f32 %v378, 0.0
  %v541 = vmax.f32 %v381, 0.0
  %v542 = vmax.f32 %v386, 0.0
  %v543 = vmax.f32 %v389, 0.0
  %v544 = vmax.f32 %v394, 0.0
  %v545 = vmax.f32 %v397, 0.0
  %v546 = vmax.f32 %v402, 0.0
  %v547 = vmax.f32 %v405, 0.0
  %v548 = vmax.f32 %v410, 0.0
  %v549 = vmax.f32 %v413, 0.0
  %v550 = vmax.f32 %v418, 0.0
  %v551 = vmax.f32 %v421, 0.0
  %v552 = vmax.f32 %v426, 0.0
  %v553 = vmax.f32 %v429, 0.0
  %v554 = vmax.f32 %v434, 0.0
  %v555 = vmax.f32 %v437, 0.0
  %v556 = vmax.f32 %v442, 0.0
  %v557 = vmax.f32 %v445, 0.0
  %v558 = vmax.f32 %v450, 0.0
  %v559 = vmax.f32 %v453, 0.0
  %v560 = vmax.f32 %v458, 0.0
  %v561 = vmax.f32 %v461, 0.0
  %v562 = vmax.f32 %v466, 0.0
  %v563 = vmax.f32 %v469, 0.0
  %v564 = vmax.f32 %v474, 0.0
  %v565 = vmax.f32 %v477, 0.0
  %v566 = vmax.f32 %v482, 0.0
  %v567 = vmax.f32 %v485, 0.0
  %v568 = vmax.f32 %v490, 0.0
  %v569 = vmax.f32 %v493, 0.0
  %v570 = vmax.f32 %v498, 0.0
  %v571 = vmax.f32 %v501, 0.0
  %v572 = vmax.f32 %v506, 0.0
  %v573 = vmax.f32 %v509, 0.0
  %v574 = vmax.f32 %v514, 0.0
  %v575 = vmax.f32 %v517, 0.0
  %v576 = vmax.f32 %v522, 0.0
  %v577 = vmax.f32 %v525, 0.0
  %s578 = scalar_lea.vmem %s0, 200
  %v579 = vld [vmem:[%s578] sm:$0xf]
  %v580 = vld [vmem:[%s578 + $0x4] sm:$0xf]
  %v581 = vld [vmem:[%s578 + $0x8] sm:$0xf]
  %v582 = vld [vmem:[%s578 + $0xc] sm:$0xf]
  %v583 = vld [vmem:[%s578 + $0x10] sm:$0xf]
  %v584 = vld [vmem:[%s578 + $0x14] sm:$0xf]
  %v585 = vld [vmem:[%s578 + $0x18] sm:$0xf]
  %v586 = vld [vmem:[%s578 + $0x1c] sm:$0xf]
  %v587 = vld [vmem:[%s578 + $0x20] sm:$0xf]
  %v588 = vld [vmem:[%s578 + $0x24] sm:$0xf]
  %v589 = vld [vmem:[%s578 + $0x28] sm:$0xf]
  %v590 = vld [vmem:[%s578 + $0x2c] sm:$0xf]
  %v591 = vld [vmem:[%s578 + $0x30] sm:$0xf]
  %v592 = vld [vmem:[%s578 + $0x34] sm:$0xf]
  %v593 = vld [vmem:[%s578 + $0x38] sm:$0xf]
  %v594 = vld [vmem:[%s578 + $0x3c] sm:$0xf]
  %v595 = vld [vmem:[%s578 + $0x40] sm:$0xf]
  %v596 = vld [vmem:[%s578 + $0x44] sm:$0xf]
  %v597 = vld [vmem:[%s578 + $0x48] sm:$0xf]
  %v598 = vld [vmem:[%s578 + $0x4c] sm:$0xf]
  %v599 = vld [vmem:[%s578 + $0x50] sm:$0xf]
  %v600 = vld [vmem:[%s578 + $0x54] sm:$0xf]
  %v601 = vld [vmem:[%s578 + $0x58] sm:$0xf]
  %v602 = vld [vmem:[%s578 + $0x5c] sm:$0xf]
  %v603 = vld [vmem:[%s578 + $0x60] sm:$0xf]
  %v604 = vld [vmem:[%s578 + $0x64] sm:$0xf]
  %v605 = vld [vmem:[%s578 + $0x68] sm:$0xf]
  %v606 = vld [vmem:[%s578 + $0x6c] sm:$0xf]
  %v607 = vld [vmem:[%s578 + $0x70] sm:$0xf]
  %v608 = vld [vmem:[%s578 + $0x74] sm:$0xf]
  %v609 = vld [vmem:[%s578 + $0x78] sm:$0xf]
  %v610 = vld [vmem:[%s578 + $0x7c] sm:$0xf]
  %v611 = vld [vmem:[%s578 + $0x80] sm:$0xf]
  %v612 = vld [vmem:[%s578 + $0x84] sm:$0xf]
  %v613 = vld [vmem:[%s578 + $0x88] sm:$0xf]
  %v614 = vld [vmem:[%s578 + $0x8c] sm:$0xf]
  %v615 = vld [vmem:[%s578 + $0x90] sm:$0xf]
  %v616 = vld [vmem:[%s578 + $0x94] sm:$0xf]
  %v617 = vld [vmem:[%s578 + $0x98] sm:$0xf]
  %v618 = vld [vmem:[%s578 + $0x9c] sm:$0xf]
  %v619 = vld [vmem:[%s578 + $0xa0] sm:$0xf]
  %v620 = vld [vmem:[%s578 + $0xa4] sm:$0xf]
  %v621 = vld [vmem:[%s578 + $0xa8] sm:$0xf]
  %v622 = vld [vmem:[%s578 + $0xac] sm:$0xf]
  %v623 = vld [vmem:[%s578 + $0xb0] sm:$0xf]
  %v624 = vld [vmem:[%s578 + $0xb4] sm:$0xf]
  %v625 = vld [vmem:[%s578 + $0xb8] sm:$0xf]
  %v626 = vld [vmem:[%s578 + $0xbc] sm:$0xf]
  %v627 = vld [vmem:[%s578 + $0xc0] sm:$0xf]
  %v628 = vld [vmem:[%s578 + $0xc4] sm:$0xf]
  %v679 = vunpack.c.l.b16 %v579
  %v680 = vunpack.c.l.b16 %v580
  %v681 = vunpack.c.l.b16 %v581
  %v682 = vunpack.c.l.b16 %v582
  %v683 = vunpack.c.l.b16 %v583
  %v684 = vunpack.c.l.b16 %v584
  %v685 = vunpack.c.l.b16 %v585
  %v686 = vunpack.c.l.b16 %v586
  %v687 = vunpack.c.l.b16 %v587
  %v688 = vunpack.c.l.b16 %v588
  %v689 = vunpack.c.l.b16 %v589
  %v690 = vunpack.c.l.b16 %v590
  %v691 = vunpack.c.l.b16 %v591
  %v692 = vunpack.c.l.b16 %v592
  %v693 = vunpack.c.l.b16 %v593
  %v694 = vunpack.c.l.b16 %v594
  %v695 = vunpack.c.l.b16 %v595
  %v696 = vunpack.c.l.b16 %v596
  %v697 = vunpack.c.l.b16 %v597
  %v698 = vunpack.c.l.b16 %v598
  %v699 = vunpack.c.l.b16 %v599
  %v700 = vunpack.c.l.b16 %v600
  %v701 = vunpack.c.l.b16 %v601
  %v702 = vunpack.c.l.b16 %v602
  %v703 = vunpack.c.l.b16 %v603
  %v704 = vunpack.c.l.b16 %v604
  %v705 = vunpack.c.l.b16 %v605
  %v706 = vunpack.c.l.b16 %v606
  %v707 = vunpack.c.l.b16 %v607
  %v708 = vunpack.c.l.b16 %v608
  %v709 = vunpack.c.l.b16 %v609
  %v710 = vunpack.c.l.b16 %v610
  %v711 = vunpack.c.l.b16 %v611
  %v712 = vunpack.c.l.b16 %v612
  %v713 = vunpack.c.l.b16 %v613
  %v714 = vunpack.c.l.b16 %v614
  %v715 = vunpack.c.l.b16 %v615
  %v716 = vunpack.c.l.b16 %v616
  %v717 = vunpack.c.l.b16 %v617
  %v718 = vunpack.c.l.b16 %v618
  %v719 = vunpack.c.l.b16 %v619
  %v720 = vunpack.c.l.b16 %v620
  %v721 = vunpack.c.l.b16 %v621
  %v722 = vunpack.c.l.b16 %v622
  %v723 = vunpack.c.l.b16 %v623
  %v724 = vunpack.c.l.b16 %v624
  %v725 = vunpack.c.l.b16 %v625
  %v726 = vunpack.c.l.b16 %v626
  %v727 = vunpack.c.l.b16 %v627
  %v728 = vunpack.c.l.b16 %v628
  %v729 = vpack.c.b16 %v680, %v679
  %v730 = vpack.c.b16 %v682, %v681
  %v731 = vpack.c.b16 %v684, %v683
  %v732 = vpack.c.b16 %v686, %v685
  %v733 = vpack.c.b16 %v688, %v687
  %v734 = vpack.c.b16 %v690, %v689
  %v735 = vpack.c.b16 %v692, %v691
  %v736 = vpack.c.b16 %v694, %v693
  %v737 = vpack.c.b16 %v696, %v695
  %v738 = vpack.c.b16 %v698, %v697
  %v739 = vpack.c.b16 %v700, %v699
  %v740 = vpack.c.b16 %v702, %v701
  %v741 = vpack.c.b16 %v704, %v703
  %v742 = vpack.c.b16 %v706, %v705
  %v743 = vpack.c.b16 %v708, %v707
  %v744 = vpack.c.b16 %v710, %v709
  %v745 = vpack.c.b16 %v712, %v711
  %v746 = vpack.c.b16 %v714, %v713
  %v747 = vpack.c.b16 %v716, %v715
  %v748 = vpack.c.b16 %v718, %v717
  %v749 = vpack.c.b16 %v720, %v719
  %v750 = vpack.c.b16 %v722, %v721
  %v751 = vpack.c.b16 %v724, %v723
  %v752 = vpack.c.b16 %v726, %v725
  %v753 = vpack.c.b16 %v728, %v727
  %v755 = vsel %vm212, %v729, 0
  %v758 = vsel %vm212, %v730, 0
  %v761 = vsel %vm212, %v731, 0
  %v764 = vsel %vm212, %v732, 0
  %v767 = vsel %vm212, %v733, 0
  %v770 = vsel %vm212, %v734, 0
  %v773 = vsel %vm212, %v735, 0
  %v776 = vsel %vm212, %v736, 0
  %v779 = vsel %vm212, %v737, 0
  %v782 = vsel %vm212, %v738, 0
  %v785 = vsel %vm212, %v739, 0
  %v788 = vsel %vm212, %v740, 0
  %v791 = vsel %vm212, %v741, 0
  %v794 = vsel %vm212, %v742, 0
  %v797 = vsel %vm212, %v743, 0
  %v800 = vsel %vm212, %v744, 0
  %v803 = vsel %vm212, %v745, 0
  %v806 = vsel %vm212, %v746, 0
  %v809 = vsel %vm212, %v747, 0
  %v812 = vsel %vm212, %v748, 0
  %v815 = vsel %vm212, %v749, 0
  %v818 = vsel %vm212, %v750, 0
  %v821 = vsel %vm212, %v751, 0
  %v824 = vsel %vm212, %v752, 0
  %v827 = vsel %vm212, %v753, 0
  %829 = vmatprep.subr.bf16.mxu0 0
  %830 = vmatpush1.bf16.msra.mxu0 0
  %831 = vmatprep.subr.bf16.mxu0 0
  %832 = vmatpush1.bf16.msra.mxu0 0
  %833 = vmatprep.subr.bf16.mxu0 0
  %834 = vmatpush1.bf16.msra.mxu0 0
  %835 = vmatprep.subr.bf16.mxu0 0
  %836 = vmatpush1.bf16.msra.mxu0 0
  %837 = vmatprep.subr.bf16.mxu0 0
  %838 = vmatpush1.bf16.msra.mxu0 0
  %839 = vmatprep.subr.bf16.mxu0 0
  %840 = vmatpush1.bf16.msra.mxu0 0
  %841 = vmatprep.subr.bf16.mxu0 0
  %842 = vmatpush1.bf16.msra.mxu0 %v293
  %843 = vmatprep.subr.bf16.mxu0 0
  %844 = vmatpush1.bf16.msra.mxu0 %v209
  %845 = vmatprep.subr.bf16.mxu0 0
  %846 = vmatpush2.bf16.msra.mxu0 0
  %847 = vmatprep.subr.bf16.mxu0 0
  %848 = vmatpush2.bf16.msra.mxu0 0
  %849 = vmatprep.subr.bf16.mxu0 0
  %850 = vmatpush2.bf16.msra.mxu0 0
  %851 = vmatprep.subr.bf16.mxu0 0
  %852 = vmatpush2.bf16.msra.mxu0 0
  %853 = vmatprep.subr.bf16.mxu0 0
  %854 = vmatpush2.bf16.msra.mxu0 0
  %855 = vmatprep.subr.bf16.mxu0 0
  %856 = vmatpush2.bf16.msra.mxu0 0
  %857 = vmatprep.subr.bf16.mxu0 0
  %858 = vmatpush2.bf16.msra.mxu0 0
  %859 = vmatprep.subr.bf16.mxu0 0
  %860 = vmatpush2.bf16.msra.mxu0 0
  %861 = vmatprep.mubr.bf16.mxu0 0
  %862 = vmatmul.mubr.bf16.gmra.mxu0 %v755
  %v863 = vpop.f32.mrf.mxu0
  %v864 = vadd.f32 %v74, %v863
  %v865 = vpop.f32.mrf.mxu0
  %v866 = vpop.f32.mrf.mxu0
  %v867 = vadd.f32 %v74, %v866
  %v868 = vpop.f32.mrf.mxu0
  %869 = vmatprep.mubr.bf16.mxu0 0
  %870 = vmatmul.mubr.bf16.gmra.mxu0 %v758
  %v871 = vpop.f32.mrf.mxu0
  %v872 = vadd.f32 %v74, %v871
  %v873 = vpop.f32.mrf.mxu0
  %v874 = vpop.f32.mrf.mxu0
  %v875 = vadd.f32 %v74, %v874
  %v876 = vpop.f32.mrf.mxu0
  %877 = vmatprep.mubr.bf16.mxu0 0
  %878 = vmatmul.mubr.bf16.gmra.mxu0 %v761
  %v879 = vpop.f32.mrf.mxu0
  %v880 = vadd.f32 %v74, %v879
  %v881 = vpop.f32.mrf.mxu0
  %v882 = vpop.f32.mrf.mxu0
  %v883 = vadd.f32 %v74, %v882
  %v884 = vpop.f32.mrf.mxu0
  %885 = vmatprep.mubr.bf16.mxu0 0
  %886 = vmatmul.mubr.bf16.gmra.mxu0 %v764
  %v887 = vpop.f32.mrf.mxu0
  %v888 = vadd.f32 %v74, %v887
  %v889 = vpop.f32.mrf.mxu0
  %v890 = vpop.f32.mrf.mxu0
  %v891 = vadd.f32 %v74, %v890
  %v892 = vpop.f32.mrf.mxu0
  %893 = vmatprep.mubr.bf16.mxu0 0
  %894 = vmatmul.mubr.bf16.gmra.mxu0 %v767
  %v895 = vpop.f32.mrf.mxu0
  %v896 = vadd.f32 %v74, %v895
  %v897 = vpop.f32.mrf.mxu0
  %v898 = vpop.f32.mrf.mxu0
  %v899 = vadd.f32 %v74, %v898
  %v900 = vpop.f32.mrf.mxu0
  %901 = vmatprep.mubr.bf16.mxu0 0
  %902 = vmatmul.mubr.bf16.gmra.mxu0 %v770
  %v903 = vpop.f32.mrf.mxu0
  %v904 = vadd.f32 %v74, %v903
  %v905 = vpop.f32.mrf.mxu0
  %v906 = vpop.f32.mrf.mxu0
  %v907 = vadd.f32 %v74, %v906
  %v908 = vpop.f32.mrf.mxu0
  %909 = vmatprep.mubr.bf16.mxu0 0
  %910 = vmatmul.mubr.bf16.gmra.mxu0 %v773
  %v911 = vpop.f32.mrf.mxu0
  %v912 = vadd.f32 %v74, %v911
  %v913 = vpop.f32.mrf.mxu0
  %v914 = vpop.f32.mrf.mxu0
  %v915 = vadd.f32 %v74, %v914
  %v916 = vpop.f32.mrf.mxu0
  %917 = vmatprep.mubr.bf16.mxu0 0
  %918 = vmatmul.mubr.bf16.gmra.mxu0 %v776
  %v919 = vpop.f32.mrf.mxu0
  %v920 = vadd.f32 %v74, %v919
  %v921 = vpop.f32.mrf.mxu0
  %v922 = vpop.f32.mrf.mxu0
  %v923 = vadd.f32 %v74, %v922
  %v924 = vpop.f32.mrf.mxu0
  %925 = vmatprep.mubr.bf16.mxu0 0
  %926 = vmatmul.mubr.bf16.gmra.mxu0 %v779
  %v927 = vpop.f32.mrf.mxu0
  %v928 = vadd.f32 %v74, %v927
  %v929 = vpop.f32.mrf.mxu0
  %v930 = vpop.f32.mrf.mxu0
  %v931 = vadd.f32 %v74, %v930
  %v932 = vpop.f32.mrf.mxu0
  %933 = vmatprep.mubr.bf16.mxu0 0
  %934 = vmatmul.mubr.bf16.gmra.mxu0 %v782
  %v935 = vpop.f32.mrf.mxu0
  %v936 = vadd.f32 %v74, %v935
  %v937 = vpop.f32.mrf.mxu0
  %v938 = vpop.f32.mrf.mxu0
  %v939 = vadd.f32 %v74, %v938
  %v940 = vpop.f32.mrf.mxu0
  %941 = vmatprep.mubr.bf16.mxu0 0
  %942 = vmatmul.mubr.bf16.gmra.mxu0 %v785
  %v943 = vpop.f32.mrf.mxu0
  %v944 = vadd.f32 %v74, %v943
  %v945 = vpop.f32.mrf.mxu0
  %v946 = vpop.f32.mrf.mxu0
  %v947 = vadd.f32 %v74, %v946
  %v948 = vpop.f32.mrf.mxu0
  %949 = vmatprep.mubr.bf16.mxu0 0
  %950 = vmatmul.mubr.bf16.gmra.mxu0 %v788
  %v951 = vpop.f32.mrf.mxu0
  %v952 = vadd.f32 %v74, %v951
  %v953 = vpop.f32.mrf.mxu0
  %v954 = vpop.f32.mrf.mxu0
  %v955 = vadd.f32 %v74, %v954
  %v956 = vpop.f32.mrf.mxu0
  %957 = vmatprep.mubr.bf16.mxu0 0
  %958 = vmatmul.mubr.bf16.gmra.mxu0 %v791
  %v959 = vpop.f32.mrf.mxu0
  %v960 = vadd.f32 %v74, %v959
  %v961 = vpop.f32.mrf.mxu0
  %v962 = vpop.f32.mrf.mxu0
  %v963 = vadd.f32 %v74, %v962
  %v964 = vpop.f32.mrf.mxu0
  %965 = vmatprep.mubr.bf16.mxu0 0
  %966 = vmatmul.mubr.bf16.gmra.mxu0 %v794
  %v967 = vpop.f32.mrf.mxu0
  %v968 = vadd.f32 %v74, %v967
  %v969 = vpop.f32.mrf.mxu0
  %v970 = vpop.f32.mrf.mxu0
  %v971 = vadd.f32 %v74, %v970
  %v972 = vpop.f32.mrf.mxu0
  %973 = vmatprep.mubr.bf16.mxu0 0
  %974 = vmatmul.mubr.bf16.gmra.mxu0 %v797
  %v975 = vpop.f32.mrf.mxu0
  %v976 = vadd.f32 %v74, %v975
  %v977 = vpop.f32.mrf.mxu0
  %v978 = vpop.f32.mrf.mxu0
  %v979 = vadd.f32 %v74, %v978
  %v980 = vpop.f32.mrf.mxu0
  %981 = vmatprep.mubr.bf16.mxu0 0
  %982 = vmatmul.mubr.bf16.gmra.mxu0 %v800
  %v983 = vpop.f32.mrf.mxu0
  %v984 = vadd.f32 %v74, %v983
  %v985 = vpop.f32.mrf.mxu0
  %v986 = vpop.f32.mrf.mxu0
  %v987 = vadd.f32 %v74, %v986
  %v988 = vpop.f32.mrf.mxu0
  %989 = vmatprep.mubr.bf16.mxu0 0
  %990 = vmatmul.mubr.bf16.gmra.mxu0 %v803
  %v991 = vpop.f32.mrf.mxu0
  %v992 = vadd.f32 %v74, %v991
  %v993 = vpop.f32.mrf.mxu0
  %v994 = vpop.f32.mrf.mxu0
  %v995 = vadd.f32 %v74, %v994
  %v996 = vpop.f32.mrf.mxu0
  %997 = vmatprep.mubr.bf16.mxu0 0
  %998 = vmatmul.mubr.bf16.gmra.mxu0 %v806
  %v999 = vpop.f32.mrf.mxu0
  %v1000 = vadd.f32 %v74, %v999
  %v1001 = vpop.f32.mrf.mxu0
  %v1002 = vpop.f32.mrf.mxu0
  %v1003 = vadd.f32 %v74, %v1002
  %v1004 = vpop.f32.mrf.mxu0
  %1005 = vmatprep.mubr.bf16.mxu0 0
  %1006 = vmatmul.mubr.bf16.gmra.mxu0 %v809
  %v1007 = vpop.f32.mrf.mxu0
  %v1008 = vadd.f32 %v74, %v1007
  %v1009 = vpop.f32.mrf.mxu0
  %v1010 = vpop.f32.mrf.mxu0
  %v1011 = vadd.f32 %v74, %v1010
  %v1012 = vpop.f32.mrf.mxu0
  %1013 = vmatprep.mubr.bf16.mxu0 0
  %1014 = vmatmul.mubr.bf16.gmra.mxu0 %v812
  %v1015 = vpop.f32.mrf.mxu0
  %v1016 = vadd.f32 %v74, %v1015
  %v1017 = vpop.f32.mrf.mxu0
  %v1018 = vpop.f32.mrf.mxu0
  %v1019 = vadd.f32 %v74, %v1018
  %v1020 = vpop.f32.mrf.mxu0
  %1021 = vmatprep.mubr.bf16.mxu0 0
  %1022 = vmatmul.mubr.bf16.gmra.mxu0 %v815
  %v1023 = vpop.f32.mrf.mxu0
  %v1024 = vadd.f32 %v74, %v1023
  %v1025 = vpop.f32.mrf.mxu0
  %v1026 = vpop.f32.mrf.mxu0
  %v1027 = vadd.f32 %v74, %v1026
  %v1028 = vpop.f32.mrf.mxu0
  %1029 = vmatprep.mubr.bf16.mxu0 0
  %1030 = vmatmul.mubr.bf16.gmra.mxu0 %v818
  %v1031 = vpop.f32.mrf.mxu0
  %v1032 = vadd.f32 %v74, %v1031
  %v1033 = vpop.f32.mrf.mxu0
  %v1034 = vpop.f32.mrf.mxu0
  %v1035 = vadd.f32 %v74, %v1034
  %v1036 = vpop.f32.mrf.mxu0
  %1037 = vmatprep.mubr.bf16.mxu0 0
  %1038 = vmatmul.mubr.bf16.gmra.mxu0 %v821
  %v1039 = vpop.f32.mrf.mxu0
  %v1040 = vadd.f32 %v74, %v1039
  %v1041 = vpop.f32.mrf.mxu0
  %v1042 = vpop.f32.mrf.mxu0
  %v1043 = vadd.f32 %v74, %v1042
  %v1044 = vpop.f32.mrf.mxu0
  %1045 = vmatprep.mubr.bf16.mxu0 0
  %1046 = vmatmul.mubr.bf16.gmra.mxu0 %v824
  %v1047 = vpop.f32.mrf.mxu0
  %v1048 = vadd.f32 %v74, %v1047
  %v1049 = vpop.f32.mrf.mxu0
  %v1050 = vpop.f32.mrf.mxu0
  %v1051 = vadd.f32 %v74, %v1050
  %v1052 = vpop.f32.mrf.mxu0
  %1053 = vmatprep.mubr.bf16.mxu0 0
  %1054 = vmatmul.mubr.bf16.gmra.mxu0 %v827
  %v1055 = vpop.f32.mrf.mxu0
  %v1056 = vadd.f32 %v74, %v1055
  %v1057 = vpop.f32.mrf.mxu0
  %v1058 = vpop.f32.mrf.mxu0
  %v1059 = vadd.f32 %v74, %v1058
  %v1060 = vpop.f32.mrf.mxu0
  %1061 = vdwg.mxu0
  %v1062 = vmax.f32 %v864, 0.0
  %v1063 = vmax.f32 %v867, 0.0
  %v1064 = vmax.f32 %v872, 0.0
  %v1065 = vmax.f32 %v875, 0.0
  %v1066 = vmax.f32 %v880, 0.0
  %v1067 = vmax.f32 %v883, 0.0
  %v1068 = vmax.f32 %v888, 0.0
  %v1069 = vmax.f32 %v891, 0.0
  %v1070 = vmax.f32 %v896, 0.0
  %v1071 = vmax.f32 %v899, 0.0
  %v1072 = vmax.f32 %v904, 0.0
  %v1073 = vmax.f32 %v907, 0.0
  %v1074 = vmax.f32 %v912, 0.0
  %v1075 = vmax.f32 %v915, 0.0
  %v1076 = vmax.f32 %v920, 0.0
  %v1077 = vmax.f32 %v923, 0.0
  %v1078 = vmax.f32 %v928, 0.0
  %v1079 = vmax.f32 %v931, 0.0
  %v1080 = vmax.f32 %v936, 0.0
  %v1081 = vmax.f32 %v939, 0.0
  %v1082 = vmax.f32 %v944, 0.0
  %v1083 = vmax.f32 %v947, 0.0
  %v1084 = vmax.f32 %v952, 0.0
  %v1085 = vmax.f32 %v955, 0.0
  %v1086 = vmax.f32 %v960, 0.0
  %v1087 = vmax.f32 %v963, 0.0
  %v1088 = vmax.f32 %v968, 0.0
  %v1089 = vmax.f32 %v971, 0.0
  %v1090 = vmax.f32 %v976, 0.0
  %v1091 = vmax.f32 %v979, 0.0
  %v1092 = vmax.f32 %v984, 0.0
  %v1093 = vmax.f32 %v987, 0.0
  %v1094 = vmax.f32 %v992, 0.0
  %v1095 = vmax.f32 %v995, 0.0
  %v1096 = vmax.f32 %v1000, 0.0
  %v1097 = vmax.f32 %v1003, 0.0
  %v1098 = vmax.f32 %v1008, 0.0
  %v1099 = vmax.f32 %v1011, 0.0
  %v1100 = vmax.f32 %v1016, 0.0
  %v1101 = vmax.f32 %v1019, 0.0
  %v1102 = vmax.f32 %v1024, 0.0
  %v1103 = vmax.f32 %v1027, 0.0
  %v1104 = vmax.f32 %v1032, 0.0
  %v1105 = vmax.f32 %v1035, 0.0
  %v1106 = vmax.f32 %v1040, 0.0
  %v1107 = vmax.f32 %v1043, 0.0
  %v1108 = vmax.f32 %v1048, 0.0
  %v1109 = vmax.f32 %v1051, 0.0
  %v1110 = vmax.f32 %v1056, 0.0
  %v1111 = vmax.f32 %v1059, 0.0
  %v1112 = vmax.f32 %v528, %v1062
  %v1113 = vmax.f32 %v529, %v1063
  %v1114 = vmax.f32 %v530, %v1064
  %v1115 = vmax.f32 %v531, %v1065
  %v1116 = vmax.f32 %v532, %v1066
  %v1117 = vmax.f32 %v533, %v1067
  %v1118 = vmax.f32 %v534, %v1068
  %v1119 = vmax.f32 %v535, %v1069
  %v1120 = vmax.f32 %v536, %v1070
  %v1121 = vmax.f32 %v537, %v1071
  %v1122 = vmax.f32 %v538, %v1072
  %v1123 = vmax.f32 %v539, %v1073
  %v1124 = vmax.f32 %v540, %v1074
  %v1125 = vmax.f32 %v541, %v1075
  %v1126 = vmax.f32 %v542, %v1076
  %v1127 = vmax.f32 %v543, %v1077
  %v1128 = vmax.f32 %v544, %v1078
  %v1129 = vmax.f32 %v545, %v1079
  %v1130 = vmax.f32 %v546, %v1080
  %v1131 = vmax.f32 %v547, %v1081
  %v1132 = vmax.f32 %v548, %v1082
  %v1133 = vmax.f32 %v549, %v1083
  %v1134 = vmax.f32 %v550, %v1084
  %v1135 = vmax.f32 %v551, %v1085
  %v1136 = vmax.f32 %v552, %v1086
  %v1137 = vmax.f32 %v553, %v1087
  %v1138 = vmax.f32 %v554, %v1088
  %v1139 = vmax.f32 %v555, %v1089
  %v1140 = vmax.f32 %v556, %v1090
  %v1141 = vmax.f32 %v557, %v1091
  %v1142 = vmax.f32 %v558, %v1092
  %v1143 = vmax.f32 %v559, %v1093
  %v1144 = vmax.f32 %v560, %v1094
  %v1145 = vmax.f32 %v561, %v1095
  %v1146 = vmax.f32 %v562, %v1096
  %v1147 = vmax.f32 %v563, %v1097
  %v1148 = vmax.f32 %v564, %v1098
  %v1149 = vmax.f32 %v565, %v1099
  %v1150 = vmax.f32 %v566, %v1100
  %v1151 = vmax.f32 %v567, %v1101
  %v1152 = vmax.f32 %v568, %v1102
  %v1153 = vmax.f32 %v569, %v1103
  %v1154 = vmax.f32 %v570, %v1104
  %v1155 = vmax.f32 %v571, %v1105
  %v1156 = vmax.f32 %v572, %v1106
  %v1157 = vmax.f32 %v573, %v1107
  %v1158 = vmax.f32 %v574, %v1108
  %v1159 = vmax.f32 %v575, %v1109
  %v1160 = vmax.f32 %v576, %v1110
  %v1161 = vmax.f32 %v577, %v1111
  %s1162 = scalar_lea.vmem %s0, 400
  %v1163 = vld [vmem:[%s1162] sm:$0xf]
  %v1164 = vld [vmem:[%s1162 + $0x4] sm:$0xf]
  %v1165 = vld [vmem:[%s1162 + $0x8] sm:$0xf]
  %v1166 = vld [vmem:[%s1162 + $0xc] sm:$0xf]
  %v1167 = vld [vmem:[%s1162 + $0x10] sm:$0xf]
  %v1168 = vld [vmem:[%s1162 + $0x14] sm:$0xf]
  %v1169 = vld [vmem:[%s1162 + $0x18] sm:$0xf]
  %v1170 = vld [vmem:[%s1162 + $0x1c] sm:$0xf]
  %v1171 = vld [vmem:[%s1162 + $0x20] sm:$0xf]
  %v1172 = vld [vmem:[%s1162 + $0x24] sm:$0xf]
  %v1173 = vld [vmem:[%s1162 + $0x28] sm:$0xf]
  %v1174 = vld [vmem:[%s1162 + $0x2c] sm:$0xf]
  %v1175 = vld [vmem:[%s1162 + $0x30] sm:$0xf]
  %v1176 = vld [vmem:[%s1162 + $0x34] sm:$0xf]
  %v1177 = vld [vmem:[%s1162 + $0x38] sm:$0xf]
  %v1178 = vld [vmem:[%s1162 + $0x3c] sm:$0xf]
  %v1179 = vld [vmem:[%s1162 + $0x40] sm:$0xf]
  %v1180 = vld [vmem:[%s1162 + $0x44] sm:$0xf]
  %v1181 = vld [vmem:[%s1162 + $0x48] sm:$0xf]
  %v1182 = vld [vmem:[%s1162 + $0x4c] sm:$0xf]
  %v1183 = vld [vmem:[%s1162 + $0x50] sm:$0xf]
  %v1184 = vld [vmem:[%s1162 + $0x54] sm:$0xf]
  %v1185 = vld [vmem:[%s1162 + $0x58] sm:$0xf]
  %v1186 = vld [vmem:[%s1162 + $0x5c] sm:$0xf]
  %v1187 = vld [vmem:[%s1162 + $0x60] sm:$0xf]
  %v1188 = vld [vmem:[%s1162 + $0x64] sm:$0xf]
  %v1189 = vld [vmem:[%s1162 + $0x68] sm:$0xf]
  %v1190 = vld [vmem:[%s1162 + $0x6c] sm:$0xf]
  %v1191 = vld [vmem:[%s1162 + $0x70] sm:$0xf]
  %v1192 = vld [vmem:[%s1162 + $0x74] sm:$0xf]
  %v1193 = vld [vmem:[%s1162 + $0x78] sm:$0xf]
  %v1194 = vld [vmem:[%s1162 + $0x7c] sm:$0xf]
  %v1195 = vld [vmem:[%s1162 + $0x80] sm:$0xf]
  %v1196 = vld [vmem:[%s1162 + $0x84] sm:$0xf]
  %v1197 = vld [vmem:[%s1162 + $0x88] sm:$0xf]
  %v1198 = vld [vmem:[%s1162 + $0x8c] sm:$0xf]
  %v1199 = vld [vmem:[%s1162 + $0x90] sm:$0xf]
  %v1200 = vld [vmem:[%s1162 + $0x94] sm:$0xf]
  %v1201 = vld [vmem:[%s1162 + $0x98] sm:$0xf]
  %v1202 = vld [vmem:[%s1162 + $0x9c] sm:$0xf]
  %v1203 = vld [vmem:[%s1162 + $0xa0] sm:$0xf]
  %v1204 = vld [vmem:[%s1162 + $0xa4] sm:$0xf]
  %v1205 = vld [vmem:[%s1162 + $0xa8] sm:$0xf]
  %v1206 = vld [vmem:[%s1162 + $0xac] sm:$0xf]
  %v1207 = vld [vmem:[%s1162 + $0xb0] sm:$0xf]
  %v1208 = vld [vmem:[%s1162 + $0xb4] sm:$0xf]
  %v1209 = vld [vmem:[%s1162 + $0xb8] sm:$0xf]
  %v1210 = vld [vmem:[%s1162 + $0xbc] sm:$0xf]
  %v1211 = vld [vmem:[%s1162 + $0xc0] sm:$0xf]
  %v1212 = vld [vmem:[%s1162 + $0xc4] sm:$0xf]
  %v1263 = vunpack.c.l.b16 %v1163
  %v1264 = vunpack.c.l.b16 %v1164
  %v1265 = vunpack.c.l.b16 %v1165
  %v1266 = vunpack.c.l.b16 %v1166
  %v1267 = vunpack.c.l.b16 %v1167
  %v1268 = vunpack.c.l.b16 %v1168
  %v1269 = vunpack.c.l.b16 %v1169
  %v1270 = vunpack.c.l.b16 %v1170
  %v1271 = vunpack.c.l.b16 %v1171
  %v1272 = vunpack.c.l.b16 %v1172
  %v1273 = vunpack.c.l.b16 %v1173
  %v1274 = vunpack.c.l.b16 %v1174
  %v1275 = vunpack.c.l.b16 %v1175
  %v1276 = vunpack.c.l.b16 %v1176
  %v1277 = vunpack.c.l.b16 %v1177
  %v1278 = vunpack.c.l.b16 %v1178
  %v1279 = vunpack.c.l.b16 %v1179
  %v1280 = vunpack.c.l.b16 %v1180
  %v1281 = vunpack.c.l.b16 %v1181
  %v1282 = vunpack.c.l.b16 %v1182
  %v1283 = vunpack.c.l.b16 %v1183
  %v1284 = vunpack.c.l.b16 %v1184
  %v1285 = vunpack.c.l.b16 %v1185
  %v1286 = vunpack.c.l.b16 %v1186
  %v1287 = vunpack.c.l.b16 %v1187
  %v1288 = vunpack.c.l.b16 %v1188
  %v1289 = vunpack.c.l.b16 %v1189
  %v1290 = vunpack.c.l.b16 %v1190
  %v1291 = vunpack.c.l.b16 %v1191
  %v1292 = vunpack.c.l.b16 %v1192
  %v1293 = vunpack.c.l.b16 %v1193
  %v1294 = vunpack.c.l.b16 %v1194
  %v1295 = vunpack.c.l.b16 %v1195
  %v1296 = vunpack.c.l.b16 %v1196
  %v1297 = vunpack.c.l.b16 %v1197
  %v1298 = vunpack.c.l.b16 %v1198
  %v1299 = vunpack.c.l.b16 %v1199
  %v1300 = vunpack.c.l.b16 %v1200
  %v1301 = vunpack.c.l.b16 %v1201
  %v1302 = vunpack.c.l.b16 %v1202
  %v1303 = vunpack.c.l.b16 %v1203
  %v1304 = vunpack.c.l.b16 %v1204
  %v1305 = vunpack.c.l.b16 %v1205
  %v1306 = vunpack.c.l.b16 %v1206
  %v1307 = vunpack.c.l.b16 %v1207
  %v1308 = vunpack.c.l.b16 %v1208
  %v1309 = vunpack.c.l.b16 %v1209
  %v1310 = vunpack.c.l.b16 %v1210
  %v1311 = vunpack.c.l.b16 %v1211
  %v1312 = vunpack.c.l.b16 %v1212
  %v1313 = vpack.c.b16 %v1264, %v1263
  %v1314 = vpack.c.b16 %v1266, %v1265
  %v1315 = vpack.c.b16 %v1268, %v1267
  %v1316 = vpack.c.b16 %v1270, %v1269
  %v1317 = vpack.c.b16 %v1272, %v1271
  %v1318 = vpack.c.b16 %v1274, %v1273
  %v1319 = vpack.c.b16 %v1276, %v1275
  %v1320 = vpack.c.b16 %v1278, %v1277
  %v1321 = vpack.c.b16 %v1280, %v1279
  %v1322 = vpack.c.b16 %v1282, %v1281
  %v1323 = vpack.c.b16 %v1284, %v1283
  %v1324 = vpack.c.b16 %v1286, %v1285
  %v1325 = vpack.c.b16 %v1288, %v1287
  %v1326 = vpack.c.b16 %v1290, %v1289
  %v1327 = vpack.c.b16 %v1292, %v1291
  %v1328 = vpack.c.b16 %v1294, %v1293
  %v1329 = vpack.c.b16 %v1296, %v1295
  %v1330 = vpack.c.b16 %v1298, %v1297
  %v1331 = vpack.c.b16 %v1300, %v1299
  %v1332 = vpack.c.b16 %v1302, %v1301
  %v1333 = vpack.c.b16 %v1304, %v1303
  %v1334 = vpack.c.b16 %v1306, %v1305
  %v1335 = vpack.c.b16 %v1308, %v1307
  %v1336 = vpack.c.b16 %v1310, %v1309
  %v1337 = vpack.c.b16 %v1312, %v1311
  %v1339 = vsel %vm212, %v1313, 0
  %v1342 = vsel %vm212, %v1314, 0
  %v1345 = vsel %vm212, %v1315, 0
  %v1348 = vsel %vm212, %v1316, 0
  %v1351 = vsel %vm212, %v1317, 0
  %v1354 = vsel %vm212, %v1318, 0
  %v1357 = vsel %vm212, %v1319, 0
  %v1360 = vsel %vm212, %v1320, 0
  %v1363 = vsel %vm212, %v1321, 0
  %v1366 = vsel %vm212, %v1322, 0
  %v1369 = vsel %vm212, %v1323, 0
  %v1372 = vsel %vm212, %v1324, 0
  %v1375 = vsel %vm212, %v1325, 0
  %v1378 = vsel %vm212, %v1326, 0
  %v1381 = vsel %vm212, %v1327, 0
  %v1384 = vsel %vm212, %v1328, 0
  %v1387 = vsel %vm212, %v1329, 0
  %v1390 = vsel %vm212, %v1330, 0
  %v1393 = vsel %vm212, %v1331, 0
  %v1396 = vsel %vm212, %v1332, 0
  %v1399 = vsel %vm212, %v1333, 0
  %v1402 = vsel %vm212, %v1334, 0
  %v1405 = vsel %vm212, %v1335, 0
  %v1408 = vsel %vm212, %v1336, 0
  %v1411 = vsel %vm212, %v1337, 0
  %1413 = vmatprep.subr.bf16.mxu0 0
  %1414 = vmatpush1.bf16.msra.mxu0 0
  %1415 = vmatprep.subr.bf16.mxu0 0
  %1416 = vmatpush1.bf16.msra.mxu0 0
  %1417 = vmatprep.subr.bf16.mxu0 0
  %1418 = vmatpush1.bf16.msra.mxu0 0
  %1419 = vmatprep.subr.bf16.mxu0 0
  %1420 = vmatpush1.bf16.msra.mxu0 0
  %1421 = vmatprep.subr.bf16.mxu0 0
  %1422 = vmatpush1.bf16.msra.mxu0 0
  %1423 = vmatprep.subr.bf16.mxu0 0
  %1424 = vmatpush1.bf16.msra.mxu0 0
  %1425 = vmatprep.subr.bf16.mxu0 0
  %1426 = vmatpush1.bf16.msra.mxu0 %v293
  %1427 = vmatprep.subr.bf16.mxu0 0
  %1428 = vmatpush1.bf16.msra.mxu0 %v209
  %1429 = vmatprep.subr.bf16.mxu0 0
  %1430 = vmatpush2.bf16.msra.mxu0 0
  %1431 = vmatprep.subr.bf16.mxu0 0
  %1432 = vmatpush2.bf16.msra.mxu0 0
  %1433 = vmatprep.subr.bf16.mxu0 0
  %1434 = vmatpush2.bf16.msra.mxu0 0
  %1435 = vmatprep.subr.bf16.mxu0 0
  %1436 = vmatpush2.bf16.msra.mxu0 0
  %1437 = vmatprep.subr.bf16.mxu0 0
  %1438 = vmatpush2.bf16.msra.mxu0 0
  %1439 = vmatprep.subr.bf16.mxu0 0
  %1440 = vmatpush2.bf16.msra.mxu0 0
  %1441 = vmatprep.subr.bf16.mxu0 0
  %1442 = vmatpush2.bf16.msra.mxu0 0
  %1443 = vmatprep.subr.bf16.mxu0 0
  %1444 = vmatpush2.bf16.msra.mxu0 0
  %1445 = vmatprep.mubr.bf16.mxu0 0
  %1446 = vmatmul.mubr.bf16.gmra.mxu0 %v1339
  %v1447 = vpop.f32.mrf.mxu0
  %v1448 = vadd.f32 %v74, %v1447
  %v1449 = vpop.f32.mrf.mxu0
  %v1450 = vpop.f32.mrf.mxu0
  %v1451 = vadd.f32 %v74, %v1450
  %v1452 = vpop.f32.mrf.mxu0
  %1453 = vmatprep.mubr.bf16.mxu0 0
  %1454 = vmatmul.mubr.bf16.gmra.mxu0 %v1342
  %v1455 = vpop.f32.mrf.mxu0
  %v1456 = vadd.f32 %v74, %v1455
  %v1457 = vpop.f32.mrf.mxu0
  %v1458 = vpop.f32.mrf.mxu0
  %v1459 = vadd.f32 %v74, %v1458
  %v1460 = vpop.f32.mrf.mxu0
  %1461 = vmatprep.mubr.bf16.mxu0 0
  %1462 = vmatmul.mubr.bf16.gmra.mxu0 %v1345
  %v1463 = vpop.f32.mrf.mxu0
  %v1464 = vadd.f32 %v74, %v1463
  %v1465 = vpop.f32.mrf.mxu0
  %v1466 = vpop.f32.mrf.mxu0
  %v1467 = vadd.f32 %v74, %v1466
  %v1468 = vpop.f32.mrf.mxu0
  %1469 = vmatprep.mubr.bf16.mxu0 0
  %1470 = vmatmul.mubr.bf16.gmra.mxu0 %v1348
  %v1471 = vpop.f32.mrf.mxu0
  %v1472 = vadd.f32 %v74, %v1471
  %v1473 = vpop.f32.mrf.mxu0
  %v1474 = vpop.f32.mrf.mxu0
  %v1475 = vadd.f32 %v74, %v1474
  %v1476 = vpop.f32.mrf.mxu0
  %1477 = vmatprep.mubr.bf16.mxu0 0
  %1478 = vmatmul.mubr.bf16.gmra.mxu0 %v1351
  %v1479 = vpop.f32.mrf.mxu0
  %v1480 = vadd.f32 %v74, %v1479
  %v1481 = vpop.f32.mrf.mxu0
  %v1482 = vpop.f32.mrf.mxu0
  %v1483 = vadd.f32 %v74, %v1482
  %v1484 = vpop.f32.mrf.mxu0
  %1485 = vmatprep.mubr.bf16.mxu0 0
  %1486 = vmatmul.mubr.bf16.gmra.mxu0 %v1354
  %v1487 = vpop.f32.mrf.mxu0
  %v1488 = vadd.f32 %v74, %v1487
  %v1489 = vpop.f32.mrf.mxu0
  %v1490 = vpop.f32.mrf.mxu0
  %v1491 = vadd.f32 %v74, %v1490
  %v1492 = vpop.f32.mrf.mxu0
  %1493 = vmatprep.mubr.bf16.mxu0 0
  %1494 = vmatmul.mubr.bf16.gmra.mxu0 %v1357
  %v1495 = vpop.f32.mrf.mxu0
  %v1496 = vadd.f32 %v74, %v1495
  %v1497 = vpop.f32.mrf.mxu0
  %v1498 = vpop.f32.mrf.mxu0
  %v1499 = vadd.f32 %v74, %v1498
  %v1500 = vpop.f32.mrf.mxu0
  %1501 = vmatprep.mubr.bf16.mxu0 0
  %1502 = vmatmul.mubr.bf16.gmra.mxu0 %v1360
  %v1503 = vpop.f32.mrf.mxu0
  %v1504 = vadd.f32 %v74, %v1503
  %v1505 = vpop.f32.mrf.mxu0
  %v1506 = vpop.f32.mrf.mxu0
  %v1507 = vadd.f32 %v74, %v1506
  %v1508 = vpop.f32.mrf.mxu0
  %1509 = vmatprep.mubr.bf16.mxu0 0
  %1510 = vmatmul.mubr.bf16.gmra.mxu0 %v1363
  %v1511 = vpop.f32.mrf.mxu0
  %v1512 = vadd.f32 %v74, %v1511
  %v1513 = vpop.f32.mrf.mxu0
  %v1514 = vpop.f32.mrf.mxu0
  %v1515 = vadd.f32 %v74, %v1514
  %v1516 = vpop.f32.mrf.mxu0
  %1517 = vmatprep.mubr.bf16.mxu0 0
  %1518 = vmatmul.mubr.bf16.gmra.mxu0 %v1366
  %v1519 = vpop.f32.mrf.mxu0
  %v1520 = vadd.f32 %v74, %v1519
  %v1521 = vpop.f32.mrf.mxu0
  %v1522 = vpop.f32.mrf.mxu0
  %v1523 = vadd.f32 %v74, %v1522
  %v1524 = vpop.f32.mrf.mxu0
  %1525 = vmatprep.mubr.bf16.mxu0 0
  %1526 = vmatmul.mubr.bf16.gmra.mxu0 %v1369
  %v1527 = vpop.f32.mrf.mxu0
  %v1528 = vadd.f32 %v74, %v1527
  %v1529 = vpop.f32.mrf.mxu0
  %v1530 = vpop.f32.mrf.mxu0
  %v1531 = vadd.f32 %v74, %v1530
  %v1532 = vpop.f32.mrf.mxu0
  %1533 = vmatprep.mubr.bf16.mxu0 0
  %1534 = vmatmul.mubr.bf16.gmra.mxu0 %v1372
  %v1535 = vpop.f32.mrf.mxu0
  %v1536 = vadd.f32 %v74, %v1535
  %v1537 = vpop.f32.mrf.mxu0
  %v1538 = vpop.f32.mrf.mxu0
  %v1539 = vadd.f32 %v74, %v1538
  %v1540 = vpop.f32.mrf.mxu0
  %1541 = vmatprep.mubr.bf16.mxu0 0
  %1542 = vmatmul.mubr.bf16.gmra.mxu0 %v1375
  %v1543 = vpop.f32.mrf.mxu0
  %v1544 = vadd.f32 %v74, %v1543
  %v1545 = vpop.f32.mrf.mxu0
  %v1546 = vpop.f32.mrf.mxu0
  %v1547 = vadd.f32 %v74, %v1546
  %v1548 = vpop.f32.mrf.mxu0
  %1549 = vmatprep.mubr.bf16.mxu0 0
  %1550 = vmatmul.mubr.bf16.gmra.mxu0 %v1378
  %v1551 = vpop.f32.mrf.mxu0
  %v1552 = vadd.f32 %v74, %v1551
  %v1553 = vpop.f32.mrf.mxu0
  %v1554 = vpop.f32.mrf.mxu0
  %v1555 = vadd.f32 %v74, %v1554
  %v1556 = vpop.f32.mrf.mxu0
  %1557 = vmatprep.mubr.bf16.mxu0 0
  %1558 = vmatmul.mubr.bf16.gmra.mxu0 %v1381
  %v1559 = vpop.f32.mrf.mxu0
  %v1560 = vadd.f32 %v74, %v1559
  %v1561 = vpop.f32.mrf.mxu0
  %v1562 = vpop.f32.mrf.mxu0
  %v1563 = vadd.f32 %v74, %v1562
  %v1564 = vpop.f32.mrf.mxu0
  %1565 = vmatprep.mubr.bf16.mxu0 0
  %1566 = vmatmul.mubr.bf16.gmra.mxu0 %v1384
  %v1567 = vpop.f32.mrf.mxu0
  %v1568 = vadd.f32 %v74, %v1567
  %v1569 = vpop.f32.mrf.mxu0
  %v1570 = vpop.f32.mrf.mxu0
  %v1571 = vadd.f32 %v74, %v1570
  %v1572 = vpop.f32.mrf.mxu0
  %1573 = vmatprep.mubr.bf16.mxu0 0
  %1574 = vmatmul.mubr.bf16.gmra.mxu0 %v1387
  %v1575 = vpop.f32.mrf.mxu0
  %v1576 = vadd.f32 %v74, %v1575
  %v1577 = vpop.f32.mrf.mxu0
  %v1578 = vpop.f32.mrf.mxu0
  %v1579 = vadd.f32 %v74, %v1578
  %v1580 = vpop.f32.mrf.mxu0
  %1581 = vmatprep.mubr.bf16.mxu0 0
  %1582 = vmatmul.mubr.bf16.gmra.mxu0 %v1390
  %v1583 = vpop.f32.mrf.mxu0
  %v1584 = vadd.f32 %v74, %v1583
  %v1585 = vpop.f32.mrf.mxu0
  %v1586 = vpop.f32.mrf.mxu0
  %v1587 = vadd.f32 %v74, %v1586
  %v1588 = vpop.f32.mrf.mxu0
  %1589 = vmatprep.mubr.bf16.mxu0 0
  %1590 = vmatmul.mubr.bf16.gmra.mxu0 %v1393
  %v1591 = vpop.f32.mrf.mxu0
  %v1592 = vadd.f32 %v74, %v1591
  %v1593 = vpop.f32.mrf.mxu0
  %v1594 = vpop.f32.mrf.mxu0
  %v1595 = vadd.f32 %v74, %v1594
  %v1596 = vpop.f32.mrf.mxu0
  %1597 = vmatprep.mubr.bf16.mxu0 0
  %1598 = vmatmul.mubr.bf16.gmra.mxu0 %v1396
  %v1599 = vpop.f32.mrf.mxu0
  %v1600 = vadd.f32 %v74, %v1599
  %v1601 = vpop.f32.mrf.mxu0
  %v1602 = vpop.f32.mrf.mxu0
  %v1603 = vadd.f32 %v74, %v1602
  %v1604 = vpop.f32.mrf.mxu0
  %1605 = vmatprep.mubr.bf16.mxu0 0
  %1606 = vmatmul.mubr.bf16.gmra.mxu0 %v1399
  %v1607 = vpop.f32.mrf.mxu0
  %v1608 = vadd.f32 %v74, %v1607
  %v1609 = vpop.f32.mrf.mxu0
  %v1610 = vpop.f32.mrf.mxu0
  %v1611 = vadd.f32 %v74, %v1610
  %v1612 = vpop.f32.mrf.mxu0
  %1613 = vmatprep.mubr.bf16.mxu0 0
  %1614 = vmatmul.mubr.bf16.gmra.mxu0 %v1402
  %v1615 = vpop.f32.mrf.mxu0
  %v1616 = vadd.f32 %v74, %v1615
  %v1617 = vpop.f32.mrf.mxu0
  %v1618 = vpop.f32.mrf.mxu0
  %v1619 = vadd.f32 %v74, %v1618
  %v1620 = vpop.f32.mrf.mxu0
  %1621 = vmatprep.mubr.bf16.mxu0 0
  %1622 = vmatmul.mubr.bf16.gmra.mxu0 %v1405
  %v1623 = vpop.f32.mrf.mxu0
  %v1624 = vadd.f32 %v74, %v1623
  %v1625 = vpop.f32.mrf.mxu0
  %v1626 = vpop.f32.mrf.mxu0
  %v1627 = vadd.f32 %v74, %v1626
  %v1628 = vpop.f32.mrf.mxu0
  %1629 = vmatprep.mubr.bf16.mxu0 0
  %1630 = vmatmul.mubr.bf16.gmra.mxu0 %v1408
  %v1631 = vpop.f32.mrf.mxu0
  %v1632 = vadd.f32 %v74, %v1631
  %v1633 = vpop.f32.mrf.mxu0
  %v1634 = vpop.f32.mrf.mxu0
  %v1635 = vadd.f32 %v74, %v1634
  %v1636 = vpop.f32.mrf.mxu0
  %1637 = vmatprep.mubr.bf16.mxu0 0
  %1638 = vmatmul.mubr.bf16.gmra.mxu0 %v1411
  %v1639 = vpop.f32.mrf.mxu0
  %v1640 = vadd.f32 %v74, %v1639
  %v1641 = vpop.f32.mrf.mxu0
  %v1642 = vpop.f32.mrf.mxu0
  %v1643 = vadd.f32 %v74, %v1642
  %v1644 = vpop.f32.mrf.mxu0
  %1645 = vdwg.mxu0
  %v1646 = vmax.f32 %v1448, 0.0
  %v1647 = vmax.f32 %v1451, 0.0
  %v1648 = vmax.f32 %v1456, 0.0
  %v1649 = vmax.f32 %v1459, 0.0
  %v1650 = vmax.f32 %v1464, 0.0
  %v1651 = vmax.f32 %v1467, 0.0
  %v1652 = vmax.f32 %v1472, 0.0
  %v1653 = vmax.f32 %v1475, 0.0
  %v1654 = vmax.f32 %v1480, 0.0
  %v1655 = vmax.f32 %v1483, 0.0
  %v1656 = vmax.f32 %v1488, 0.0
  %v1657 = vmax.f32 %v1491, 0.0
  %v1658 = vmax.f32 %v1496, 0.0
  %v1659 = vmax.f32 %v1499, 0.0
  %v1660 = vmax.f32 %v1504, 0.0
  %v1661 = vmax.f32 %v1507, 0.0
  %v1662 = vmax.f32 %v1512, 0.0
  %v1663 = vmax.f32 %v1515, 0.0
  %v1664 = vmax.f32 %v1520, 0.0
  %v1665 = vmax.f32 %v1523, 0.0
  %v1666 = vmax.f32 %v1528, 0.0
  %v1667 = vmax.f32 %v1531, 0.0
  %v1668 = vmax.f32 %v1536, 0.0
  %v1669 = vmax.f32 %v1539, 0.0
  %v1670 = vmax.f32 %v1544, 0.0
  %v1671 = vmax.f32 %v1547, 0.0
  %v1672 = vmax.f32 %v1552, 0.0
  %v1673 = vmax.f32 %v1555, 0.0
  %v1674 = vmax.f32 %v1560, 0.0
  %v1675 = vmax.f32 %v1563, 0.0
  %v1676 = vmax.f32 %v1568, 0.0
  %v1677 = vmax.f32 %v1571, 0.0
  %v1678 = vmax.f32 %v1576, 0.0
  %v1679 = vmax.f32 %v1579, 0.0
  %v1680 = vmax.f32 %v1584, 0.0
  %v1681 = vmax.f32 %v1587, 0.0
  %v1682 = vmax.f32 %v1592, 0.0
  %v1683 = vmax.f32 %v1595, 0.0
  %v1684 = vmax.f32 %v1600, 0.0
  %v1685 = vmax.f32 %v1603, 0.0
  %v1686 = vmax.f32 %v1608, 0.0
  %v1687 = vmax.f32 %v1611, 0.0
  %v1688 = vmax.f32 %v1616, 0.0
  %v1689 = vmax.f32 %v1619, 0.0
  %v1690 = vmax.f32 %v1624, 0.0
  %v1691 = vmax.f32 %v1627, 0.0
  %v1692 = vmax.f32 %v1632, 0.0
  %v1693 = vmax.f32 %v1635, 0.0
  %v1694 = vmax.f32 %v1640, 0.0
  %v1695 = vmax.f32 %v1643, 0.0
  %v1696 = vmax.f32 %v1112, %v1646
  %v1697 = vmax.f32 %v1113, %v1647
  %v1698 = vmax.f32 %v1114, %v1648
  %v1699 = vmax.f32 %v1115, %v1649
  %v1700 = vmax.f32 %v1116, %v1650
  %v1701 = vmax.f32 %v1117, %v1651
  %v1702 = vmax.f32 %v1118, %v1652
  %v1703 = vmax.f32 %v1119, %v1653
  %v1704 = vmax.f32 %v1120, %v1654
  %v1705 = vmax.f32 %v1121, %v1655
  %v1706 = vmax.f32 %v1122, %v1656
  %v1707 = vmax.f32 %v1123, %v1657
  %v1708 = vmax.f32 %v1124, %v1658
  %v1709 = vmax.f32 %v1125, %v1659
  %v1710 = vmax.f32 %v1126, %v1660
  %v1711 = vmax.f32 %v1127, %v1661
  %v1712 = vmax.f32 %v1128, %v1662
  %v1713 = vmax.f32 %v1129, %v1663
  %v1714 = vmax.f32 %v1130, %v1664
  %v1715 = vmax.f32 %v1131, %v1665
  %v1716 = vmax.f32 %v1132, %v1666
  %v1717 = vmax.f32 %v1133, %v1667
  %v1718 = vmax.f32 %v1134, %v1668
  %v1719 = vmax.f32 %v1135, %v1669
  %v1720 = vmax.f32 %v1136, %v1670
  %v1721 = vmax.f32 %v1137, %v1671
  %v1722 = vmax.f32 %v1138, %v1672
  %v1723 = vmax.f32 %v1139, %v1673
  %v1724 = vmax.f32 %v1140, %v1674
  %v1725 = vmax.f32 %v1141, %v1675
  %v1726 = vmax.f32 %v1142, %v1676
  %v1727 = vmax.f32 %v1143, %v1677
  %v1728 = vmax.f32 %v1144, %v1678
  %v1729 = vmax.f32 %v1145, %v1679
  %v1730 = vmax.f32 %v1146, %v1680
  %v1731 = vmax.f32 %v1147, %v1681
  %v1732 = vmax.f32 %v1148, %v1682
  %v1733 = vmax.f32 %v1149, %v1683
  %v1734 = vmax.f32 %v1150, %v1684
  %v1735 = vmax.f32 %v1151, %v1685
  %v1736 = vmax.f32 %v1152, %v1686
  %v1737 = vmax.f32 %v1153, %v1687
  %v1738 = vmax.f32 %v1154, %v1688
  %v1739 = vmax.f32 %v1155, %v1689
  %v1740 = vmax.f32 %v1156, %v1690
  %v1741 = vmax.f32 %v1157, %v1691
  %v1742 = vmax.f32 %v1158, %v1692
  %v1743 = vmax.f32 %v1159, %v1693
  %v1744 = vmax.f32 %v1160, %v1694
  %v1745 = vmax.f32 %v1161, %v1695
  %s1746 = scalar_lea.vmem %s0, 600
  %v1747 = vld [vmem:[%s1746] sm:$0xf]
  %v1748 = vld [vmem:[%s1746 + $0x4] sm:$0xf]
  %v1749 = vld [vmem:[%s1746 + $0x8] sm:$0xf]
  %v1750 = vld [vmem:[%s1746 + $0xc] sm:$0xf]
  %v1751 = vld [vmem:[%s1746 + $0x10] sm:$0xf]
  %v1752 = vld [vmem:[%s1746 + $0x14] sm:$0xf]
  %v1753 = vld [vmem:[%s1746 + $0x18] sm:$0xf]
  %v1754 = vld [vmem:[%s1746 + $0x1c] sm:$0xf]
  %v1755 = vld [vmem:[%s1746 + $0x20] sm:$0xf]
  %v1756 = vld [vmem:[%s1746 + $0x24] sm:$0xf]
  %v1757 = vld [vmem:[%s1746 + $0x28] sm:$0xf]
  %v1758 = vld [vmem:[%s1746 + $0x2c] sm:$0xf]
  %v1759 = vld [vmem:[%s1746 + $0x30] sm:$0xf]
  %v1760 = vld [vmem:[%s1746 + $0x34] sm:$0xf]
  %v1761 = vld [vmem:[%s1746 + $0x38] sm:$0xf]
  %v1762 = vld [vmem:[%s1746 + $0x3c] sm:$0xf]
  %v1763 = vld [vmem:[%s1746 + $0x40] sm:$0xf]
  %v1764 = vld [vmem:[%s1746 + $0x44] sm:$0xf]
  %v1765 = vld [vmem:[%s1746 + $0x48] sm:$0xf]
  %v1766 = vld [vmem:[%s1746 + $0x4c] sm:$0xf]
  %v1767 = vld [vmem:[%s1746 + $0x50] sm:$0xf]
  %v1768 = vld [vmem:[%s1746 + $0x54] sm:$0xf]
  %v1769 = vld [vmem:[%s1746 + $0x58] sm:$0xf]
  %v1770 = vld [vmem:[%s1746 + $0x5c] sm:$0xf]
  %v1771 = vld [vmem:[%s1746 + $0x60] sm:$0xf]
  %v1772 = vld [vmem:[%s1746 + $0x64] sm:$0xf]
  %v1773 = vld [vmem:[%s1746 + $0x68] sm:$0xf]
  %v1774 = vld [vmem:[%s1746 + $0x6c] sm:$0xf]
  %v1775 = vld [vmem:[%s1746 + $0x70] sm:$0xf]
  %v1776 = vld [vmem:[%s1746 + $0x74] sm:$0xf]
  %v1777 = vld [vmem:[%s1746 + $0x78] sm:$0xf]
  %v1778 = vld [vmem:[%s1746 + $0x7c] sm:$0xf]
  %v1779 = vld [vmem:[%s1746 + $0x80] sm:$0xf]
  %v1780 = vld [vmem:[%s1746 + $0x84] sm:$0xf]
  %v1781 = vld [vmem:[%s1746 + $0x88] sm:$0xf]
  %v1782 = vld [vmem:[%s1746 + $0x8c] sm:$0xf]
  %v1783 = vld [vmem:[%s1746 + $0x90] sm:$0xf]
  %v1784 = vld [vmem:[%s1746 + $0x94] sm:$0xf]
  %v1785 = vld [vmem:[%s1746 + $0x98] sm:$0xf]
  %v1786 = vld [vmem:[%s1746 + $0x9c] sm:$0xf]
  %v1787 = vld [vmem:[%s1746 + $0xa0] sm:$0xf]
  %v1788 = vld [vmem:[%s1746 + $0xa4] sm:$0xf]
  %v1789 = vld [vmem:[%s1746 + $0xa8] sm:$0xf]
  %v1790 = vld [vmem:[%s1746 + $0xac] sm:$0xf]
  %v1791 = vld [vmem:[%s1746 + $0xb0] sm:$0xf]
  %v1792 = vld [vmem:[%s1746 + $0xb4] sm:$0xf]
  %v1793 = vld [vmem:[%s1746 + $0xb8] sm:$0xf]
  %v1794 = vld [vmem:[%s1746 + $0xbc] sm:$0xf]
  %v1795 = vld [vmem:[%s1746 + $0xc0] sm:$0xf]
  %v1796 = vld [vmem:[%s1746 + $0xc4] sm:$0xf]
  %v1847 = vunpack.c.l.b16 %v1747
  %v1848 = vunpack.c.l.b16 %v1748
  %v1849 = vunpack.c.l.b16 %v1749
  %v1850 = vunpack.c.l.b16 %v1750
  %v1851 = vunpack.c.l.b16 %v1751
  %v1852 = vunpack.c.l.b16 %v1752
  %v1853 = vunpack.c.l.b16 %v1753
  %v1854 = vunpack.c.l.b16 %v1754
  %v1855 = vunpack.c.l.b16 %v1755
  %v1856 = vunpack.c.l.b16 %v1756
  %v1857 = vunpack.c.l.b16 %v1757
  %v1858 = vunpack.c.l.b16 %v1758
  %v1859 = vunpack.c.l.b16 %v1759
  %v1860 = vunpack.c.l.b16 %v1760
  %v1861 = vunpack.c.l.b16 %v1761
  %v1862 = vunpack.c.l.b16 %v1762
  %v1863 = vunpack.c.l.b16 %v1763
  %v1864 = vunpack.c.l.b16 %v1764
  %v1865 = vunpack.c.l.b16 %v1765
  %v1866 = vunpack.c.l.b16 %v1766
  %v1867 = vunpack.c.l.b16 %v1767
  %v1868 = vunpack.c.l.b16 %v1768
  %v1869 = vunpack.c.l.b16 %v1769
  %v1870 = vunpack.c.l.b16 %v1770
  %v1871 = vunpack.c.l.b16 %v1771
  %v1872 = vunpack.c.l.b16 %v1772
  %v1873 = vunpack.c.l.b16 %v1773
  %v1874 = vunpack.c.l.b16 %v1774
  %v1875 = vunpack.c.l.b16 %v1775
  %v1876 = vunpack.c.l.b16 %v1776
  %v1877 = vunpack.c.l.b16 %v1777
  %v1878 = vunpack.c.l.b16 %v1778
  %v1879 = vunpack.c.l.b16 %v1779
  %v1880 = vunpack.c.l.b16 %v1780
  %v1881 = vunpack.c.l.b16 %v1781
  %v1882 = vunpack.c.l.b16 %v1782
  %v1883 = vunpack.c.l.b16 %v1783
  %v1884 = vunpack.c.l.b16 %v1784
  %v1885 = vunpack.c.l.b16 %v1785
  %v1886 = vunpack.c.l.b16 %v1786
  %v1887 = vunpack.c.l.b16 %v1787
  %v1888 = vunpack.c.l.b16 %v1788
  %v1889 = vunpack.c.l.b16 %v1789
  %v1890 = vunpack.c.l.b16 %v1790
  %v1891 = vunpack.c.l.b16 %v1791
  %v1892 = vunpack.c.l.b16 %v1792
  %v1893 = vunpack.c.l.b16 %v1793
  %v1894 = vunpack.c.l.b16 %v1794
  %v1895 = vunpack.c.l.b16 %v1795
  %v1896 = vunpack.c.l.b16 %v1796
  %v1897 = vpack.c.b16 %v1848, %v1847
  %v1898 = vpack.c.b16 %v1850, %v1849
  %v1899 = vpack.c.b16 %v1852, %v1851
  %v1900 = vpack.c.b16 %v1854, %v1853
  %v1901 = vpack.c.b16 %v1856, %v1855
  %v1902 = vpack.c.b16 %v1858, %v1857
  %v1903 = vpack.c.b16 %v1860, %v1859
  %v1904 = vpack.c.b16 %v1862, %v1861
  %v1905 = vpack.c.b16 %v1864, %v1863
  %v1906 = vpack.c.b16 %v1866, %v1865
  %v1907 = vpack.c.b16 %v1868, %v1867
  %v1908 = vpack.c.b16 %v1870, %v1869
  %v1909 = vpack.c.b16 %v1872, %v1871
  %v1910 = vpack.c.b16 %v1874, %v1873
  %v1911 = vpack.c.b16 %v1876, %v1875
  %v1912 = vpack.c.b16 %v1878, %v1877
  %v1913 = vpack.c.b16 %v1880, %v1879
  %v1914 = vpack.c.b16 %v1882, %v1881
  %v1915 = vpack.c.b16 %v1884, %v1883
  %v1916 = vpack.c.b16 %v1886, %v1885
  %v1917 = vpack.c.b16 %v1888, %v1887
  %v1918 = vpack.c.b16 %v1890, %v1889
  %v1919 = vpack.c.b16 %v1892, %v1891
  %v1920 = vpack.c.b16 %v1894, %v1893
  %v1921 = vpack.c.b16 %v1896, %v1895
  %v1923 = vsel %vm212, %v1897, 0
  %v1926 = vsel %vm212, %v1898, 0
  %v1929 = vsel %vm212, %v1899, 0
  %v1932 = vsel %vm212, %v1900, 0
  %v1935 = vsel %vm212, %v1901, 0
  %v1938 = vsel %vm212, %v1902, 0
  %v1941 = vsel %vm212, %v1903, 0
  %v1944 = vsel %vm212, %v1904, 0
  %v1947 = vsel %vm212, %v1905, 0
  %v1950 = vsel %vm212, %v1906, 0
  %v1953 = vsel %vm212, %v1907, 0
  %v1956 = vsel %vm212, %v1908, 0
  %v1959 = vsel %vm212, %v1909, 0
  %v1962 = vsel %vm212, %v1910, 0
  %v1965 = vsel %vm212, %v1911, 0
  %v1968 = vsel %vm212, %v1912, 0
  %v1971 = vsel %vm212, %v1913, 0
  %v1974 = vsel %vm212, %v1914, 0
  %v1977 = vsel %vm212, %v1915, 0
  %v1980 = vsel %vm212, %v1916, 0
  %v1983 = vsel %vm212, %v1917, 0
  %v1986 = vsel %vm212, %v1918, 0
  %v1989 = vsel %vm212, %v1919, 0
  %v1992 = vsel %vm212, %v1920, 0
  %v1995 = vsel %vm212, %v1921, 0
  %1997 = vmatprep.subr.bf16.mxu0 0
  %1998 = vmatpush1.bf16.msra.mxu0 0
  %1999 = vmatprep.subr.bf16.mxu0 0
  %2000 = vmatpush1.bf16.msra.mxu0 0
  %2001 = vmatprep.subr.bf16.mxu0 0
  %2002 = vmatpush1.bf16.msra.mxu0 0
  %2003 = vmatprep.subr.bf16.mxu0 0
  %2004 = vmatpush1.bf16.msra.mxu0 0
  %2005 = vmatprep.subr.bf16.mxu0 0
  %2006 = vmatpush1.bf16.msra.mxu0 0
  %2007 = vmatprep.subr.bf16.mxu0 0
  %2008 = vmatpush1.bf16.msra.mxu0 0
  %2009 = vmatprep.subr.bf16.mxu0 0
  %2010 = vmatpush1.bf16.msra.mxu0 %v293
  %2011 = vmatprep.subr.bf16.mxu0 0
  %2012 = vmatpush1.bf16.msra.mxu0 %v209
  %2013 = vmatprep.subr.bf16.mxu0 0
  %2014 = vmatpush2.bf16.msra.mxu0 0
  %2015 = vmatprep.subr.bf16.mxu0 0
  %2016 = vmatpush2.bf16.msra.mxu0 0
  %2017 = vmatprep.subr.bf16.mxu0 0
  %2018 = vmatpush2.bf16.msra.mxu0 0
  %2019 = vmatprep.subr.bf16.mxu0 0
  %2020 = vmatpush2.bf16.msra.mxu0 0
  %2021 = vmatprep.subr.bf16.mxu0 0
  %2022 = vmatpush2.bf16.msra.mxu0 0
  %2023 = vmatprep.subr.bf16.mxu0 0
  %2024 = vmatpush2.bf16.msra.mxu0 0
  %2025 = vmatprep.subr.bf16.mxu0 0
  %2026 = vmatpush2.bf16.msra.mxu0 0
  %2027 = vmatprep.subr.bf16.mxu0 0
  %2028 = vmatpush2.bf16.msra.mxu0 0
  %2029 = vmatprep.mubr.bf16.mxu0 0
  %2030 = vmatmul.mubr.bf16.gmra.mxu0 %v1923
  %v2031 = vpop.f32.mrf.mxu0
  %v2032 = vadd.f32 %v74, %v2031
  %v2033 = vpop.f32.mrf.mxu0
  %v2034 = vpop.f32.mrf.mxu0
  %v2035 = vadd.f32 %v74, %v2034
  %v2036 = vpop.f32.mrf.mxu0
  %2037 = vmatprep.mubr.bf16.mxu0 0
  %2038 = vmatmul.mubr.bf16.gmra.mxu0 %v1926
  %v2039 = vpop.f32.mrf.mxu0
  %v2040 = vadd.f32 %v74, %v2039
  %v2041 = vpop.f32.mrf.mxu0
  %v2042 = vpop.f32.mrf.mxu0
  %v2043 = vadd.f32 %v74, %v2042
  %v2044 = vpop.f32.mrf.mxu0
  %2045 = vmatprep.mubr.bf16.mxu0 0
  %2046 = vmatmul.mubr.bf16.gmra.mxu0 %v1929
  %v2047 = vpop.f32.mrf.mxu0
  %v2048 = vadd.f32 %v74, %v2047
  %v2049 = vpop.f32.mrf.mxu0
  %v2050 = vpop.f32.mrf.mxu0
  %v2051 = vadd.f32 %v74, %v2050
  %v2052 = vpop.f32.mrf.mxu0
  %2053 = vmatprep.mubr.bf16.mxu0 0
  %2054 = vmatmul.mubr.bf16.gmra.mxu0 %v1932
  %v2055 = vpop.f32.mrf.mxu0
  %v2056 = vadd.f32 %v74, %v2055
  %v2057 = vpop.f32.mrf.mxu0
  %v2058 = vpop.f32.mrf.mxu0
  %v2059 = vadd.f32 %v74, %v2058
  %v2060 = vpop.f32.mrf.mxu0
  %2061 = vmatprep.mubr.bf16.mxu0 0
  %2062 = vmatmul.mubr.bf16.gmra.mxu0 %v1935
  %v2063 = vpop.f32.mrf.mxu0
  %v2064 = vadd.f32 %v74, %v2063
  %v2065 = vpop.f32.mrf.mxu0
  %v2066 = vpop.f32.mrf.mxu0
  %v2067 = vadd.f32 %v74, %v2066
  %v2068 = vpop.f32.mrf.mxu0
  %2069 = vmatprep.mubr.bf16.mxu0 0
  %2070 = vmatmul.mubr.bf16.gmra.mxu0 %v1938
  %v2071 = vpop.f32.mrf.mxu0
  %v2072 = vadd.f32 %v74, %v2071
  %v2073 = vpop.f32.mrf.mxu0
  %v2074 = vpop.f32.mrf.mxu0
  %v2075 = vadd.f32 %v74, %v2074
  %v2076 = vpop.f32.mrf.mxu0
  %2077 = vmatprep.mubr.bf16.mxu0 0
  %2078 = vmatmul.mubr.bf16.gmra.mxu0 %v1941
  %v2079 = vpop.f32.mrf.mxu0
  %v2080 = vadd.f32 %v74, %v2079
  %v2081 = vpop.f32.mrf.mxu0
  %v2082 = vpop.f32.mrf.mxu0
  %v2083 = vadd.f32 %v74, %v2082
  %v2084 = vpop.f32.mrf.mxu0
  %2085 = vmatprep.mubr.bf16.mxu0 0
  %2086 = vmatmul.mubr.bf16.gmra.mxu0 %v1944
  %v2087 = vpop.f32.mrf.mxu0
  %v2088 = vadd.f32 %v74, %v2087
  %v2089 = vpop.f32.mrf.mxu0
  %v2090 = vpop.f32.mrf.mxu0
  %v2091 = vadd.f32 %v74, %v2090
  %v2092 = vpop.f32.mrf.mxu0
  %2093 = vmatprep.mubr.bf16.mxu0 0
  %2094 = vmatmul.mubr.bf16.gmra.mxu0 %v1947
  %v2095 = vpop.f32.mrf.mxu0
  %v2096 = vadd.f32 %v74, %v2095
  %v2097 = vpop.f32.mrf.mxu0
  %v2098 = vpop.f32.mrf.mxu0
  %v2099 = vadd.f32 %v74, %v2098
  %v2100 = vpop.f32.mrf.mxu0
  %2101 = vmatprep.mubr.bf16.mxu0 0
  %2102 = vmatmul.mubr.bf16.gmra.mxu0 %v1950
  %v2103 = vpop.f32.mrf.mxu0
  %v2104 = vadd.f32 %v74, %v2103
  %v2105 = vpop.f32.mrf.mxu0
  %v2106 = vpop.f32.mrf.mxu0
  %v2107 = vadd.f32 %v74, %v2106
  %v2108 = vpop.f32.mrf.mxu0
  %2109 = vmatprep.mubr.bf16.mxu0 0
  %2110 = vmatmul.mubr.bf16.gmra.mxu0 %v1953
  %v2111 = vpop.f32.mrf.mxu0
  %v2112 = vadd.f32 %v74, %v2111
  %v2113 = vpop.f32.mrf.mxu0
  %v2114 = vpop.f32.mrf.mxu0
  %v2115 = vadd.f32 %v74, %v2114
  %v2116 = vpop.f32.mrf.mxu0
  %2117 = vmatprep.mubr.bf16.mxu0 0
  %2118 = vmatmul.mubr.bf16.gmra.mxu0 %v1956
  %v2119 = vpop.f32.mrf.mxu0
  %v2120 = vadd.f32 %v74, %v2119
  %v2121 = vpop.f32.mrf.mxu0
  %v2122 = vpop.f32.mrf.mxu0
  %v2123 = vadd.f32 %v74, %v2122
  %v2124 = vpop.f32.mrf.mxu0
  %2125 = vmatprep.mubr.bf16.mxu0 0
  %2126 = vmatmul.mubr.bf16.gmra.mxu0 %v1959
  %v2127 = vpop.f32.mrf.mxu0
  %v2128 = vadd.f32 %v74, %v2127
  %v2129 = vpop.f32.mrf.mxu0
  %v2130 = vpop.f32.mrf.mxu0
  %v2131 = vadd.f32 %v74, %v2130
  %v2132 = vpop.f32.mrf.mxu0
  %2133 = vmatprep.mubr.bf16.mxu0 0
  %2134 = vmatmul.mubr.bf16.gmra.mxu0 %v1962
  %v2135 = vpop.f32.mrf.mxu0
  %v2136 = vadd.f32 %v74, %v2135
  %v2137 = vpop.f32.mrf.mxu0
  %v2138 = vpop.f32.mrf.mxu0
  %v2139 = vadd.f32 %v74, %v2138
  %v2140 = vpop.f32.mrf.mxu0
  %2141 = vmatprep.mubr.bf16.mxu0 0
  %2142 = vmatmul.mubr.bf16.gmra.mxu0 %v1965
  %v2143 = vpop.f32.mrf.mxu0
  %v2144 = vadd.f32 %v74, %v2143
  %v2145 = vpop.f32.mrf.mxu0
  %v2146 = vpop.f32.mrf.mxu0
  %v2147 = vadd.f32 %v74, %v2146
  %v2148 = vpop.f32.mrf.mxu0
  %2149 = vmatprep.mubr.bf16.mxu0 0
  %2150 = vmatmul.mubr.bf16.gmra.mxu0 %v1968
  %v2151 = vpop.f32.mrf.mxu0
  %v2152 = vadd.f32 %v74, %v2151
  %v2153 = vpop.f32.mrf.mxu0
  %v2154 = vpop.f32.mrf.mxu0
  %v2155 = vadd.f32 %v74, %v2154
  %v2156 = vpop.f32.mrf.mxu0
  %2157 = vmatprep.mubr.bf16.mxu0 0
  %2158 = vmatmul.mubr.bf16.gmra.mxu0 %v1971
  %v2159 = vpop.f32.mrf.mxu0
  %v2160 = vadd.f32 %v74, %v2159
  %v2161 = vpop.f32.mrf.mxu0
  %v2162 = vpop.f32.mrf.mxu0
  %v2163 = vadd.f32 %v74, %v2162
  %v2164 = vpop.f32.mrf.mxu0
  %2165 = vmatprep.mubr.bf16.mxu0 0
  %2166 = vmatmul.mubr.bf16.gmra.mxu0 %v1974
  %v2167 = vpop.f32.mrf.mxu0
  %v2168 = vadd.f32 %v74, %v2167
  %v2169 = vpop.f32.mrf.mxu0
  %v2170 = vpop.f32.mrf.mxu0
  %v2171 = vadd.f32 %v74, %v2170
  %v2172 = vpop.f32.mrf.mxu0
  %2173 = vmatprep.mubr.bf16.mxu0 0
  %2174 = vmatmul.mubr.bf16.gmra.mxu0 %v1977
  %v2175 = vpop.f32.mrf.mxu0
  %v2176 = vadd.f32 %v74, %v2175
  %v2177 = vpop.f32.mrf.mxu0
  %v2178 = vpop.f32.mrf.mxu0
  %v2179 = vadd.f32 %v74, %v2178
  %v2180 = vpop.f32.mrf.mxu0
  %2181 = vmatprep.mubr.bf16.mxu0 0
  %2182 = vmatmul.mubr.bf16.gmra.mxu0 %v1980
  %v2183 = vpop.f32.mrf.mxu0
  %v2184 = vadd.f32 %v74, %v2183
  %v2185 = vpop.f32.mrf.mxu0
  %v2186 = vpop.f32.mrf.mxu0
  %v2187 = vadd.f32 %v74, %v2186
  %v2188 = vpop.f32.mrf.mxu0
  %2189 = vmatprep.mubr.bf16.mxu0 0
  %2190 = vmatmul.mubr.bf16.gmra.mxu0 %v1983
  %v2191 = vpop.f32.mrf.mxu0
  %v2192 = vadd.f32 %v74, %v2191
  %v2193 = vpop.f32.mrf.mxu0
  %v2194 = vpop.f32.mrf.mxu0
  %v2195 = vadd.f32 %v74, %v2194
  %v2196 = vpop.f32.mrf.mxu0
  %2197 = vmatprep.mubr.bf16.mxu0 0
  %2198 = vmatmul.mubr.bf16.gmra.mxu0 %v1986
  %v2199 = vpop.f32.mrf.mxu0
  %v2200 = vadd.f32 %v74, %v2199
  %v2201 = vpop.f32.mrf.mxu0
  %v2202 = vpop.f32.mrf.mxu0
  %v2203 = vadd.f32 %v74, %v2202
  %v2204 = vpop.f32.mrf.mxu0
  %2205 = vmatprep.mubr.bf16.mxu0 0
  %2206 = vmatmul.mubr.bf16.gmra.mxu0 %v1989
  %v2207 = vpop.f32.mrf.mxu0
  %v2208 = vadd.f32 %v74, %v2207
  %v2209 = vpop.f32.mrf.mxu0
  %v2210 = vpop.f32.mrf.mxu0
  %v2211 = vadd.f32 %v74, %v2210
  %v2212 = vpop.f32.mrf.mxu0
  %2213 = vmatprep.mubr.bf16.mxu0 0
  %2214 = vmatmul.mubr.bf16.gmra.mxu0 %v1992
  %v2215 = vpop.f32.mrf.mxu0
  %v2216 = vadd.f32 %v74, %v2215
  %v2217 = vpop.f32.mrf.mxu0
  %v2218 = vpop.f32.mrf.mxu0
  %v2219 = vadd.f32 %v74, %v2218
  %v2220 = vpop.f32.mrf.mxu0
  %2221 = vmatprep.mubr.bf16.mxu0 0
  %2222 = vmatmul.mubr.bf16.gmra.mxu0 %v1995
  %v2223 = vpop.f32.mrf.mxu0
  %v2224 = vadd.f32 %v74, %v2223
  %v2225 = vpop.f32.mrf.mxu0
  %v2226 = vpop.f32.mrf.mxu0
  %v2227 = vadd.f32 %v74, %v2226
  %v2228 = vpop.f32.mrf.mxu0
  %2229 = vdwg.mxu0
  %v2230 = vmax.f32 %v2032, 0.0
  %v2231 = vmax.f32 %v2035, 0.0
  %v2232 = vmax.f32 %v2040, 0.0
  %v2233 = vmax.f32 %v2043, 0.0
  %v2234 = vmax.f32 %v2048, 0.0
  %v2235 = vmax.f32 %v2051, 0.0
  %v2236 = vmax.f32 %v2056, 0.0
  %v2237 = vmax.f32 %v2059, 0.0
  %v2238 = vmax.f32 %v2064, 0.0
  %v2239 = vmax.f32 %v2067, 0.0
  %v2240 = vmax.f32 %v2072, 0.0
  %v2241 = vmax.f32 %v2075, 0.0
  %v2242 = vmax.f32 %v2080, 0.0
  %v2243 = vmax.f32 %v2083, 0.0
  %v2244 = vmax.f32 %v2088, 0.0
  %v2245 = vmax.f32 %v2091, 0.0
  %v2246 = vmax.f32 %v2096, 0.0
  %v2247 = vmax.f32 %v2099, 0.0
  %v2248 = vmax.f32 %v2104, 0.0
  %v2249 = vmax.f32 %v2107, 0.0
  %v2250 = vmax.f32 %v2112, 0.0
  %v2251 = vmax.f32 %v2115, 0.0
  %v2252 = vmax.f32 %v2120, 0.0
  %v2253 = vmax.f32 %v2123, 0.0
  %v2254 = vmax.f32 %v2128, 0.0
  %v2255 = vmax.f32 %v2131, 0.0
  %v2256 = vmax.f32 %v2136, 0.0
  %v2257 = vmax.f32 %v2139, 0.0
  %v2258 = vmax.f32 %v2144, 0.0
  %v2259 = vmax.f32 %v2147, 0.0
  %v2260 = vmax.f32 %v2152, 0.0
  %v2261 = vmax.f32 %v2155, 0.0
  %v2262 = vmax.f32 %v2160, 0.0
  %v2263 = vmax.f32 %v2163, 0.0
  %v2264 = vmax.f32 %v2168, 0.0
  %v2265 = vmax.f32 %v2171, 0.0
  %v2266 = vmax.f32 %v2176, 0.0
  %v2267 = vmax.f32 %v2179, 0.0
  %v2268 = vmax.f32 %v2184, 0.0
  %v2269 = vmax.f32 %v2187, 0.0
  %v2270 = vmax.f32 %v2192, 0.0
  %v2271 = vmax.f32 %v2195, 0.0
  %v2272 = vmax.f32 %v2200, 0.0
  %v2273 = vmax.f32 %v2203, 0.0
  %v2274 = vmax.f32 %v2208, 0.0
  %v2275 = vmax.f32 %v2211, 0.0
  %v2276 = vmax.f32 %v2216, 0.0
  %v2277 = vmax.f32 %v2219, 0.0
  %v2278 = vmax.f32 %v2224, 0.0
  %v2279 = vmax.f32 %v2227, 0.0
  %v2280 = vmax.f32 %v1696, %v2230
  %v2281 = vmax.f32 %v1697, %v2231
  %v2282 = vmax.f32 %v1698, %v2232
  %v2283 = vmax.f32 %v1699, %v2233
  %v2284 = vmax.f32 %v1700, %v2234
  %v2285 = vmax.f32 %v1701, %v2235
  %v2286 = vmax.f32 %v1702, %v2236
  %v2287 = vmax.f32 %v1703, %v2237
  %v2288 = vmax.f32 %v1704, %v2238
  %v2289 = vmax.f32 %v1705, %v2239
  %v2290 = vmax.f32 %v1706, %v2240
  %v2291 = vmax.f32 %v1707, %v2241
  %v2292 = vmax.f32 %v1708, %v2242
  %v2293 = vmax.f32 %v1709, %v2243
  %v2294 = vmax.f32 %v1710, %v2244
  %v2295 = vmax.f32 %v1711, %v2245
  %v2296 = vmax.f32 %v1712, %v2246
  %v2297 = vmax.f32 %v1713, %v2247
  %v2298 = vmax.f32 %v1714, %v2248
  %v2299 = vmax.f32 %v1715, %v2249
  %v2300 = vmax.f32 %v1716, %v2250
  %v2301 = vmax.f32 %v1717, %v2251
  %v2302 = vmax.f32 %v1718, %v2252
  %v2303 = vmax.f32 %v1719, %v2253
  %v2304 = vmax.f32 %v1720, %v2254
  %v2305 = vmax.f32 %v1721, %v2255
  %v2306 = vmax.f32 %v1722, %v2256
  %v2307 = vmax.f32 %v1723, %v2257
  %v2308 = vmax.f32 %v1724, %v2258
  %v2309 = vmax.f32 %v1725, %v2259
  %v2310 = vmax.f32 %v1726, %v2260
  %v2311 = vmax.f32 %v1727, %v2261
  %v2312 = vmax.f32 %v1728, %v2262
  %v2313 = vmax.f32 %v1729, %v2263
  %v2314 = vmax.f32 %v1730, %v2264
  %v2315 = vmax.f32 %v1731, %v2265
  %v2316 = vmax.f32 %v1732, %v2266
  %v2317 = vmax.f32 %v1733, %v2267
  %v2318 = vmax.f32 %v1734, %v2268
  %v2319 = vmax.f32 %v1735, %v2269
  %v2320 = vmax.f32 %v1736, %v2270
  %v2321 = vmax.f32 %v1737, %v2271
  %v2322 = vmax.f32 %v1738, %v2272
  %v2323 = vmax.f32 %v1739, %v2273
  %v2324 = vmax.f32 %v1740, %v2274
  %v2325 = vmax.f32 %v1741, %v2275
  %v2326 = vmax.f32 %v1742, %v2276
  %v2327 = vmax.f32 %v1743, %v2277
  %v2328 = vmax.f32 %v1744, %v2278
  %v2329 = vmax.f32 %v1745, %v2279
  %vm2330 = vcmask 64512
  %2331 = vst.msk [vmem:[%s3] sm:$0xff] %vm2330, %v2280
  %2332 = vst.msk [vmem:[%s3 + $0x8] sm:$0xff] %vm2330, %v2281
  %2333 = vst.msk [vmem:[%s3 + $0x10] sm:$0xff] %vm2330, %v2282
  %2334 = vst.msk [vmem:[%s3 + $0x18] sm:$0xff] %vm2330, %v2283
  %2335 = vst.msk [vmem:[%s3 + $0x20] sm:$0xff] %vm2330, %v2284
  %2336 = vst.msk [vmem:[%s3 + $0x28] sm:$0xff] %vm2330, %v2285
  %2337 = vst.msk [vmem:[%s3 + $0x30] sm:$0xff] %vm2330, %v2286
  %2338 = vst.msk [vmem:[%s3 + $0x38] sm:$0xff] %vm2330, %v2287
  %2339 = vst.msk [vmem:[%s3 + $0x40] sm:$0xff] %vm2330, %v2288
  %2340 = vst.msk [vmem:[%s3 + $0x48] sm:$0xff] %vm2330, %v2289
  %2341 = vst.msk [vmem:[%s3 + $0x50] sm:$0xff] %vm2330, %v2290
  %2342 = vst.msk [vmem:[%s3 + $0x58] sm:$0xff] %vm2330, %v2291
  %2343 = vst.msk [vmem:[%s3 + $0x60] sm:$0xff] %vm2330, %v2292
  %2344 = vst.msk [vmem:[%s3 + $0x68] sm:$0xff] %vm2330, %v2293
  %2345 = vst.msk [vmem:[%s3 + $0x70] sm:$0xff] %vm2330, %v2294
  %2346 = vst.msk [vmem:[%s3 + $0x78] sm:$0xff] %vm2330, %v2295
  %2347 = vst.msk [vmem:[%s3 + $0x80] sm:$0xff] %vm2330, %v2296
  %2348 = vst.msk [vmem:[%s3 + $0x88] sm:$0xff] %vm2330, %v2297
  %2349 = vst.msk [vmem:[%s3 + $0x90] sm:$0xff] %vm2330, %v2298
  %2350 = vst.msk [vmem:[%s3 + $0x98] sm:$0xff] %vm2330, %v2299
  %2351 = vst.msk [vmem:[%s3 + $0xa0] sm:$0xff] %vm2330, %v2300
  %2352 = vst.msk [vmem:[%s3 + $0xa8] sm:$0xff] %vm2330, %v2301
  %2353 = vst.msk [vmem:[%s3 + $0xb0] sm:$0xff] %vm2330, %v2302
  %2354 = vst.msk [vmem:[%s3 + $0xb8] sm:$0xff] %vm2330, %v2303
  %2355 = vst.msk [vmem:[%s3 + $0xc0] sm:$0xff] %vm2330, %v2304
  %2356 = vst.msk [vmem:[%s3 + $0xc8] sm:$0xff] %vm2330, %v2305
  %2357 = vst.msk [vmem:[%s3 + $0xd0] sm:$0xff] %vm2330, %v2306
  %2358 = vst.msk [vmem:[%s3 + $0xd8] sm:$0xff] %vm2330, %v2307
  %2359 = vst.msk [vmem:[%s3 + $0xe0] sm:$0xff] %vm2330, %v2308
  %2360 = vst.msk [vmem:[%s3 + $0xe8] sm:$0xff] %vm2330, %v2309
  %2361 = vst.msk [vmem:[%s3 + $0xf0] sm:$0xff] %vm2330, %v2310
  %2362 = vst.msk [vmem:[%s3 + $0xf8] sm:$0xff] %vm2330, %v2311
  %2363 = vst.msk [vmem:[%s3 + $0x100] sm:$0xff] %vm2330, %v2312
  %2364 = vst.msk [vmem:[%s3 + $0x108] sm:$0xff] %vm2330, %v2313
  %2365 = vst.msk [vmem:[%s3 + $0x110] sm:$0xff] %vm2330, %v2314
  %2366 = vst.msk [vmem:[%s3 + $0x118] sm:$0xff] %vm2330, %v2315
  %2367 = vst.msk [vmem:[%s3 + $0x120] sm:$0xff] %vm2330, %v2316
  %2368 = vst.msk [vmem:[%s3 + $0x128] sm:$0xff] %vm2330, %v2317
  %2369 = vst.msk [vmem:[%s3 + $0x130] sm:$0xff] %vm2330, %v2318
  %2370 = vst.msk [vmem:[%s3 + $0x138] sm:$0xff] %vm2330, %v2319
  %2371 = vst.msk [vmem:[%s3 + $0x140] sm:$0xff] %vm2330, %v2320
  %2372 = vst.msk [vmem:[%s3 + $0x148] sm:$0xff] %vm2330, %v2321
  %2373 = vst.msk [vmem:[%s3 + $0x150] sm:$0xff] %vm2330, %v2322
  %2374 = vst.msk [vmem:[%s3 + $0x158] sm:$0xff] %vm2330, %v2323
  %2375 = vst.msk [vmem:[%s3 + $0x160] sm:$0xff] %vm2330, %v2324
  %2376 = vst.msk [vmem:[%s3 + $0x168] sm:$0xff] %vm2330, %v2325
  %2377 = vst.msk [vmem:[%s3 + $0x170] sm:$0xff] %vm2330, %v2326
  %2378 = vst.msk [vmem:[%s3 + $0x178] sm:$0xff] %vm2330, %v2327
  %2379 = vst.msk [vmem:[%s3 + $0x180] sm:$0xff] %vm2330, %v2328
  %2380 = vst.msk [vmem:[%s3 + $0x188] sm:$0xff] %vm2330, %v2329
  // Predicated region
  $region14: #{cnn_regressor_forward.3} parent=0 // pred_check
    _
  $region15: #{cnn_regressor_forward.3} parent=0 // pred_check_branch
    %2382 = sbr.rel (0) target = $region17
  $region16: #{cnn_regressor_forward.3} parent=0 // pred_region
    _
  $region17: #{cnn_regressor_forward.3} parent=0 // pred_fallthru
    _
  // Predicated region
  $region18: #{cnn_regressor_forward.3} parent=0 // pred_check
    _
  $region19: #{cnn_regressor_forward.3} parent=0 // pred_check_branch
    %2384 = sbr.rel (0) target = $region21
  $region20: #{cnn_regressor_forward.3} parent=0 // pred_region
    _
  $region21: #{cnn_regressor_forward.3} parent=0 // pred_fallthru
    _

// kernel: cnn_regressor_forward.4
$region0: #{cnn_regressor_forward.4}
  #allocation0 [shape = 'u32[]', space=smem, size = 0x4, offset = 0x4, fixed_abs, tag = 'smem constant byte address 0x4 - core index']
  #allocation1 [shape = 'u32[144,128]{1,0:T(1,128)}', space=vmem, size = 0x12000, scoped, tag = 'internal scratch']
  %s0 = inlined_call_operand.vmem [shape: bf16[4,64,200], index: 0, kind: input, shape index: {}]
  %s1 = inlined_call_operand.vmem [shape: bf16[200,16], index: 1, kind: input, shape index: {}]
  %s2 = inlined_call_operand.vmem [shape: f32[1,16], index: 2, kind: input, shape index: {}]
  %s3 = inlined_call_operand.vmem [shape: f32[64,16], index: 3, kind: output, shape index: {}]
  %s4 = sld [smem:[#allocation0]]
  $region22: #{cnn_regressor_forward.4} parent=0
    _
  %s6 = ssub.s32 1, %s4
  %s7 = scalar_select 0, %s6, %s4
  // Predicated region
  $region2: #{cnn_regressor_forward.4} parent=0 // pred_check
    _
  $region3: #{cnn_regressor_forward.4} parent=0 // pred_check_branch
    %9 = sbr.rel (0) target = $region5
  $region4: #{cnn_regressor_forward.4} parent=0 // pred_region
    _
  $region5: #{cnn_regressor_forward.4} parent=0 // pred_fallthru
    _
  // Predicated region
  $region6: #{cnn_regressor_forward.4} parent=0 // pred_check
    _
  $region7: #{cnn_regressor_forward.4} parent=0 // pred_check_branch
    %11 = sbr.rel (0) target = $region9
  $region8: #{cnn_regressor_forward.4} parent=0 // pred_region
    _
  $region9: #{cnn_regressor_forward.4} parent=0 // pred_fallthru
    _
  // Predicated region
  $region10: #{cnn_regressor_forward.4} parent=0 // pred_check
    _
  $region11: #{cnn_regressor_forward.4} parent=0 // pred_check_branch
    %13 = sbr.rel (0) target = $region13
  $region12: #{cnn_regressor_forward.4} parent=0 // pred_region
    _
  $region13: #{cnn_regressor_forward.4} parent=0 // pred_fallthru
    _
  %v15 = vld [vmem:[%s1] sm:$0xf]
  %v16 = vld [vmem:[%s1 + $0x4] sm:$0xf]
  %v17 = vld [vmem:[%s1 + $0x8] sm:$0xf]
  %v18 = vld [vmem:[%s1 + $0xc] sm:$0xf]
  %v19 = vld [vmem:[%s1 + $0x10] sm:$0xf]
  %v20 = vld [vmem:[%s1 + $0x14] sm:$0xf]
  %v21 = vld [vmem:[%s1 + $0x18] sm:$0xf]
  %v22 = vld [vmem:[%s1 + $0x1c] sm:$0xf]
  %v23 = vld [vmem:[%s1 + $0x20] sm:$0xf]
  %v24 = vld [vmem:[%s1 + $0x24] sm:$0xf]
  %v25 = vld [vmem:[%s1 + $0x28] sm:$0xf]
  %v26 = vld [vmem:[%s1 + $0x2c] sm:$0xf]
  %v27 = vld [vmem:[%s1 + $0x30] sm:$0xf]
  %v28 = vld [vmem:[%s1 + $0x34] sm:$0xf]
  %v29 = vld [vmem:[%s1 + $0x38] sm:$0xf]
  %v30 = vld [vmem:[%s1 + $0x3c] sm:$0xf]
  %v31 = vld [vmem:[%s1 + $0x40] sm:$0xf]
  %v32 = vld [vmem:[%s1 + $0x44] sm:$0xf]
  %v33 = vld [vmem:[%s1 + $0x48] sm:$0xf]
  %v34 = vld [vmem:[%s1 + $0x4c] sm:$0xf]
  %v35 = vld [vmem:[%s1 + $0x50] sm:$0xf]
  %v36 = vld [vmem:[%s1 + $0x54] sm:$0xf]
  %v37 = vld [vmem:[%s1 + $0x58] sm:$0xf]
  %v38 = vld [vmem:[%s1 + $0x5c] sm:$0xf]
  %v39 = vld [vmem:[%s1 + $0x60] sm:$0xf]
  %v40 = vld [vmem:[%s2] sm:$0x1]
  %v41 = vld [vmem:[%s0] sm:$0xff]
  %v42 = vld [vmem:[%s0 + $0x8] sm:$0xff]
  %v43 = vld [vmem:[%s0 + $0x10] sm:$0xff]
  %v44 = vld [vmem:[%s0 + $0x18] sm:$0xff]
  %v45 = vld [vmem:[%s0 + $0x20] sm:$0xff]
  %v46 = vld [vmem:[%s0 + $0x28] sm:$0xff]
  %v47 = vld [vmem:[%s0 + $0x30] sm:$0xff]
  %v48 = vld [vmem:[%s0 + $0x38] sm:$0xff]
  %v50 = vlaneseq
  %v51 = vshrl.u32 %v50, 7
  %v52 = vsub.s32 0, %v51
  %v53 = vrot.slane %v40, %v52
  %v63 = vunpack.c.l.b16 %v41
  %v64 = vunpack.c.h.b16 %v41
  %v65 = vunpack.c.l.b16 %v42
  %v66 = vunpack.c.h.b16 %v42
  %v67 = vunpack.c.l.b16 %v43
  %v68 = vunpack.c.h.b16 %v43
  %v69 = vunpack.c.l.b16 %v44
  %v70 = vunpack.c.h.b16 %v44
  %v71 = vunpack.c.l.b16 %v45
  %v72 = vunpack.c.h.b16 %v45
  %v73 = vunpack.c.l.b16 %v46
  %v74 = vunpack.c.h.b16 %v46
  %v75 = vunpack.c.l.b16 %v47
  %v76 = vunpack.c.h.b16 %v47
  %v77 = vunpack.c.l.b16 %v48
  %v78 = vunpack.c.h.b16 %v48
  %v79 = vpack.c.b16 %v65, %v63
  %v80 = vpack.c.b16 %v66, %v64
  %v81 = vpack.c.b16 %v69, %v67
  %v82 = vpack.c.b16 %v70, %v68
  %v83 = vpack.c.b16 %v73, %v71
  %v84 = vpack.c.b16 %v74, %v72
  %v85 = vpack.c.b16 %v77, %v75
  %v86 = vpack.c.b16 %v78, %v76
  %v116 = vunpack.c.l.b16 %v15
  %v117 = vunpack.c.l.b16 %v16
  %v118 = vunpack.c.l.b16 %v17
  %v119 = vunpack.c.l.b16 %v18
  %v120 = vunpack.c.l.b16 %v19
  %v121 = vunpack.c.l.b16 %v20
  %v122 = vunpack.c.l.b16 %v21
  %v123 = vunpack.c.l.b16 %v22
  %v124 = vunpack.c.l.b16 %v23
  %v125 = vunpack.c.l.b16 %v24
  %v126 = vunpack.c.l.b16 %v25
  %v127 = vunpack.c.l.b16 %v26
  %v128 = vunpack.c.l.b16 %v27
  %v129 = vunpack.c.l.b16 %v28
  %v130 = vunpack.c.l.b16 %v29
  %v131 = vunpack.c.l.b16 %v30
  %v132 = vunpack.c.l.b16 %v31
  %v133 = vunpack.c.l.b16 %v32
  %v134 = vunpack.c.l.b16 %v33
  %v135 = vunpack.c.l.b16 %v34
  %v136 = vunpack.c.l.b16 %v35
  %v137 = vunpack.c.l.b16 %v36
  %v138 = vunpack.c.l.b16 %v37
  %v139 = vunpack.c.l.b16 %v38
  %v140 = vunpack.c.l.b16 %v39
  %v141 = vpack.c.b16 %v117, %v116
  %v142 = vpack.c.b16 %v119, %v118
  %v143 = vpack.c.b16 %v121, %v120
  %v144 = vpack.c.b16 %v123, %v122
  %v145 = vpack.c.b16 %v125, %v124
  %v146 = vpack.c.b16 %v127, %v126
  %v147 = vpack.c.b16 %v129, %v128
  %v148 = vpack.c.b16 %v131, %v130
  %v149 = vpack.c.b16 %v133, %v132
  %v150 = vpack.c.b16 %v135, %v134
  %v151 = vpack.c.b16 %v137, %v136
  %v152 = vpack.c.b16 %v139, %v138
  %v153 = vpack.c.b16 %v140, %v140
  %vm166 = vcmask 588800
  %v168 = vsel %vm166, %v80, 0
  %v171 = vsel %vm166, %v82, 0
  %v174 = vsel %vm166, %v84, 0
  %v177 = vsel %vm166, %v86, 0
  %vm179 = vcmask 1043456
  %v181 = vsel %vm179, %v153, 0
  %183 = vmatprep.subr.bf16.mxu0 0
  %184 = vmatpush1.bf16.msra.mxu0 %v148
  %185 = vmatprep.subr.bf16.mxu0 0
  %186 = vmatpush1.bf16.msra.mxu0 %v147
  %187 = vmatprep.subr.bf16.mxu0 0
  %188 = vmatpush1.bf16.msra.mxu0 %v146
  %189 = vmatprep.subr.bf16.mxu0 0
  %190 = vmatpush1.bf16.msra.mxu0 %v145
  %191 = vmatprep.subr.bf16.mxu0 0
  %192 = vmatpush1.bf16.msra.mxu0 %v144
  %193 = vmatprep.subr.bf16.mxu0 0
  %194 = vmatpush1.bf16.msra.mxu0 %v143
  %195 = vmatprep.subr.bf16.mxu0 0
  %196 = vmatpush1.bf16.msra.mxu0 %v142
  %197 = vmatprep.subr.bf16.mxu0 0
  %198 = vmatpush1.bf16.msra.mxu0 %v141
  %199 = vmatprep.subr.bf16.mxu0 0
  %200 = vmatpush2.bf16.msra.mxu0 0
  %201 = vmatprep.subr.bf16.mxu0 0
  %202 = vmatpush2.bf16.msra.mxu0 0
  %203 = vmatprep.subr.bf16.mxu0 0
  %204 = vmatpush2.bf16.msra.mxu0 0
  %205 = vmatprep.subr.bf16.mxu0 0
  %206 = vmatpush2.bf16.msra.mxu0 %v181
  %207 = vmatprep.subr.bf16.mxu0 0
  %208 = vmatpush2.bf16.msra.mxu0 %v152
  %209 = vmatprep.subr.bf16.mxu0 0
  %210 = vmatpush2.bf16.msra.mxu0 %v151
  %211 = vmatprep.subr.bf16.mxu0 0
  %212 = vmatpush2.bf16.msra.mxu0 %v150
  %213 = vmatprep.subr.bf16.mxu0 0
  %214 = vmatpush2.bf16.msra.mxu0 %v149
  %215 = vmatprep.mubr.bf16.mxu0 %v168
  %216 = vmatmul.mubr.bf16.gmra.mxu0 %v79
  %v217 = vpop.f32.mrf.mxu0
  %v218 = vadd.f32 %v53, %v217
  %v219 = vpop.f32.mrf.mxu0
  %v220 = vpop.f32.mrf.mxu0
  %v221 = vadd.f32 %v53, %v220
  %v222 = vpop.f32.mrf.mxu0
  %223 = vmatprep.mubr.bf16.mxu0 %v171
  %224 = vmatmul.mubr.bf16.gmra.mxu0 %v81
  %v225 = vpop.f32.mrf.mxu0
  %v226 = vadd.f32 %v53, %v225
  %v227 = vpop.f32.mrf.mxu0
  %v228 = vpop.f32.mrf.mxu0
  %v229 = vadd.f32 %v53, %v228
  %v230 = vpop.f32.mrf.mxu0
  %231 = vmatprep.mubr.bf16.mxu0 %v174
  %232 = vmatmul.mubr.bf16.gmra.mxu0 %v83
  %v233 = vpop.f32.mrf.mxu0
  %v234 = vadd.f32 %v53, %v233
  %v235 = vpop.f32.mrf.mxu0
  %v236 = vpop.f32.mrf.mxu0
  %v237 = vadd.f32 %v53, %v236
  %v238 = vpop.f32.mrf.mxu0
  %239 = vmatprep.mubr.bf16.mxu0 %v177
  %240 = vmatmul.mubr.bf16.gmra.mxu0 %v85
  %v241 = vpop.f32.mrf.mxu0
  %v242 = vadd.f32 %v53, %v241
  %v243 = vpop.f32.mrf.mxu0
  %v244 = vpop.f32.mrf.mxu0
  %v245 = vadd.f32 %v53, %v244
  %v246 = vpop.f32.mrf.mxu0
  %247 = vdwg.mxu0
  %v248 = vmax.f32 %v218, 0.0
  %v249 = vmax.f32 %v221, 0.0
  %v250 = vmax.f32 %v226, 0.0
  %v251 = vmax.f32 %v229, 0.0
  %v252 = vmax.f32 %v234, 0.0
  %v253 = vmax.f32 %v237, 0.0
  %v254 = vmax.f32 %v242, 0.0
  %v255 = vmax.f32 %v245, 0.0
  %s256 = scalar_lea.vmem %s0, 64
  %v257 = vld [vmem:[%s256] sm:$0xff]
  %v258 = vld [vmem:[%s256 + $0x8] sm:$0xff]
  %v259 = vld [vmem:[%s256 + $0x10] sm:$0xff]
  %v260 = vld [vmem:[%s256 + $0x18] sm:$0xff]
  %v261 = vld [vmem:[%s256 + $0x20] sm:$0xff]
  %v262 = vld [vmem:[%s256 + $0x28] sm:$0xff]
  %v263 = vld [vmem:[%s256 + $0x30] sm:$0xff]
  %v264 = vld [vmem:[%s256 + $0x38] sm:$0xff]
  %v273 = vunpack.c.l.b16 %v257
  %v274 = vunpack.c.h.b16 %v257
  %v275 = vunpack.c.l.b16 %v258
  %v276 = vunpack.c.h.b16 %v258
  %v277 = vunpack.c.l.b16 %v259
  %v278 = vunpack.c.h.b16 %v259
  %v279 = vunpack.c.l.b16 %v260
  %v280 = vunpack.c.h.b16 %v260
  %v281 = vunpack.c.l.b16 %v261
  %v282 = vunpack.c.h.b16 %v261
  %v283 = vunpack.c.l.b16 %v262
  %v284 = vunpack.c.h.b16 %v262
  %v285 = vunpack.c.l.b16 %v263
  %v286 = vunpack.c.h.b16 %v263
  %v287 = vunpack.c.l.b16 %v264
  %v288 = vunpack.c.h.b16 %v264
  %v289 = vpack.c.b16 %v275, %v273
  %v290 = vpack.c.b16 %v276, %v274
  %v291 = vpack.c.b16 %v279, %v277
  %v292 = vpack.c.b16 %v280, %v278
  %v293 = vpack.c.b16 %v283, %v281
  %v294 = vpack.c.b16 %v284, %v282
  %v295 = vpack.c.b16 %v287, %v285
  %v296 = vpack.c.b16 %v288, %v286
  %v302 = vsel %vm166, %v290, 0
  %v305 = vsel %vm166, %v292, 0
  %v308 = vsel %vm166, %v294, 0
  %v311 = vsel %vm166, %v296, 0
  %313 = vmatprep.subr.bf16.mxu0 0
  %314 = vmatpush1.bf16.msra.mxu0 %v148
  %315 = vmatprep.subr.bf16.mxu0 0
  %316 = vmatpush1.bf16.msra.mxu0 %v147
  %317 = vmatprep.subr.bf16.mxu0 0
  %318 = vmatpush1.bf16.msra.mxu0 %v146
  %319 = vmatprep.subr.bf16.mxu0 0
  %320 = vmatpush1.bf16.msra.mxu0 %v145
  %321 = vmatprep.subr.bf16.mxu0 0
  %322 = vmatpush1.bf16.msra.mxu0 %v144
  %323 = vmatprep.subr.bf16.mxu0 0
  %324 = vmatpush1.bf16.msra.mxu0 %v143
  %325 = vmatprep.subr.bf16.mxu0 0
  %326 = vmatpush1.bf16.msra.mxu0 %v142
  %327 = vmatprep.subr.bf16.mxu0 0
  %328 = vmatpush1.bf16.msra.mxu0 %v141
  %329 = vmatprep.subr.bf16.mxu0 0
  %330 = vmatpush2.bf16.msra.mxu0 0
  %331 = vmatprep.subr.bf16.mxu0 0
  %332 = vmatpush2.bf16.msra.mxu0 0
  %333 = vmatprep.subr.bf16.mxu0 0
  %334 = vmatpush2.bf16.msra.mxu0 0
  %335 = vmatprep.subr.bf16.mxu0 0
  %336 = vmatpush2.bf16.msra.mxu0 %v181
  %337 = vmatprep.subr.bf16.mxu0 0
  %338 = vmatpush2.bf16.msra.mxu0 %v152
  %339 = vmatprep.subr.bf16.mxu0 0
  %340 = vmatpush2.bf16.msra.mxu0 %v151
  %341 = vmatprep.subr.bf16.mxu0 0
  %342 = vmatpush2.bf16.msra.mxu0 %v150
  %343 = vmatprep.subr.bf16.mxu0 0
  %344 = vmatpush2.bf16.msra.mxu0 %v149
  %345 = vmatprep.mubr.bf16.mxu0 %v302
  %346 = vmatmul.mubr.bf16.gmra.mxu0 %v289
  %v347 = vpop.f32.mrf.mxu0
  %v348 = vadd.f32 %v53, %v347
  %v349 = vpop.f32.mrf.mxu0
  %v350 = vpop.f32.mrf.mxu0
  %v351 = vadd.f32 %v53, %v350
  %v352 = vpop.f32.mrf.mxu0
  %353 = vmatprep.mubr.bf16.mxu0 %v305
  %354 = vmatmul.mubr.bf16.gmra.mxu0 %v291
  %v355 = vpop.f32.mrf.mxu0
  %v356 = vadd.f32 %v53, %v355
  %v357 = vpop.f32.mrf.mxu0
  %v358 = vpop.f32.mrf.mxu0
  %v359 = vadd.f32 %v53, %v358
  %v360 = vpop.f32.mrf.mxu0
  %361 = vmatprep.mubr.bf16.mxu0 %v308
  %362 = vmatmul.mubr.bf16.gmra.mxu0 %v293
  %v363 = vpop.f32.mrf.mxu0
  %v364 = vadd.f32 %v53, %v363
  %v365 = vpop.f32.mrf.mxu0
  %v366 = vpop.f32.mrf.mxu0
  %v367 = vadd.f32 %v53, %v366
  %v368 = vpop.f32.mrf.mxu0
  %369 = vmatprep.mubr.bf16.mxu0 %v311
  %370 = vmatmul.mubr.bf16.gmra.mxu0 %v295
  %v371 = vpop.f32.mrf.mxu0
  %v372 = vadd.f32 %v53, %v371
  %v373 = vpop.f32.mrf.mxu0
  %v374 = vpop.f32.mrf.mxu0
  %v375 = vadd.f32 %v53, %v374
  %v376 = vpop.f32.mrf.mxu0
  %377 = vdwg.mxu0
  %v378 = vmax.f32 %v348, 0.0
  %v379 = vmax.f32 %v351, 0.0
  %v380 = vmax.f32 %v356, 0.0
  %v381 = vmax.f32 %v359, 0.0
  %v382 = vmax.f32 %v364, 0.0
  %v383 = vmax.f32 %v367, 0.0
  %v384 = vmax.f32 %v372, 0.0
  %v385 = vmax.f32 %v375, 0.0
  %v386 = vmax.f32 %v248, %v378
  %v387 = vmax.f32 %v249, %v379
  %v388 = vmax.f32 %v250, %v380
  %v389 = vmax.f32 %v251, %v381
  %v390 = vmax.f32 %v252, %v382
  %v391 = vmax.f32 %v253, %v383
  %v392 = vmax.f32 %v254, %v384
  %v393 = vmax.f32 %v255, %v385
  %s394 = scalar_lea.vmem %s0, 128
  %v395 = vld [vmem:[%s394] sm:$0xff]
  %v396 = vld [vmem:[%s394 + $0x8] sm:$0xff]
  %v397 = vld [vmem:[%s394 + $0x10] sm:$0xff]
  %v398 = vld [vmem:[%s394 + $0x18] sm:$0xff]
  %v399 = vld [vmem:[%s394 + $0x20] sm:$0xff]
  %v400 = vld [vmem:[%s394 + $0x28] sm:$0xff]
  %v401 = vld [vmem:[%s394 + $0x30] sm:$0xff]
  %v402 = vld [vmem:[%s394 + $0x38] sm:$0xff]
  %v411 = vunpack.c.l.b16 %v395
  %v412 = vunpack.c.h.b16 %v395
  %v413 = vunpack.c.l.b16 %v396
  %v414 = vunpack.c.h.b16 %v396
  %v415 = vunpack.c.l.b16 %v397
  %v416 = vunpack.c.h.b16 %v397
  %v417 = vunpack.c.l.b16 %v398
  %v418 = vunpack.c.h.b16 %v398
  %v419 = vunpack.c.l.b16 %v399
  %v420 = vunpack.c.h.b16 %v399
  %v421 = vunpack.c.l.b16 %v400
  %v422 = vunpack.c.h.b16 %v400
  %v423 = vunpack.c.l.b16 %v401
  %v424 = vunpack.c.h.b16 %v401
  %v425 = vunpack.c.l.b16 %v402
  %v426 = vunpack.c.h.b16 %v402
  %v427 = vpack.c.b16 %v413, %v411
  %v428 = vpack.c.b16 %v414, %v412
  %v429 = vpack.c.b16 %v417, %v415
  %v430 = vpack.c.b16 %v418, %v416
  %v431 = vpack.c.b16 %v421, %v419
  %v432 = vpack.c.b16 %v422, %v420
  %v433 = vpack.c.b16 %v425, %v423
  %v434 = vpack.c.b16 %v426, %v424
  %v440 = vsel %vm166, %v428, 0
  %v443 = vsel %vm166, %v430, 0
  %v446 = vsel %vm166, %v432, 0
  %v449 = vsel %vm166, %v434, 0
  %451 = vmatprep.subr.bf16.mxu0 0
  %452 = vmatpush1.bf16.msra.mxu0 %v148
  %453 = vmatprep.subr.bf16.mxu0 0
  %454 = vmatpush1.bf16.msra.mxu0 %v147
  %455 = vmatprep.subr.bf16.mxu0 0
  %456 = vmatpush1.bf16.msra.mxu0 %v146
  %457 = vmatprep.subr.bf16.mxu0 0
  %458 = vmatpush1.bf16.msra.mxu0 %v145
  %459 = vmatprep.subr.bf16.mxu0 0
  %460 = vmatpush1.bf16.msra.mxu0 %v144
  %461 = vmatprep.subr.bf16.mxu0 0
  %462 = vmatpush1.bf16.msra.mxu0 %v143
  %463 = vmatprep.subr.bf16.mxu0 0
  %464 = vmatpush1.bf16.msra.mxu0 %v142
  %465 = vmatprep.subr.bf16.mxu0 0
  %466 = vmatpush1.bf16.msra.mxu0 %v141
  %467 = vmatprep.subr.bf16.mxu0 0
  %468 = vmatpush2.bf16.msra.mxu0 0
  %469 = vmatprep.subr.bf16.mxu0 0
  %470 = vmatpush2.bf16.msra.mxu0 0
  %471 = vmatprep.subr.bf16.mxu0 0
  %472 = vmatpush2.bf16.msra.mxu0 0
  %473 = vmatprep.subr.bf16.mxu0 0
  %474 = vmatpush2.bf16.msra.mxu0 %v181
  %475 = vmatprep.subr.bf16.mxu0 0
  %476 = vmatpush2.bf16.msra.mxu0 %v152
  %477 = vmatprep.subr.bf16.mxu0 0
  %478 = vmatpush2.bf16.msra.mxu0 %v151
  %479 = vmatprep.subr.bf16.mxu0 0
  %480 = vmatpush2.bf16.msra.mxu0 %v150
  %481 = vmatprep.subr.bf16.mxu0 0
  %482 = vmatpush2.bf16.msra.mxu0 %v149
  %483 = vmatprep.mubr.bf16.mxu0 %v440
  %484 = vmatmul.mubr.bf16.gmra.mxu0 %v427
  %v485 = vpop.f32.mrf.mxu0
  %v486 = vadd.f32 %v53, %v485
  %v487 = vpop.f32.mrf.mxu0
  %v488 = vpop.f32.mrf.mxu0
  %v489 = vadd.f32 %v53, %v488
  %v490 = vpop.f32.mrf.mxu0
  %491 = vmatprep.mubr.bf16.mxu0 %v443
  %492 = vmatmul.mubr.bf16.gmra.mxu0 %v429
  %v493 = vpop.f32.mrf.mxu0
  %v494 = vadd.f32 %v53, %v493
  %v495 = vpop.f32.mrf.mxu0
  %v496 = vpop.f32.mrf.mxu0
  %v497 = vadd.f32 %v53, %v496
  %v498 = vpop.f32.mrf.mxu0
  %499 = vmatprep.mubr.bf16.mxu0 %v446
  %500 = vmatmul.mubr.bf16.gmra.mxu0 %v431
  %v501 = vpop.f32.mrf.mxu0
  %v502 = vadd.f32 %v53, %v501
  %v503 = vpop.f32.mrf.mxu0
  %v504 = vpop.f32.mrf.mxu0
  %v505 = vadd.f32 %v53, %v504
  %v506 = vpop.f32.mrf.mxu0
  %507 = vmatprep.mubr.bf16.mxu0 %v449
  %508 = vmatmul.mubr.bf16.gmra.mxu0 %v433
  %v509 = vpop.f32.mrf.mxu0
  %v510 = vadd.f32 %v53, %v509
  %v511 = vpop.f32.mrf.mxu0
  %v512 = vpop.f32.mrf.mxu0
  %v513 = vadd.f32 %v53, %v512
  %v514 = vpop.f32.mrf.mxu0
  %515 = vdwg.mxu0
  %v516 = vmax.f32 %v486, 0.0
  %v517 = vmax.f32 %v489, 0.0
  %v518 = vmax.f32 %v494, 0.0
  %v519 = vmax.f32 %v497, 0.0
  %v520 = vmax.f32 %v502, 0.0
  %v521 = vmax.f32 %v505, 0.0
  %v522 = vmax.f32 %v510, 0.0
  %v523 = vmax.f32 %v513, 0.0
  %v524 = vmax.f32 %v386, %v516
  %v525 = vmax.f32 %v387, %v517
  %v526 = vmax.f32 %v388, %v518
  %v527 = vmax.f32 %v389, %v519
  %v528 = vmax.f32 %v390, %v520
  %v529 = vmax.f32 %v391, %v521
  %v530 = vmax.f32 %v392, %v522
  %v531 = vmax.f32 %v393, %v523
  %s532 = scalar_lea.vmem %s0, 192
  %v533 = vld [vmem:[%s532] sm:$0xff]
  %v534 = vld [vmem:[%s532 + $0x8] sm:$0xff]
  %v535 = vld [vmem:[%s532 + $0x10] sm:$0xff]
  %v536 = vld [vmem:[%s532 + $0x18] sm:$0xff]
  %v537 = vld [vmem:[%s532 + $0x20] sm:$0xff]
  %v538 = vld [vmem:[%s532 + $0x28] sm:$0xff]
  %v539 = vld [vmem:[%s532 + $0x30] sm:$0xff]
  %v540 = vld [vmem:[%s532 + $0x38] sm:$0xff]
  %v549 = vunpack.c.l.b16 %v533
  %v550 = vunpack.c.h.b16 %v533
  %v551 = vunpack.c.l.b16 %v534
  %v552 = vunpack.c.h.b16 %v534
  %v553 = vunpack.c.l.b16 %v535
  %v554 = vunpack.c.h.b16 %v535
  %v555 = vunpack.c.l.b16 %v536
  %v556 = vunpack.c.h.b16 %v536
  %v557 = vunpack.c.l.b16 %v537
  %v558 = vunpack.c.h.b16 %v537
  %v559 = vunpack.c.l.b16 %v538
  %v560 = vunpack.c.h.b16 %v538
  %v561 = vunpack.c.l.b16 %v539
  %v562 = vunpack.c.h.b16 %v539
  %v563 = vunpack.c.l.b16 %v540
  %v564 = vunpack.c.h.b16 %v540
  %v565 = vpack.c.b16 %v551, %v549
  %v566 = vpack.c.b16 %v552, %v550
  %v567 = vpack.c.b16 %v555, %v553
  %v568 = vpack.c.b16 %v556, %v554
  %v569 = vpack.c.b16 %v559, %v557
  %v570 = vpack.c.b16 %v560, %v558
  %v571 = vpack.c.b16 %v563, %v561
  %v572 = vpack.c.b16 %v564, %v562
  %v578 = vsel %vm166, %v566, 0
  %v581 = vsel %vm166, %v568, 0
  %v584 = vsel %vm166, %v570, 0
  %v587 = vsel %vm166, %v572, 0
  %589 = vmatprep.subr.bf16.mxu0 0
  %590 = vmatpush1.bf16.msra.mxu0 %v148
  %591 = vmatprep.subr.bf16.mxu0 0
  %592 = vmatpush1.bf16.msra.mxu0 %v147
  %593 = vmatprep.subr.bf16.mxu0 0
  %594 = vmatpush1.bf16.msra.mxu0 %v146
  %595 = vmatprep.subr.bf16.mxu0 0
  %596 = vmatpush1.bf16.msra.mxu0 %v145
  %597 = vmatprep.subr.bf16.mxu0 0
  %598 = vmatpush1.bf16.msra.mxu0 %v144
  %599 = vmatprep.subr.bf16.mxu0 0
  %600 = vmatpush1.bf16.msra.mxu0 %v143
  %601 = vmatprep.subr.bf16.mxu0 0
  %602 = vmatpush1.bf16.msra.mxu0 %v142
  %603 = vmatprep.subr.bf16.mxu0 0
  %604 = vmatpush1.bf16.msra.mxu0 %v141
  %605 = vmatprep.subr.bf16.mxu0 0
  %606 = vmatpush2.bf16.msra.mxu0 0
  %607 = vmatprep.subr.bf16.mxu0 0
  %608 = vmatpush2.bf16.msra.mxu0 0
  %609 = vmatprep.subr.bf16.mxu0 0
  %610 = vmatpush2.bf16.msra.mxu0 0
  %611 = vmatprep.subr.bf16.mxu0 0
  %612 = vmatpush2.bf16.msra.mxu0 %v181
  %613 = vmatprep.subr.bf16.mxu0 0
  %614 = vmatpush2.bf16.msra.mxu0 %v152
  %615 = vmatprep.subr.bf16.mxu0 0
  %616 = vmatpush2.bf16.msra.mxu0 %v151
  %617 = vmatprep.subr.bf16.mxu0 0
  %618 = vmatpush2.bf16.msra.mxu0 %v150
  %619 = vmatprep.subr.bf16.mxu0 0
  %620 = vmatpush2.bf16.msra.mxu0 %v149
  %621 = vmatprep.mubr.bf16.mxu0 %v578
  %622 = vmatmul.mubr.bf16.gmra.mxu0 %v565
  %v623 = vpop.f32.mrf.mxu0
  %v624 = vadd.f32 %v53, %v623
  %v625 = vpop.f32.mrf.mxu0
  %v626 = vpop.f32.mrf.mxu0
  %v627 = vadd.f32 %v53, %v626
  %v628 = vpop.f32.mrf.mxu0
  %629 = vmatprep.mubr.bf16.mxu0 %v581
  %630 = vmatmul.mubr.bf16.gmra.mxu0 %v567
  %v631 = vpop.f32.mrf.mxu0
  %v632 = vadd.f32 %v53, %v631
  %v633 = vpop.f32.mrf.mxu0
  %v634 = vpop.f32.mrf.mxu0
  %v635 = vadd.f32 %v53, %v634
  %v636 = vpop.f32.mrf.mxu0
  %637 = vmatprep.mubr.bf16.mxu0 %v584
  %638 = vmatmul.mubr.bf16.gmra.mxu0 %v569
  %v639 = vpop.f32.mrf.mxu0
  %v640 = vadd.f32 %v53, %v639
  %v641 = vpop.f32.mrf.mxu0
  %v642 = vpop.f32.mrf.mxu0
  %v643 = vadd.f32 %v53, %v642
  %v644 = vpop.f32.mrf.mxu0
  %645 = vmatprep.mubr.bf16.mxu0 %v587
  %646 = vmatmul.mubr.bf16.gmra.mxu0 %v571
  %v647 = vpop.f32.mrf.mxu0
  %v648 = vadd.f32 %v53, %v647
  %v649 = vpop.f32.mrf.mxu0
  %v650 = vpop.f32.mrf.mxu0
  %v651 = vadd.f32 %v53, %v650
  %v652 = vpop.f32.mrf.mxu0
  %653 = vdwg.mxu0
  %v654 = vmax.f32 %v624, 0.0
  %v655 = vmax.f32 %v627, 0.0
  %v656 = vmax.f32 %v632, 0.0
  %v657 = vmax.f32 %v635, 0.0
  %v658 = vmax.f32 %v640, 0.0
  %v659 = vmax.f32 %v643, 0.0
  %v660 = vmax.f32 %v648, 0.0
  %v661 = vmax.f32 %v651, 0.0
  %v662 = vmax.f32 %v524, %v654
  %v663 = vmax.f32 %v525, %v655
  %v664 = vmax.f32 %v526, %v656
  %v665 = vmax.f32 %v527, %v657
  %v666 = vmax.f32 %v528, %v658
  %v667 = vmax.f32 %v529, %v659
  %v668 = vmax.f32 %v530, %v660
  %v669 = vmax.f32 %v531, %v661
  %vm670 = vcmask 130048
  %671 = vst.msk [vmem:[%s3] sm:$0xff] %vm670, %v662
  %672 = vst.msk [vmem:[%s3 + $0x8] sm:$0xff] %vm670, %v663
  %673 = vst.msk [vmem:[%s3 + $0x10] sm:$0xff] %vm670, %v664
  %674 = vst.msk [vmem:[%s3 + $0x18] sm:$0xff] %vm670, %v665
  %675 = vst.msk [vmem:[%s3 + $0x20] sm:$0xff] %vm670, %v666
  %676 = vst.msk [vmem:[%s3 + $0x28] sm:$0xff] %vm670, %v667
  %677 = vst.msk [vmem:[%s3 + $0x30] sm:$0xff] %vm670, %v668
  %678 = vst.msk [vmem:[%s3 + $0x38] sm:$0xff] %vm670, %v669
  // Predicated region
  $region14: #{cnn_regressor_forward.4} parent=0 // pred_check
    _
  $region15: #{cnn_regressor_forward.4} parent=0 // pred_check_branch
    %680 = sbr.rel (0) target = $region17
  $region16: #{cnn_regressor_forward.4} parent=0 // pred_region
    _
  $region17: #{cnn_regressor_forward.4} parent=0 // pred_fallthru
    _
  // Predicated region
  $region18: #{cnn_regressor_forward.4} parent=0 // pred_check
    _
  $region19: #{cnn_regressor_forward.4} parent=0 // pred_check_branch
    %682 = sbr.rel (0) target = $region21
  $region20: #{cnn_regressor_forward.4} parent=0 // pred_region
    _
  $region21: #{cnn_regressor_forward.4} parent=0 // pred_fallthru
    _

// kernel: cnn_regressor_forward.5
$region0: #{cnn_regressor_forward.5}
  #allocation0 [shape = 'u32[]', space=smem, size = 0x4, offset = 0x4, fixed_abs, tag = 'smem constant byte address 0x4 - core index']
  #allocation1 [shape = 'u32[144,128]{1,0:T(1,128)}', space=vmem, size = 0x12000, scoped, tag = 'internal scratch']
  %s0 = inlined_call_operand.vmem [shape: bf16[16,400], index: 0, kind: input, shape index: {}]
  %s1 = inlined_call_operand.vmem [shape: bf16[400,32], index: 1, kind: input, shape index: {}]
  %s2 = inlined_call_operand.vmem [shape: f32[1,32], index: 2, kind: input, shape index: {}]
  %s3 = inlined_call_operand.vmem [shape: bf16[32,2], index: 3, kind: input, shape index: {}]
  %s4 = inlined_call_operand.vmem [shape: f32[1,2], index: 4, kind: input, shape index: {}]
  %s5 = inlined_call_operand.vmem [shape: f32[16,2], index: 5, kind: output, shape index: {}]
  %s6 = sld [smem:[#allocation0]]
  $region30: #{cnn_regressor_forward.5} parent=0
    _
  %s8 = ssub.s32 1, %s6
  %s9 = scalar_select 0, %s8, %s6
  // Predicated region
  $region2: #{cnn_regressor_forward.5} parent=0 // pred_check
    _
  $region3: #{cnn_regressor_forward.5} parent=0 // pred_check_branch
    %11 = sbr.rel (0) target = $region5
  $region4: #{cnn_regressor_forward.5} parent=0 // pred_region
    _
  $region5: #{cnn_regressor_forward.5} parent=0 // pred_fallthru
    _
  // Predicated region
  $region6: #{cnn_regressor_forward.5} parent=0 // pred_check
    _
  $region7: #{cnn_regressor_forward.5} parent=0 // pred_check_branch
    %13 = sbr.rel (0) target = $region9
  $region8: #{cnn_regressor_forward.5} parent=0 // pred_region
    _
  $region9: #{cnn_regressor_forward.5} parent=0 // pred_fallthru
    _
  // Predicated region
  $region10: #{cnn_regressor_forward.5} parent=0 // pred_check
    _
  $region11: #{cnn_regressor_forward.5} parent=0 // pred_check_branch
    %15 = sbr.rel (0) target = $region13
  $region12: #{cnn_regressor_forward.5} parent=0 // pred_region
    _
  $region13: #{cnn_regressor_forward.5} parent=0 // pred_fallthru
    _
  // Predicated region
  $region14: #{cnn_regressor_forward.5} parent=0 // pred_check
    _
  $region15: #{cnn_regressor_forward.5} parent=0 // pred_check_branch
    %17 = sbr.rel (0) target = $region17
  $region16: #{cnn_regressor_forward.5} parent=0 // pred_region
    _
  $region17: #{cnn_regressor_forward.5} parent=0 // pred_fallthru
    _
  // Predicated region
  $region18: #{cnn_regressor_forward.5} parent=0 // pred_check
    _
  $region19: #{cnn_regressor_forward.5} parent=0 // pred_check_branch
    %19 = sbr.rel (0) target = $region21
  $region20: #{cnn_regressor_forward.5} parent=0 // pred_region
    _
  $region21: #{cnn_regressor_forward.5} parent=0 // pred_fallthru
    _
  %v21 = vld [vmem:[%s0] sm:$0xff]
  %v22 = vld [vmem:[%s0 + $0x8] sm:$0xff]
  %v23 = vld [vmem:[%s0 + $0x10] sm:$0xff]
  %v24 = vld [vmem:[%s0 + $0x18] sm:$0xff]
  %v25 = vld [vmem:[%s1] sm:$0xf]
  %v26 = vld [vmem:[%s1 + $0x4] sm:$0xf]
  %v27 = vld [vmem:[%s1 + $0x8] sm:$0xf]
  %v28 = vld [vmem:[%s1 + $0xc] sm:$0xf]
  %v29 = vld [vmem:[%s1 + $0x10] sm:$0xf]
  %v30 = vld [vmem:[%s1 + $0x14] sm:$0xf]
  %v31 = vld [vmem:[%s1 + $0x18] sm:$0xf]
  %v32 = vld [vmem:[%s1 + $0x1c] sm:$0xf]
  %v33 = vld [vmem:[%s1 + $0x20] sm:$0xf]
  %v34 = vld [vmem:[%s1 + $0x24] sm:$0xf]
  %v35 = vld [vmem:[%s1 + $0x28] sm:$0xf]
  %v36 = vld [vmem:[%s1 + $0x2c] sm:$0xf]
  %v37 = vld [vmem:[%s1 + $0x30] sm:$0xf]
  %v38 = vld [vmem:[%s1 + $0x34] sm:$0xf]
  %v39 = vld [vmem:[%s1 + $0x38] sm:$0xf]
  %v40 = vld [vmem:[%s1 + $0x3c] sm:$0xf]
  %v41 = vld [vmem:[%s1 + $0x40] sm:$0xf]
  %v42 = vld [vmem:[%s1 + $0x44] sm:$0xf]
  %v43 = vld [vmem:[%s1 + $0x48] sm:$0xf]
  %v44 = vld [vmem:[%s1 + $0x4c] sm:$0xf]
  %v45 = vld [vmem:[%s1 + $0x50] sm:$0xf]
  %v46 = vld [vmem:[%s1 + $0x54] sm:$0xf]
  %v47 = vld [vmem:[%s1 + $0x58] sm:$0xf]
  %v48 = vld [vmem:[%s1 + $0x5c] sm:$0xf]
  %v49 = vld [vmem:[%s1 + $0x60] sm:$0xf]
  %v50 = vld [vmem:[%s1 + $0x64] sm:$0xf]
  %v51 = vld [vmem:[%s1 + $0x68] sm:$0xf]
  %v52 = vld [vmem:[%s1 + $0x6c] sm:$0xf]
  %v53 = vld [vmem:[%s1 + $0x70] sm:$0xf]
  %v54 = vld [vmem:[%s1 + $0x74] sm:$0xf]
  %v55 = vld [vmem:[%s1 + $0x78] sm:$0xf]
  %v56 = vld [vmem:[%s1 + $0x7c] sm:$0xf]
  %v57 = vld [vmem:[%s1 + $0x80] sm:$0xf]
  %v58 = vld [vmem:[%s1 + $0x84] sm:$0xf]
  %v59 = vld [vmem:[%s1 + $0x88] sm:$0xf]
  %v60 = vld [vmem:[%s1 + $0x8c] sm:$0xf]
  %v61 = vld [vmem:[%s1 + $0x90] sm:$0xf]
  %v62 = vld [vmem:[%s1 + $0x94] sm:$0xf]
  %v63 = vld [vmem:[%s1 + $0x98] sm:$0xf]
  %v64 = vld [vmem:[%s1 + $0x9c] sm:$0xf]
  %v65 = vld [vmem:[%s1 + $0xa0] sm:$0xf]
  %v66 = vld [vmem:[%s1 + $0xa4] sm:$0xf]
  %v67 = vld [vmem:[%s1 + $0xa8] sm:$0xf]
  %v68 = vld [vmem:[%s1 + $0xac] sm:$0xf]
  %v69 = vld [vmem:[%s1 + $0xb0] sm:$0xf]
  %v70 = vld [vmem:[%s1 + $0xb4] sm:$0xf]
  %v71 = vld [vmem:[%s1 + $0xb8] sm:$0xf]
  %v72 = vld [vmem:[%s1 + $0xbc] sm:$0xf]
  %v73 = vld [vmem:[%s1 + $0xc0] sm:$0xf]
  %v74 = vld [vmem:[%s1 + $0xc4] sm:$0xf]
  %v75 = vld [vmem:[%s2] sm:$0x1]
  %v77 = vlaneseq
  %v78 = vshrl.u32 %v77, 7
  %v79 = vsub.s32 0, %v78
  %v80 = vrot.slane %v75, %v79
  %v86 = vunpack.c.l.b16 %v21
  %v87 = vunpack.c.h.b16 %v21
  %v88 = vunpack.c.l.b16 %v22
  %v89 = vunpack.c.h.b16 %v22
  %v90 = vunpack.c.l.b16 %v23
  %v91 = vunpack.c.h.b16 %v23
  %v92 = vunpack.c.l.b16 %v24
  %v93 = vunpack.c.h.b16 %v24
  %v94 = vpack.c.b16 %v90, %v86
  %v95 = vpack.c.b16 %v91, %v87
  %v96 = vpack.c.b16 %v92, %v88
  %v97 = vpack.c.b16 %v93, %v89
  %v151 = vunpack.c.l.b16 %v25
  %v152 = vunpack.c.l.b16 %v26
  %v153 = vunpack.c.l.b16 %v27
  %v154 = vunpack.c.l.b16 %v28
  %v155 = vunpack.c.l.b16 %v29
  %v156 = vunpack.c.l.b16 %v30
  %v157 = vunpack.c.l.b16 %v31
  %v158 = vunpack.c.l.b16 %v32
  %v159 = vunpack.c.l.b16 %v33
  %v160 = vunpack.c.l.b16 %v34
  %v161 = vunpack.c.l.b16 %v35
  %v162 = vunpack.c.l.b16 %v36
  %v163 = vunpack.c.l.b16 %v37
  %v164 = vunpack.c.l.b16 %v38
  %v165 = vunpack.c.l.b16 %v39
  %v166 = vunpack.c.l.b16 %v40
  %v167 = vunpack.c.l.b16 %v41
  %v168 = vunpack.c.l.b16 %v42
  %v169 = vunpack.c.l.b16 %v43
  %v170 = vunpack.c.l.b16 %v44
  %v171 = vunpack.c.l.b16 %v45
  %v172 = vunpack.c.l.b16 %v46
  %v173 = vunpack.c.l.b16 %v47
  %v174 = vunpack.c.l.b16 %v48
  %v175 = vunpack.c.l.b16 %v49
  %v176 = vunpack.c.l.b16 %v50
  %v177 = vunpack.c.l.b16 %v51
  %v178 = vunpack.c.l.b16 %v52
  %v179 = vunpack.c.l.b16 %v53
  %v180 = vunpack.c.l.b16 %v54
  %v181 = vunpack.c.l.b16 %v55
  %v182 = vunpack.c.l.b16 %v56
  %v183 = vunpack.c.l.b16 %v57
  %v184 = vunpack.c.l.b16 %v58
  %v185 = vunpack.c.l.b16 %v59
  %v186 = vunpack.c.l.b16 %v60
  %v187 = vunpack.c.l.b16 %v61
  %v188 = vunpack.c.l.b16 %v62
  %v189 = vunpack.c.l.b16 %v63
  %v190 = vunpack.c.l.b16 %v64
  %v191 = vunpack.c.l.b16 %v65
  %v192 = vunpack.c.l.b16 %v66
  %v193 = vunpack.c.l.b16 %v67
  %v194 = vunpack.c.l.b16 %v68
  %v195 = vunpack.c.l.b16 %v69
  %v196 = vunpack.c.l.b16 %v70
  %v197 = vunpack.c.l.b16 %v71
  %v198 = vunpack.c.l.b16 %v72
  %v199 = vunpack.c.l.b16 %v73
  %v200 = vunpack.c.l.b16 %v74
  %v201 = vpack.c.b16 %v152, %v151
  %v202 = vpack.c.b16 %v154, %v153
  %v203 = vpack.c.b16 %v156, %v155
  %v204 = vpack.c.b16 %v158, %v157
  %v205 = vpack.c.b16 %v160, %v159
  %v206 = vpack.c.b16 %v162, %v161
  %v207 = vpack.c.b16 %v164, %v163
  %v208 = vpack.c.b16 %v166, %v165
  %v209 = vpack.c.b16 %v168, %v167
  %v210 = vpack.c.b16 %v170, %v169
  %v211 = vpack.c.b16 %v172, %v171
  %v212 = vpack.c.b16 %v174, %v173
  %v213 = vpack.c.b16 %v176, %v175
  %v214 = vpack.c.b16 %v178, %v177
  %v215 = vpack.c.b16 %v180, %v179
  %v216 = vpack.c.b16 %v182, %v181
  %v217 = vpack.c.b16 %v184, %v183
  %v218 = vpack.c.b16 %v186, %v185
  %v219 = vpack.c.b16 %v188, %v187
  %v220 = vpack.c.b16 %v190, %v189
  %v221 = vpack.c.b16 %v192, %v191
  %v222 = vpack.c.b16 %v194, %v193
  %v223 = vpack.c.b16 %v196, %v195
  %v224 = vpack.c.b16 %v198, %v197
  %v225 = vpack.c.b16 %v200, %v199
  %vm251 = vcmask 130048
  %v253 = vsel %vm251, %v97, 0
  %255 = vmatprep.subr.bf16.mxu0 0
  %256 = vmatpush1.bf16.msra.mxu0 %v208
  %257 = vmatprep.subr.bf16.mxu0 0
  %258 = vmatpush1.bf16.msra.mxu0 %v207
  %259 = vmatprep.subr.bf16.mxu0 0
  %260 = vmatpush1.bf16.msra.mxu0 %v206
  %261 = vmatprep.subr.bf16.mxu0 0
  %262 = vmatpush1.bf16.msra.mxu0 %v205
  %263 = vmatprep.subr.bf16.mxu0 0
  %264 = vmatpush1.bf16.msra.mxu0 %v204
  %265 = vmatprep.subr.bf16.mxu0 0
  %266 = vmatpush1.bf16.msra.mxu0 %v203
  %267 = vmatprep.subr.bf16.mxu0 0
  %268 = vmatpush1.bf16.msra.mxu0 %v202
  %269 = vmatprep.subr.bf16.mxu0 0
  %270 = vmatpush1.bf16.msra.mxu0 %v201
  %271 = vmatprep.subr.bf16.mxu0 0
  %272 = vmatpush2.bf16.msra.mxu0 %v216
  %273 = vmatprep.subr.bf16.mxu0 0
  %274 = vmatpush2.bf16.msra.mxu0 %v215
  %275 = vmatprep.subr.bf16.mxu0 0
  %276 = vmatpush2.bf16.msra.mxu0 %v214
  %277 = vmatprep.subr.bf16.mxu0 0
  %278 = vmatpush2.bf16.msra.mxu0 %v213
  %279 = vmatprep.subr.bf16.mxu0 0
  %280 = vmatpush2.bf16.msra.mxu0 %v212
  %281 = vmatprep.subr.bf16.mxu0 0
  %282 = vmatpush2.bf16.msra.mxu0 %v211
  %283 = vmatprep.subr.bf16.mxu0 0
  %284 = vmatpush2.bf16.msra.mxu0 %v210
  %285 = vmatprep.subr.bf16.mxu0 0
  %286 = vmatpush2.bf16.msra.mxu0 %v209
  %287 = vmatprep.mubr.bf16.mxu0 %v95
  %288 = vmatmul.mubr.bf16.gmra.mxu0 %v94
  %v289 = vpop.f32.mrf.mxu0
  %v290 = vadd.f32 %v80, %v289
  %v291 = vpop.f32.mrf.mxu0
  %v292 = vpop.f32.mrf.mxu0
  %v293 = vadd.f32 %v80, %v292
  %v294 = vpop.f32.mrf.mxu0
  %295 = vdwg.mxu0
  %296 = vmatprep.subr.bf16.mxu0 0
  %297 = vmatpush1.bf16.msra.mxu0 %v224
  %298 = vmatprep.subr.bf16.mxu0 0
  %299 = vmatpush1.bf16.msra.mxu0 %v223
  %300 = vmatprep.subr.bf16.mxu0 0
  %301 = vmatpush1.bf16.msra.mxu0 %v222
  %302 = vmatprep.subr.bf16.mxu0 0
  %303 = vmatpush1.bf16.msra.mxu0 %v221
  %304 = vmatprep.subr.bf16.mxu0 0
  %305 = vmatpush1.bf16.msra.mxu0 %v220
  %306 = vmatprep.subr.bf16.mxu0 0
  %307 = vmatpush1.bf16.msra.mxu0 %v219
  %308 = vmatprep.subr.bf16.mxu0 0
  %309 = vmatpush1.bf16.msra.mxu0 %v218
  %310 = vmatprep.subr.bf16.mxu0 0
  %311 = vmatpush1.bf16.msra.mxu0 %v217
  %312 = vmatprep.subr.bf16.mxu0 0
  %313 = vmatpush2.bf16.msra.mxu0 0
  %314 = vmatprep.subr.bf16.mxu0 0
  %315 = vmatpush2.bf16.msra.mxu0 0
  %316 = vmatprep.subr.bf16.mxu0 0
  %317 = vmatpush2.bf16.msra.mxu0 0
  %318 = vmatprep.subr.bf16.mxu0 0
  %319 = vmatpush2.bf16.msra.mxu0 0
  %320 = vmatprep.subr.bf16.mxu0 0
  %321 = vmatpush2.bf16.msra.mxu0 0
  %322 = vmatprep.subr.bf16.mxu0 0
  %323 = vmatpush2.bf16.msra.mxu0 0
  %324 = vmatprep.subr.bf16.mxu0 0
  %325 = vmatpush2.bf16.msra.mxu0 0
  %326 = vmatprep.subr.bf16.mxu0 0
  %327 = vmatpush2.bf16.msra.mxu0 %v225
  %328 = vmatprep.mubr.bf16.mxu0 %v253
  %329 = vmatmul.mubr.bf16.gmra.mxu0 %v96
  %v330 = vpop.f32.mrf.mxu0
  %v331 = vadd.f32 %v290, %v330
  %v332 = vpop.f32.mrf.mxu0
  %v333 = vpop.f32.mrf.mxu0
  %v334 = vadd.f32 %v293, %v333
  %v335 = vpop.f32.mrf.mxu0
  %336 = vdwg.mxu0
  %v337 = vmax.f32 %v331, 0.0
  %v338 = vmax.f32 %v334, 0.0
  %v339 = vpack.c.bf16 %v338, %v337
  %v340 = vld [vmem:[%s3] sm:$0xf]
  %v341 = vld [vmem:[%s3 + $0x4] sm:$0xf]
  %v342 = vld [vmem:[%s3 + $0x8] sm:$0xf]
  %v343 = vld [vmem:[%s3 + $0xc] sm:$0xf]
  %v344 = vld [vmem:[%s4] sm:$0x1]
  %v346 = vlaneseq
  %v347 = vshrl.u32 %v346, 7
  %v348 = vsub.s32 0, %v347
  %v349 = vrot.slane %v344, %v348
  %v355 = vunpack.c.l.b16 %v340
  %v356 = vunpack.c.l.b16 %v341
  %v357 = vunpack.c.l.b16 %v342
  %v358 = vunpack.c.l.b16 %v343
  %v359 = vpack.c.b16 %v356, %v355
  %v360 = vpack.c.b16 %v358, %v357
  %vm363 = vcmask 261120
  %v365 = vsel %vm363, %v339, 0
  %367 = vmatprep.subr.bf16.mxu0 0
  %368 = vmatpush1.bf16.msra.mxu0 0
  %369 = vmatprep.subr.bf16.mxu0 0
  %370 = vmatpush1.bf16.msra.mxu0 0
  %371 = vmatprep.subr.bf16.mxu0 0
  %372 = vmatpush1.bf16.msra.mxu0 0
  %373 = vmatprep.subr.bf16.mxu0 0
  %374 = vmatpush1.bf16.msra.mxu0 0
  %375 = vmatprep.subr.bf16.mxu0 0
  %376 = vmatpush1.bf16.msra.mxu0 0
  %377 = vmatprep.subr.bf16.mxu0 0
  %378 = vmatpush1.bf16.msra.mxu0 0
  %379 = vmatprep.subr.bf16.mxu0 0
  %380 = vmatpush1.bf16.msra.mxu0 %v360
  %381 = vmatprep.subr.bf16.mxu0 0
  %382 = vmatpush1.bf16.msra.mxu0 %v359
  %383 = vmatprep.subr.bf16.mxu0 0
  %384 = vmatpush2.bf16.msra.mxu0 0
  %385 = vmatprep.subr.bf16.mxu0 0
  %386 = vmatpush2.bf16.msra.mxu0 0
  %387 = vmatprep.subr.bf16.mxu0 0
  %388 = vmatpush2.bf16.msra.mxu0 0
  %389 = vmatprep.subr.bf16.mxu0 0
  %390 = vmatpush2.bf16.msra.mxu0 0
  %391 = vmatprep.subr.bf16.mxu0 0
  %392 = vmatpush2.bf16.msra.mxu0 0
  %393 = vmatprep.subr.bf16.mxu0 0
  %394 = vmatpush2.bf16.msra.mxu0 0
  %395 = vmatprep.subr.bf16.mxu0 0
  %396 = vmatpush2.bf16.msra.mxu0 0
  %397 = vmatprep.subr.bf16.mxu0 0
  %398 = vmatpush2.bf16.msra.mxu0 0
  %399 = vmatprep.mubr.bf16.mxu0 0
  %400 = vmatmul.mubr.bf16.gmra.mxu0 %v365
  %v401 = vpop.f32.mrf.mxu0
  %v402 = vadd.f32 %v349, %v401
  %v403 = vpop.f32.mrf.mxu0
  %v404 = vpop.f32.mrf.mxu0
  %v405 = vadd.f32 %v349, %v404
  %v406 = vpop.f32.mrf.mxu0
  %407 = vdwg.mxu0
  %vm408 = vcmask 15360
  %409 = vst.msk [vmem:[%s5] sm:$0xff] %vm408, %v402
  %410 = vst.msk [vmem:[%s5 + $0x8] sm:$0xff] %vm408, %v405
  // Predicated region
  $region22: #{cnn_regressor_forward.5} parent=0 // pred_check
    _
  $region23: #{cnn_regressor_forward.5} parent=0 // pred_check_branch
    %412 = sbr.rel (0) target = $region25
  $region24: #{cnn_regressor_forward.5} parent=0 // pred_region
    _
  $region25: #{cnn_regressor_forward.5} parent=0 // pred_fallthru
    _
  // Predicated region
  $region26: #{cnn_regressor_forward.5} parent=0 // pred_check
    _
  $region27: #{cnn_regressor_forward.5} parent=0 // pred_check_branch
    %414 = sbr.rel (0) target = $region29
  $region28: #{cnn_regressor_forward.5} parent=0 // pred_region
    _
  $region29: #{cnn_regressor_forward.5} parent=0 // pred_fallthru
    _

</llo_original>
